<compile_context>
chip_gen: v6e
topology: v6e:2x2x1
jax: 0.10.0
libtpu: 0.0.40
codegen_flags: <defaults>
</compile_context>

<pallas_src>
import jax
import jax.numpy as jnp
from jax import lax
from jax.experimental import pallas as pl
from jax.experimental.pallas import tpu as pltpu

TM_CONV = 512            # max row tile for the patches-matmul conv kernels
TM_ELEM = 2048           # max row tile for the streaming elementwise kernels
VMEM_BUDGET = 10 * 1024 * 1024   # per-kernel working-set budget (fits every gen's default)
BN_EPS = 1e-5


# ------------------------------ small helpers ---------------------------------

def _round_up(v, m):
    return ((v + m - 1) // m) * m


def _cp_of(cout):
    # adaptive lane padding: keep narrow blocks unpadded (masked stores are cheaper
    # than 16x traffic), pad wide blocks to a multiple of 128 for lane-dense stores.
    return cout if cout < 128 else _round_up(cout, 128)


def _conv_tm(m, k, cp, extra_per_row=0, extra_fixed=0):
    # double-buffered bf16 A tile + bf16 y tile per row, weights fixed.
    per_row = 4 * k + 4 * cp + extra_per_row
    fixed = 2 * k * cp + extra_fixed
    tm = min(TM_CONV, max(16, _round_up(m, 16)))
    while tm > 16 and tm * per_row + fixed > VMEM_BUDGET:
        tm //= 2
    return max(16, (tm // 16) * 16)


def _elem_tm(m, cp, n_bufs):
    tm = min(TM_ELEM, max(16, _round_up(m, 16)))
    while tm > 16 and tm * cp * 8 * n_bufs > VMEM_BUDGET:
        tm //= 2
    return max(16, (tm // 16) * 16)


def _use_slab(h, w, c, cp):
    # in-kernel im2col path: needs w % 8 == 0 so the (H, W, C) -> (H*W, C) merge is
    # layout-preserving, and the per-sample working set must fit the VMEM budget.
    if w % 8 != 0:
        return False
    hp, wp = h + 2, w + 2
    vmem = (2 * hp * wp * c * 2      # haloed slab, double-buffered, bf16
            + hp * wp * c * 4        # in-kernel f32 upcast of the slab
            + 9 * c * cp * 2         # weights
            + 2 * h * w * cp * 2     # y tile, double-buffered, bf16
            + h * w * cp * 4         # f32 accumulator
            + 2 * h * w * c * 4)     # shifted-slice temporaries (rough)
    return vmem <= VMEM_BUDGET


# ------------------------------ Pallas kernels -------------------------------

def _make_conv3x3_slab_kernel(h, w, c):
    """Stride-1 3x3 'same' conv for one sample: im2col built in VMEM from the haloed
    slab (9 shifted slices, 9 accumulating MXU dots) + fused per-sample BN stats."""
    def kernel(xp_ref, w_ref, y_ref, s_ref, ss_ref):
        # xp_ref: (H+2, W+2, C) bf16 (batch dim squeezed); w_ref: (9, C, Cp) bf16.
        xp = xp_ref[...].astype(jnp.float32)      # 32-bit layout -> cheap, robust slicing
        cp = w_ref.shape[2]
        acc = jnp.zeros((h * w, cp), jnp.float32)
        for dy in range(3):
            for dx in range(3):
                a = xp[dy:dy + h, dx:dx + w, :].reshape(h * w, c).astype(jnp.bfloat16)
                acc = acc + jnp.dot(a, w_ref[3 * dy + dx],
                                    preferred_element_type=jnp.float32)
        y_ref[...] = acc.astype(y_ref.dtype)
        s_ref[...] = jnp.sum(acc, axis=0, keepdims=True)
        ss_ref[...] = jnp.sum(acc * acc, axis=0, keepdims=True)
    return kernel


def _make_conv_kernel(m_true, tm):
    """im2col-patches matmul + per-tile partial BN stats (parallel grid)."""
    g = (m_true + tm - 1) // tm
    rows_last = m_true - (g - 1) * tm
    has_tail = rows_last < tm

    def kernel(a_ref, b_ref, y_ref, s_ref, ss_ref):
        y = jnp.dot(a_ref[...], b_ref[...], preferred_element_type=jnp.float32)
        y_ref[...] = y.astype(y_ref.dtype)
        s_ref[...] = jnp.sum(y, axis=0, keepdims=True)
        ss_ref[...] = jnp.sum(y * y, axis=0, keepdims=True)
        if has_tail:  # only the last tile pays the masked recompute
            @pl.when(pl.program_id(0) == pl.num_programs(0) - 1)
            def _():
                valid = lax.broadcasted_iota(jnp.int32, y.shape, 0) < rows_last
                ym = jnp.where(valid, y, 0.0)
                s_ref[...] = jnp.sum(ym, axis=0, keepdims=True)
                ss_ref[...] = jnp.sum(ym * ym, axis=0, keepdims=True)
    return kernel


def _make_conv_id_kernel(m_true, tm):
    """conv2 patches matmul + its stats + stats of the 1x1 downsample projection.
    The projected identity is never written to HBM (epilogue recomputes it)."""
    g = (m_true + tm - 1) // tm
    rows_last = m_true - (g - 1) * tm
    has_tail = rows_last < tm

    def kernel(a_ref, b_ref, xs_ref, wid_ref,
               y_ref, s_ref, ss_ref, sid_ref, ssid_ref):
        y = jnp.dot(a_ref[...], b_ref[...], preferred_element_type=jnp.float32)
        idy = jnp.dot(xs_ref[...], wid_ref[...], preferred_element_type=jnp.float32)
        y_ref[...] = y.astype(y_ref.dtype)

        def put(yv, iv):
            s_ref[...] = jnp.sum(yv, axis=0, keepdims=True)
            ss_ref[...] = jnp.sum(yv * yv, axis=0, keepdims=True)
            sid_ref[...] = jnp.sum(iv, axis=0, keepdims=True)
            ssid_ref[...] = jnp.sum(iv * iv, axis=0, keepdims=True)

        put(y, idy)
        if has_tail:
            @pl.when(pl.program_id(0) == pl.num_programs(0) - 1)
            def _():
                valid = lax.broadcasted_iota(jnp.int32, y.shape, 0) < rows_last
                put(jnp.where(valid, y, 0.0), jnp.where(valid, idy, 0.0))
    return kernel


def _bn_relu_kernel(y_ref, s_ref, b_ref, o_ref):
    out = y_ref[...].astype(jnp.float32) * s_ref[...] + b_ref[...]
    o_ref[...] = jnp.maximum(out, 0.0).astype(o_ref.dtype)


def _bn_add_relu_kernel(y_ref, s_ref, b_ref, r_ref, o_ref):
    # stride-1 epilogue: BN + direct residual add + relu (no projection matmul).
    out = (y_ref[...].astype(jnp.float32) * s_ref[...] + b_ref[...]
           + r_ref[...].astype(jnp.float32))
    o_ref[...] = jnp.maximum(out, 0.0).astype(o_ref.dtype)


def _bn_proj_add_relu_kernel(y_ref, s_ref, b_ref, xs_ref, wid_ref, si_ref, bi_ref, o_ref):
    # stride-2 epilogue: BN + (recomputed) 1x1 downsample projection + its BN + add + relu.
    idy = jnp.dot(xs_ref[...], wid_ref[...], preferred_element_type=jnp.float32)
    out = (y_ref[...].astype(jnp.float32) * s_ref[...] + b_ref[...]
           + idy * si_ref[...] + bi_ref[...])
    o_ref[...] = jnp.maximum(out, 0.0).astype(o_ref.dtype)


# ------------------------------ Pallas wrappers -------------------------------

def conv3x3_slab(x, w9):
    """Stride-1 3x3 conv with the im2col built in-kernel from a haloed NHWC slab.

    x: (N, H, W, C) f32/bf16; w9: (9, C, Cp) bf16.
    Returns y (N*H*W, Cp) bf16 and per-channel sum / sum-of-squares (Cp,) f32."""
    N, H, W, C = x.shape
    Cp = w9.shape[-1]
    xp = jnp.pad(x.astype(jnp.bfloat16), ((0, 0), (1, 1), (1, 1), (0, 0)))
    y, s, ss = pl.pallas_call(
        _make_conv3x3_slab_kernel(H, W, C),
        out_shape=(jax.ShapeDtypeStruct((N, H * W, Cp), jnp.bfloat16),
                   jax.ShapeDtypeStruct((N, 1, Cp), jnp.float32),
                   jax.ShapeDtypeStruct((N, 1, Cp), jnp.float32)),
        grid=(N,),
        in_specs=[pl.BlockSpec((None, H + 2, W + 2, C), lambda n: (n, 0, 0, 0)),
                  pl.BlockSpec((9, C, Cp), lambda n: (0, 0, 0))],
        out_specs=(pl.BlockSpec((None, H * W, Cp), lambda n: (n, 0, 0)),
                   pl.BlockSpec((None, 1, Cp), lambda n: (n, 0, 0)),
                   pl.BlockSpec((None, 1, Cp), lambda n: (n, 0, 0))),
        compiler_params=pltpu.CompilerParams(dimension_semantics=("parallel",)),
    )(xp, w9)
    return (y.reshape(N * H * W, Cp),
            jnp.sum(s[:, 0, :], axis=0), jnp.sum(ss[:, 0, :], axis=0))


def conv_stats(a, b):
    """a: (M, K) bf16 patches, b: (K, Cp) bf16 -> y (M, Cp) bf16, sum/sumsq (Cp,) f32."""
    M, K = a.shape
    Cp = b.shape[1]
    tm = _conv_tm(M, K, Cp)
    g = (M + tm - 1) // tm
    y, s, ss = pl.pallas_call(
        _make_conv_kernel(M, tm),
        out_shape=(jax.ShapeDtypeStruct((M, Cp), jnp.bfloat16),
                   jax.ShapeDtypeStruct((g, 1, Cp), jnp.float32),
                   jax.ShapeDtypeStruct((g, 1, Cp), jnp.float32)),
        grid=(g,),
        in_specs=[pl.BlockSpec((tm, K), lambda i: (i, 0)),
                  pl.BlockSpec((K, Cp), lambda i: (0, 0))],
        out_specs=(pl.BlockSpec((tm, Cp), lambda i: (i, 0)),
                   pl.BlockSpec((None, 1, Cp), lambda i: (i, 0, 0)),
                   pl.BlockSpec((None, 1, Cp), lambda i: (i, 0, 0))),
        compiler_params=pltpu.CompilerParams(dimension_semantics=("parallel",)),
    )(a, b)
    return y, jnp.sum(s[:, 0, :], axis=0), jnp.sum(ss[:, 0, :], axis=0)


def conv_stats_id(a, b, xs, wid):
    M, K = a.shape
    Cp = b.shape[1]
    Ci = xs.shape[1]
    tm = _conv_tm(M, K, Cp, extra_per_row=4 * Ci, extra_fixed=2 * Ci * Cp)
    g = (M + tm - 1) // tm
    y, s, ss, sid, ssid = pl.pallas_call(
        _make_conv_id_kernel(M, tm),
        out_shape=(jax.ShapeDtypeStruct((M, Cp), jnp.bfloat16),
                   jax.ShapeDtypeStruct((g, 1, Cp), jnp.float32),
                   jax.ShapeDtypeStruct((g, 1, Cp), jnp.float32),
                   jax.ShapeDtypeStruct((g, 1, Cp), jnp.float32),
                   jax.ShapeDtypeStruct((g, 1, Cp), jnp.float32)),
        grid=(g,),
        in_specs=[pl.BlockSpec((tm, K), lambda i: (i, 0)),
                  pl.BlockSpec((K, Cp), lambda i: (0, 0)),
                  pl.BlockSpec((tm, Ci), lambda i: (i, 0)),
                  pl.BlockSpec((Ci, Cp), lambda i: (0, 0))],
        out_specs=(pl.BlockSpec((tm, Cp), lambda i: (i, 0)),
                   pl.BlockSpec((None, 1, Cp), lambda i: (i, 0, 0)),
                   pl.BlockSpec((None, 1, Cp), lambda i: (i, 0, 0)),
                   pl.BlockSpec((None, 1, Cp), lambda i: (i, 0, 0)),
                   pl.BlockSpec((None, 1, Cp), lambda i: (i, 0, 0))),
        compiler_params=pltpu.CompilerParams(dimension_semantics=("parallel",)),
    )(a, b, xs, wid)
    red = lambda t: jnp.sum(t[:, 0, :], axis=0)
    return y, red(s), red(ss), red(sid), red(ssid)


def bn_relu(y, scale, shift):
    M, Cp = y.shape
    tm = _elem_tm(M, Cp, 2)
    return pl.pallas_call(
        _bn_relu_kernel,
        out_shape=jax.ShapeDtypeStruct((M, Cp), jnp.bfloat16),
        grid=((M + tm - 1) // tm,),
        in_specs=[pl.BlockSpec((tm, Cp), lambda i: (i, 0)),
                  pl.BlockSpec((1, Cp), lambda i: (0, 0)),
                  pl.BlockSpec((1, Cp), lambda i: (0, 0))],
        out_specs=pl.BlockSpec((tm, Cp), lambda i: (i, 0)),
        compiler_params=pltpu.CompilerParams(dimension_semantics=("parallel",)),
    )(y, scale.reshape(1, -1), shift.reshape(1, -1))


def bn_add_relu(y, scale, shift, res, out_dtype):
    M, Cp = y.shape
    tm = _elem_tm(M, Cp, 3)
    return pl.pallas_call(
        _bn_add_relu_kernel,
        out_shape=jax.ShapeDtypeStruct((M, Cp), out_dtype),
        grid=((M + tm - 1) // tm,),
        in_specs=[pl.BlockSpec((tm, Cp), lambda i: (i, 0)),
                  pl.BlockSpec((1, Cp), lambda i: (0, 0)),
                  pl.BlockSpec((1, Cp), lambda i: (0, 0)),
                  pl.BlockSpec((tm, Cp), lambda i: (i, 0))],
        out_specs=pl.BlockSpec((tm, Cp), lambda i: (i, 0)),
        compiler_params=pltpu.CompilerParams(dimension_semantics=("parallel",)),
    )(y, scale.reshape(1, -1), shift.reshape(1, -1), res)


def bn_proj_add_relu(y, scale, shift, xs, wid, si, shi, out_dtype):
    M, Cp = y.shape
    Ci = xs.shape[1]
    tm = _elem_tm(M, Cp, 3)
    return pl.pallas_call(
        _bn_proj_add_relu_kernel,
        out_shape=jax.ShapeDtypeStruct((M, Cp), out_dtype),
        grid=((M + tm - 1) // tm,),
        in_specs=[pl.BlockSpec((tm, Cp), lambda i: (i, 0)),
                  pl.BlockSpec((1, Cp), lambda i: (0, 0)),
                  pl.BlockSpec((1, Cp), lambda i: (0, 0)),
                  pl.BlockSpec((tm, Ci), lambda i: (i, 0)),
                  pl.BlockSpec((Ci, Cp), lambda i: (0, 0)),
                  pl.BlockSpec((1, Cp), lambda i: (0, 0)),
                  pl.BlockSpec((1, Cp), lambda i: (0, 0))],
        out_specs=pl.BlockSpec((tm, Cp), lambda i: (i, 0)),
        compiler_params=pltpu.CompilerParams(dimension_semantics=("parallel",)),
    )(y, scale.reshape(1, -1), shift.reshape(1, -1), xs, wid,
      si.reshape(1, -1), shi.reshape(1, -1))


# --------------------------------- glue (JAX) ---------------------------------

# TODO(synk): the stride-2 conv1 and the downsample-fused conv2 still consume an
# XLA-materialized im2col patch matrix; the in-kernel haloed-slab build currently
# only covers the stride-1 convs (which dominate traffic).
def im2col_3x3(x, stride):
    """x: (N, H, W, C) -> bf16 patches (N*Ho*Wo, 9*C) with (dy, dx, cin) column order."""
    N, H, W, C = x.shape
    Ho = (H - 1) // stride + 1
    Wo = (W - 1) // stride + 1
    xp = jnp.pad(x, ((0, 0), (1, 1), (1, 1), (0, 0)))
    cols = []
    for dy in range(3):
        for dx in range(3):
            cols.append(xp[:, dy:dy + stride * (Ho - 1) + 1:stride,
                           dx:dx + stride * (Wo - 1) + 1:stride, :])
    patches = jnp.concatenate(cols, axis=-1).astype(jnp.bfloat16)
    return patches.reshape(N * Ho * Wo, 9 * C)


def _bn_scale_shift(s, ss, m):
    # gamma = 1, beta = 0 (fresh nn.BatchNorm2d), training-mode biased batch stats.
    # Single-pass E[x^2]-E[x]^2 in f32 (clamped against cancellation).
    mean = s / m
    var = jnp.maximum(ss / m - mean * mean, 0.0)
    scale = lax.rsqrt(var + BN_EPS)
    return scale, -mean * scale


def _pad_channels(x2d, cp):
    c = x2d.shape[1]
    return x2d if c == cp else jnp.pad(x2d, ((0, 0), (0, cp - c)))


def res_block(x, p, out_dtype):
    """x: (N, H, W, Cin) f32/bf16 -> (N, Ho, Wo, Cout) out_dtype."""
    N, H, W, Cin = x.shape
    Cout, stride = p['cout'], p['stride']
    Cp = p['w1'].shape[-1]
    Ho = (H - 1) // stride + 1
    Wo = (W - 1) // stride + 1
    M = N * Ho * Wo

    # ---- conv1 (+ fused per-tile batch stats) ----
    if stride == 1 and _use_slab(H, W, Cin, Cp):
        y1, s1, ss1 = conv3x3_slab(x, p['w1'])
    else:
        y1, s1, ss1 = conv_stats(im2col_3x3(x, stride), p['w1'].reshape(-1, Cp))
    sc1, sh1 = _bn_scale_shift(s1, ss1, M)

    # ---- bn1 + relu (bf16), feeds conv2 ----
    z = bn_relu(y1, sc1, sh1)
    z_nhwc = z[:, :Cout].reshape(N, Ho, Wo, Cout)

    # ---- conv2 (stride 1) + epilogue ----
    if stride == 2:
        # downsample path: 1x1 projection stats fused into the conv2 pass; the
        # projected identity is recomputed in the epilogue (never hits HBM).
        xs = x[:, ::2, ::2, :].reshape(M, Cin).astype(jnp.bfloat16)
        y2, s2, ss2, sid, ssid = conv_stats_id(
            im2col_3x3(z_nhwc, 1), p['w2'].reshape(-1, Cp), xs, p['wid'])
        sc2, sh2 = _bn_scale_shift(s2, ss2, M)
        si, shi = _bn_scale_shift(sid, ssid, M)
        out = bn_proj_add_relu(y2, sc2, sh2, xs, p['wid'], si, shi, out_dtype)
    else:
        if _use_slab(Ho, Wo, Cout, Cp):
            y2, s2, ss2 = conv3x3_slab(z_nhwc, p['w2'])
        else:
            y2, s2, ss2 = conv_stats(im2col_3x3(z_nhwc, 1), p['w2'].reshape(-1, Cp))
        sc2, sh2 = _bn_scale_shift(s2, ss2, M)
        res = _pad_channels(x.reshape(M, Cin), Cp)   # Cin == Cout for stride-1 blocks
        out = bn_add_relu(y2, sc2, sh2, res, out_dtype)

    return out[:, :Cout].reshape(N, Ho, Wo, Cout)


def basic_block_forward(x_nchw, params):
    x = jnp.transpose(x_nchw, (0, 2, 3, 1)).astype(jnp.float32)   # NCHW -> NHWC
    for i, p in enumerate(params):
        out_dtype = jnp.float32 if i == len(params) - 1 else jnp.bfloat16
        x = res_block(x, p, out_dtype)
    return jnp.transpose(x, (0, 3, 1, 2)).astype(jnp.float32)      # back to NCHW


# ------------------------------ parameter init --------------------------------

def _kaiming(key, shape):
    # kaiming_normal_ default: fan_in, a=0 -> std = sqrt(2 / fan_in)
    fan_in = shape[1] * shape[2] * shape[3]
    std = (2.0 / fan_in) ** 0.5
    return jax.random.normal(key, shape, dtype=jnp.float32) * std


def _prep_conv3x3(w):
    # (Cout, Cin, 3, 3) -> (9, Cin, Cp) bf16, tap order (dy, dx), cin fastest.
    cout, cin = w.shape[0], w.shape[1]
    cp = _cp_of(cout)
    b = jnp.transpose(w, (2, 3, 1, 0)).reshape(9, cin, cout)
    return jnp.pad(b, ((0, 0), (0, 0), (0, cp - cout))).astype(jnp.bfloat16)


def _prep_conv1x1(w):
    cout, cin = w.shape[0], w.shape[1]
    cp = _cp_of(cout)
    b = w[:, :, 0, 0].T
    return jnp.pad(b, ((0, 0), (0, cp - cout))).astype(jnp.bfloat16)


def init_basic_block(key, in_channels, out_channels, n):
    # TODO(synk): BatchNorm running-mean/var momentum updates (training-time side
    # effect) are not reproduced; they do not affect the forward output.
    params = []
    for i in range(n):
        ci = in_channels if i == 0 else out_channels
        stride = 1 if ci == out_channels else 2
        key, k1, k2, k3 = jax.random.split(key, 4)
        p = {'cout': out_channels, 'stride': stride,
             'w1': _prep_conv3x3(_kaiming(k1, (out_channels, ci, 3, 3))),
             'w2': _prep_conv3x3(_kaiming(k2, (out_channels, out_channels, 3, 3)))}
        if stride == 2:
            p['wid'] = _prep_conv1x1(_kaiming(k3, (out_channels, ci, 1, 1)))
        params.append(p)
    return params


if __name__ == "__main__":
    key = jax.random.PRNGKey(0)
    k_x, k_p = jax.random.split(key)

    # BasicBlock(in_channels=4, out_channels=8, n=2): block0 strided (2), block1 not.
    x = jax.random.normal(k_x, (2, 4, 16, 16), dtype=jnp.float32)
    params = init_basic_block(k_p, 4, 8, 2)

    fwd = jax.jit(lambda xx: basic_block_forward(xx, params))
    out = jax.block_until_ready(fwd(x))
    assert out.shape == (2, 8, 8, 8), out.shape
    print("KERNEL_OK")
</pallas_src>

<mosaic_0001>
module attributes {stable_mosaic.version = 11 : i64} {
  func.func @kernel(%arg0: i32, %arg1: memref<128x36xbf16, #tpu.memory_space<vmem>>, %arg2: memref<36x8xbf16, #tpu.memory_space<vmem>>, %arg3: memref<128x8xbf16, #tpu.memory_space<vmem>>, %arg4: memref<1x1x8xf32, #tpu.memory_space<vmem>>, %arg5: memref<1x1x8xf32, #tpu.memory_space<vmem>>) attributes {dimension_semantics = [#tpu.dimension_semantics<parallel>], iteration_bounds = array<i64: 1>, scalar_prefetch = 0 : i64, scratch_operands = 0 : i64, tpu.core_type = #tpu.core_type<tc>, window_params = [{transform_indices = @transform_0, window_bounds = array<i64: 128, 36>}, {pipeline_mode = #tpu.pipeline_mode<synchronous>, transform_indices = @transform_1, window_bounds = array<i64: 36, 8>}, {transform_indices = @transform_2, window_bounds = array<i64: 128, 8>}, {transform_indices = @transform_3, window_bounds = array<i64: 1, 1, 8>}, {transform_indices = @transform_4, window_bounds = array<i64: 1, 1, 8>}]} {
    %c0 = arith.constant 0 : index
    %c0_0 = arith.constant 0 : index
    %0 = vector.load %arg1[%c0, %c0_0] : memref<128x36xbf16, #tpu.memory_space<vmem>>, vector<128x36xbf16>
    %c0_1 = arith.constant 0 : index
    %c0_2 = arith.constant 0 : index
    %1 = vector.load %arg2[%c0_1, %c0_2] : memref<36x8xbf16, #tpu.memory_space<vmem>>, vector<36x8xbf16>
    %cst = arith.constant dense<0.000000e+00> : vector<128x8xf32>
    %2 = tpu.matmul %0, %1, %cst {dimension_numbers = #tpu.dot_dimension_numbers<[1], [0], [0], [1], [0, 0, 1, 1], [], []>} : vector<128x36xbf16>, vector<36x8xbf16>, vector<128x8xf32> -> vector<128x8xf32>
    %3 = arith.truncf %2 : vector<128x8xf32> to vector<128x8xbf16>
    %c0_3 = arith.constant 0 : index
    %c0_4 = arith.constant 0 : index
    %4 = vector.load %arg3[%c0_3, %c0_4] : memref<128x8xbf16, #tpu.memory_space<vmem>>, vector<128x8xbf16>
    tpu.vector_store %arg3[%c0_3, %c0_4], %3 {strides = array<i32>} : memref<128x8xbf16, #tpu.memory_space<vmem>>, vector<128x8xbf16>,
    %cst_5 = arith.constant dense<0.000000e+00> : vector<8xf32>
    %5 = vector.multi_reduction <add>, %2, %cst_5 [0] : vector<128x8xf32> to vector<8xf32>
    %6 = vector.shape_cast %5 : vector<8xf32> to vector<1x8xf32>
    %c0_6 = arith.constant 0 : index
    %c0_7 = arith.constant 0 : index
    %c0_8 = arith.constant 0 : index
    %7 = vector.load %arg4[%c0_6, %c0_7, %c0_8] : memref<1x1x8xf32, #tpu.memory_space<vmem>>, vector<1x1x8xf32>
    %8 = vector.shape_cast %7 : vector<1x1x8xf32> to vector<1x8xf32>
    %9 = vector.shape_cast %6 : vector<1x8xf32> to vector<1x1x8xf32>
    tpu.vector_store %arg4[%c0_6, %c0_7, %c0_8], %9 {strides = array<i32>} : memref<1x1x8xf32, #tpu.memory_space<vmem>>, vector<1x1x8xf32>,
    %10 = arith.mulf %2, %2 : vector<128x8xf32>
    %cst_9 = arith.constant dense<0.000000e+00> : vector<8xf32>
    %11 = vector.multi_reduction <add>, %10, %cst_9 [0] : vector<128x8xf32> to vector<8xf32>
    %12 = vector.shape_cast %11 : vector<8xf32> to vector<1x8xf32>
    %c0_10 = arith.constant 0 : index
    %c0_11 = arith.constant 0 : index
    %c0_12 = arith.constant 0 : index
    %13 = vector.load %arg5[%c0_10, %c0_11, %c0_12] : memref<1x1x8xf32, #tpu.memory_space<vmem>>, vector<1x1x8xf32>
    %14 = vector.shape_cast %13 : vector<1x1x8xf32> to vector<1x8xf32>
    %15 = vector.shape_cast %12 : vector<1x8xf32> to vector<1x1x8xf32>
    tpu.vector_store %arg5[%c0_10, %c0_11, %c0_12], %15 {strides = array<i32>} : memref<1x1x8xf32, #tpu.memory_space<vmem>>, vector<1x1x8xf32>,
    return
  }
  func.func @transform_0(%arg0: i32) -> (i32, i32) {
    %c0_i32 = arith.constant 0 : i32
    %c0_i32_0 = arith.constant 0 : i32
    return %arg0, %c0_i32 : i32, i32
  }
  func.func @transform_1(%arg0: i32) -> (i32, i32) {
    %c0_i32 = arith.constant 0 : i32
    %c0_i32_0 = arith.constant 0 : i32
    %c0_i32_1 = arith.constant 0 : i32
    return %c0_i32, %c0_i32_0 : i32, i32
  }
  func.func @transform_2(%arg0: i32) -> (i32, i32) {
    %c0_i32 = arith.constant 0 : i32
    %c0_i32_0 = arith.constant 0 : i32
    return %arg0, %c0_i32 : i32, i32
  }
  func.func @transform_3(%arg0: i32) -> (i32, i32, i32) {
    %c0_i32 = arith.constant 0 : i32
    %c0_i32_0 = arith.constant 0 : i32
    %c0_i32_1 = arith.constant 0 : i32
    return %arg0, %c0_i32, %c0_i32_0 : i32, i32, i32
  }
  func.func @transform_4(%arg0: i32) -> (i32, i32, i32) {
    %c0_i32 = arith.constant 0 : i32
    %c0_i32_0 = arith.constant 0 : i32
    %c0_i32_1 = arith.constant 0 : i32
    return %arg0, %c0_i32, %c0_i32_0 : i32, i32, i32
  }
}

module attributes {stable_mosaic.version = 11 : i64} {
  func.func @_bn_relu_kernel(%arg0: i32, %arg1: memref<128x8xbf16, #tpu.memory_space<vmem>>, %arg2: memref<1x8xf32, #tpu.memory_space<vmem>>, %arg3: memref<1x8xf32, #tpu.memory_space<vmem>>, %arg4: memref<128x8xbf16, #tpu.memory_space<vmem>>) attributes {dimension_semantics = [#tpu.dimension_semantics<parallel>], iteration_bounds = array<i64: 1>, scalar_prefetch = 0 : i64, scratch_operands = 0 : i64, tpu.core_type = #tpu.core_type<tc>, window_params = [{transform_indices = @transform_0, window_bounds = array<i64: 128, 8>}, {pipeline_mode = #tpu.pipeline_mode<synchronous>, transform_indices = @transform_1, window_bounds = array<i64: 1, 8>}, {pipeline_mode = #tpu.pipeline_mode<synchronous>, transform_indices = @transform_2, window_bounds = array<i64: 1, 8>}, {transform_indices = @transform_3, window_bounds = array<i64: 128, 8>}]} {
    %c0 = arith.constant 0 : index
    %c0_0 = arith.constant 0 : index
    %0 = vector.load %arg1[%c0, %c0_0] : memref<128x8xbf16, #tpu.memory_space<vmem>>, vector<128x8xbf16>
    %1 = arith.extf %0 : vector<128x8xbf16> to vector<128x8xf32>
    %c0_1 = arith.constant 0 : index
    %c0_2 = arith.constant 0 : index
    %2 = vector.load %arg2[%c0_1, %c0_2] : memref<1x8xf32, #tpu.memory_space<vmem>>, vector<1x8xf32>
    %3 = vector.broadcast %2 : vector<1x8xf32> to vector<128x8xf32>
    %4 = arith.mulf %1, %3 : vector<128x8xf32>
    %c0_3 = arith.constant 0 : index
    %c0_4 = arith.constant 0 : index
    %5 = vector.load %arg3[%c0_3, %c0_4] : memref<1x8xf32, #tpu.memory_space<vmem>>, vector<1x8xf32>
    %6 = vector.broadcast %5 : vector<1x8xf32> to vector<128x8xf32>
    %7 = arith.addf %4, %6 : vector<128x8xf32>
    %cst = arith.constant 0.000000e+00 : f32
    %8 = vector.broadcast %cst : f32 to vector<128x8xf32>
    %9 = arith.maximumf %7, %8 : vector<128x8xf32>
    %10 = arith.truncf %9 : vector<128x8xf32> to vector<128x8xbf16>
    %c0_5 = arith.constant 0 : index
    %c0_6 = arith.constant 0 : index
    %11 = vector.load %arg4[%c0_5, %c0_6] : memref<128x8xbf16, #tpu.memory_space<vmem>>, vector<128x8xbf16>
    tpu.vector_store %arg4[%c0_5, %c0_6], %10 {strides = array<i32>} : memref<128x8xbf16, #tpu.memory_space<vmem>>, vector<128x8xbf16>,
    return
  }
  func.func @transform_0(%arg0: i32) -> (i32, i32) {
    %c0_i32 = arith.constant 0 : i32
    %c0_i32_0 = arith.constant 0 : i32
    return %arg0, %c0_i32 : i32, i32
  }
  func.func @transform_1(%arg0: i32) -> (i32, i32) {
    %c0_i32 = arith.constant 0 : i32
    %c0_i32_0 = arith.constant 0 : i32
    %c0_i32_1 = arith.constant 0 : i32
    return %c0_i32, %c0_i32_0 : i32, i32
  }
  func.func @transform_2(%arg0: i32) -> (i32, i32) {
    %c0_i32 = arith.constant 0 : i32
    %c0_i32_0 = arith.constant 0 : i32
    %c0_i32_1 = arith.constant 0 : i32
    return %c0_i32, %c0_i32_0 : i32, i32
  }
  func.func @transform_3(%arg0: i32) -> (i32, i32) {
    %c0_i32 = arith.constant 0 : i32
    %c0_i32_0 = arith.constant 0 : i32
    return %arg0, %c0_i32 : i32, i32
  }
}

module attributes {stable_mosaic.version = 11 : i64} {
  func.func @kernel(%arg0: i32, %arg1: memref<128x72xbf16, #tpu.memory_space<vmem>>, %arg2: memref<72x8xbf16, #tpu.memory_space<vmem>>, %arg3: memref<128x4xbf16, #tpu.memory_space<vmem>>, %arg4: memref<4x8xbf16, #tpu.memory_space<vmem>>, %arg5: memref<128x8xbf16, #tpu.memory_space<vmem>>, %arg6: memref<1x1x8xf32, #tpu.memory_space<vmem>>, %arg7: memref<1x1x8xf32, #tpu.memory_space<vmem>>, %arg8: memref<1x1x8xf32, #tpu.memory_space<vmem>>, %arg9: memref<1x1x8xf32, #tpu.memory_space<vmem>>) attributes {dimension_semantics = [#tpu.dimension_semantics<parallel>], iteration_bounds = array<i64: 1>, scalar_prefetch = 0 : i64, scratch_operands = 0 : i64, tpu.core_type = #tpu.core_type<tc>, window_params = [{transform_indices = @transform_0, window_bounds = array<i64: 128, 72>}, {pipeline_mode = #tpu.pipeline_mode<synchronous>, transform_indices = @transform_1, window_bounds = array<i64: 72, 8>}, {transform_indices = @transform_2, window_bounds = array<i64: 128, 4>}, {pipeline_mode = #tpu.pipeline_mode<synchronous>, transform_indices = @transform_3, window_bounds = array<i64: 4, 8>}, {transform_indices = @transform_4, window_bounds = array<i64: 128, 8>}, {transform_indices = @transform_5, window_bounds = array<i64: 1, 1, 8>}, {transform_indices = @transform_6, window_bounds = array<i64: 1, 1, 8>}, {transform_indices = @transform_7, window_bounds = array<i64: 1, 1, 8>}, {transform_indices = @transform_8, window_bounds = array<i64: 1, 1, 8>}]} {
    %c0 = arith.constant 0 : index
    %c0_0 = arith.constant 0 : index
    %0 = vector.load %arg1[%c0, %c0_0] : memref<128x72xbf16, #tpu.memory_space<vmem>>, vector<128x72xbf16>
    %c0_1 = arith.constant 0 : index
    %c0_2 = arith.constant 0 : index
    %1 = vector.load %arg2[%c0_1, %c0_2] : memref<72x8xbf16, #tpu.memory_space<vmem>>, vector<72x8xbf16>
    %cst = arith.constant dense<0.000000e+00> : vector<128x8xf32>
    %2 = tpu.matmul %0, %1, %cst {dimension_numbers = #tpu.dot_dimension_numbers<[1], [0], [0], [1], [0, 0, 1, 1], [], []>} : vector<128x72xbf16>, vector<72x8xbf16>, vector<128x8xf32> -> vector<128x8xf32>
    %c0_3 = arith.constant 0 : index
    %c0_4 = arith.constant 0 : index
    %3 = vector.load %arg3[%c0_3, %c0_4] : memref<128x4xbf16, #tpu.memory_space<vmem>>, vector<128x4xbf16>
    %c0_5 = arith.constant 0 : index
    %c0_6 = arith.constant 0 : index
    %4 = vector.load %arg4[%c0_5, %c0_6] : memref<4x8xbf16, #tpu.memory_space<vmem>>, vector<4x8xbf16>
    %cst_7 = arith.constant dense<0.000000e+00> : vector<128x8xf32>
    %5 = tpu.matmul %3, %4, %cst_7 {dimension_numbers = #tpu.dot_dimension_numbers<[1], [0], [0], [1], [0, 0, 1, 1], [], []>} : vector<128x4xbf16>, vector<4x8xbf16>, vector<128x8xf32> -> vector<128x8xf32>
    %6 = arith.truncf %2 : vector<128x8xf32> to vector<128x8xbf16>
    %c0_8 = arith.constant 0 : index
    %c0_9 = arith.constant 0 : index
    %7 = vector.load %arg5[%c0_8, %c0_9] : memref<128x8xbf16, #tpu.memory_space<vmem>>, vector<128x8xbf16>
    tpu.vector_store %arg5[%c0_8, %c0_9], %6 {strides = array<i32>} : memref<128x8xbf16, #tpu.memory_space<vmem>>, vector<128x8xbf16>,
    %cst_10 = arith.constant dense<0.000000e+00> : vector<8xf32>
    %8 = vector.multi_reduction <add>, %2, %cst_10 [0] : vector<128x8xf32> to vector<8xf32>
    %9 = vector.shape_cast %8 : vector<8xf32> to vector<1x8xf32>
    %c0_11 = arith.constant 0 : index
    %c0_12 = arith.constant 0 : index
    %c0_13 = arith.constant 0 : index
    %10 = vector.load %arg6[%c0_11, %c0_12, %c0_13] : memref<1x1x8xf32, #tpu.memory_space<vmem>>, vector<1x1x8xf32>
    %11 = vector.shape_cast %10 : vector<1x1x8xf32> to vector<1x8xf32>
    %12 = vector.shape_cast %9 : vector<1x8xf32> to vector<1x1x8xf32>
    tpu.vector_store %arg6[%c0_11, %c0_12, %c0_13], %12 {strides = array<i32>} : memref<1x1x8xf32, #tpu.memory_space<vmem>>, vector<1x1x8xf32>,
    %13 = arith.mulf %2, %2 : vector<128x8xf32>
    %cst_14 = arith.constant dense<0.000000e+00> : vector<8xf32>
    %14 = vector.multi_reduction <add>, %13, %cst_14 [0] : vector<128x8xf32> to vector<8xf32>
    %15 = vector.shape_cast %14 : vector<8xf32> to vector<1x8xf32>
    %c0_15 = arith.constant 0 : index
    %c0_16 = arith.constant 0 : index
    %c0_17 = arith.constant 0 : index
    %16 = vector.load %arg7[%c0_15, %c0_16, %c0_17] : memref<1x1x8xf32, #tpu.memory_space<vmem>>, vector<1x1x8xf32>
    %17 = vector.shape_cast %16 : vector<1x1x8xf32> to vector<1x8xf32>
    %18 = vector.shape_cast %15 : vector<1x8xf32> to vector<1x1x8xf32>
    tpu.vector_store %arg7[%c0_15, %c0_16, %c0_17], %18 {strides = array<i32>} : memref<1x1x8xf32, #tpu.memory_space<vmem>>, vector<1x1x8xf32>,
    %cst_18 = arith.constant dense<0.000000e+00> : vector<8xf32>
    %19 = vector.multi_reduction <add>, %5, %cst_18 [0] : vector<128x8xf32> to vector<8xf32>
    %20 = vector.shape_cast %19 : vector<8xf32> to vector<1x8xf32>
    %c0_19 = arith.constant 0 : index
    %c0_20 = arith.constant 0 : index
    %c0_21 = arith.constant 0 : index
    %21 = vector.load %arg8[%c0_19, %c0_20, %c0_21] : memref<1x1x8xf32, #tpu.memory_space<vmem>>, vector<1x1x8xf32>
    %22 = vector.shape_cast %21 : vector<1x1x8xf32> to vector<1x8xf32>
    %23 = vector.shape_cast %20 : vector<1x8xf32> to vector<1x1x8xf32>
    tpu.vector_store %arg8[%c0_19, %c0_20, %c0_21], %23 {strides = array<i32>} : memref<1x1x8xf32, #tpu.memory_space<vmem>>, vector<1x1x8xf32>,
    %24 = arith.mulf %5, %5 : vector<128x8xf32>
    %cst_22 = arith.constant dense<0.000000e+00> : vector<8xf32>
    %25 = vector.multi_reduction <add>, %24, %cst_22 [0] : vector<128x8xf32> to vector<8xf32>
    %26 = vector.shape_cast %25 : vector<8xf32> to vector<1x8xf32>
    %c0_23 = arith.constant 0 : index
    %c0_24 = arith.constant 0 : index
    %c0_25 = arith.constant 0 : index
    %27 = vector.load %arg9[%c0_23, %c0_24, %c0_25] : memref<1x1x8xf32, #tpu.memory_space<vmem>>, vector<1x1x8xf32>
    %28 = vector.shape_cast %27 : vector<1x1x8xf32> to vector<1x8xf32>
    %29 = vector.shape_cast %26 : vector<1x8xf32> to vector<1x1x8xf32>
    tpu.vector_store %arg9[%c0_23, %c0_24, %c0_25], %29 {strides = array<i32>} : memref<1x1x8xf32, #tpu.memory_space<vmem>>, vector<1x1x8xf32>,
    return
  }
  func.func @transform_0(%arg0: i32) -> (i32, i32) {
    %c0_i32 = arith.constant 0 : i32
    %c0_i32_0 = arith.constant 0 : i32
    return %arg0, %c0_i32 : i32, i32
  }
  func.func @transform_1(%arg0: i32) -> (i32, i32) {
    %c0_i32 = arith.constant 0 : i32
    %c0_i32_0 = arith.constant 0 : i32
    %c0_i32_1 = arith.constant 0 : i32
    return %c0_i32, %c0_i32_0 : i32, i32
  }
  func.func @transform_2(%arg0: i32) -> (i32, i32) {
    %c0_i32 = arith.constant 0 : i32
    %c0_i32_0 = arith.constant 0 : i32
    return %arg0, %c0_i32 : i32, i32
  }
  func.func @transform_3(%arg0: i32) -> (i32, i32) {
    %c0_i32 = arith.constant 0 : i32
    %c0_i32_0 = arith.constant 0 : i32
    %c0_i32_1 = arith.constant 0 : i32
    return %c0_i32, %c0_i32_0 : i32, i32
  }
  func.func @transform_4(%arg0: i32) -> (i32, i32) {
    %c0_i32 = arith.constant 0 : i32
    %c0_i32_0 = arith.constant 0 : i32
    return %arg0, %c0_i32 : i32, i32
  }
  func.func @transform_5(%arg0: i32) -> (i32, i32, i32) {
    %c0_i32 = arith.constant 0 : i32
    %c0_i32_0 = arith.constant 0 : i32
    %c0_i32_1 = arith.constant 0 : i32
    return %arg0, %c0_i32, %c0_i32_0 : i32, i32, i32
  }
  func.func @transform_6(%arg0: i32) -> (i32, i32, i32) {
    %c0_i32 = arith.constant 0 : i32
    %c0_i32_0 = arith.constant 0 : i32
    %c0_i32_1 = arith.constant 0 : i32
    return %arg0, %c0_i32, %c0_i32_0 : i32, i32, i32
  }
  func.func @transform_7(%arg0: i32) -> (i32, i32, i32) {
    %c0_i32 = arith.constant 0 : i32
    %c0_i32_0 = arith.constant 0 : i32
    %c0_i32_1 = arith.constant 0 : i32
    return %arg0, %c0_i32, %c0_i32_0 : i32, i32, i32
  }
  func.func @transform_8(%arg0: i32) -> (i32, i32, i32) {
    %c0_i32 = arith.constant 0 : i32
    %c0_i32_0 = arith.constant 0 : i32
    %c0_i32_1 = arith.constant 0 : i32
    return %arg0, %c0_i32, %c0_i32_0 : i32, i32, i32
  }
}

module attributes {stable_mosaic.version = 11 : i64} {
  func.func @_bn_proj_add_relu_kernel(%arg0: i32, %arg1: memref<128x8xbf16, #tpu.memory_space<vmem>>, %arg2: memref<1x8xf32, #tpu.memory_space<vmem>>, %arg3: memref<1x8xf32, #tpu.memory_space<vmem>>, %arg4: memref<128x4xbf16, #tpu.memory_space<vmem>>, %arg5: memref<4x8xbf16, #tpu.memory_space<vmem>>, %arg6: memref<1x8xf32, #tpu.memory_space<vmem>>, %arg7: memref<1x8xf32, #tpu.memory_space<vmem>>, %arg8: memref<128x8xbf16, #tpu.memory_space<vmem>>) attributes {dimension_semantics = [#tpu.dimension_semantics<parallel>], iteration_bounds = array<i64: 1>, scalar_prefetch = 0 : i64, scratch_operands = 0 : i64, tpu.core_type = #tpu.core_type<tc>, window_params = [{transform_indices = @transform_0, window_bounds = array<i64: 128, 8>}, {pipeline_mode = #tpu.pipeline_mode<synchronous>, transform_indices = @transform_1, window_bounds = array<i64: 1, 8>}, {pipeline_mode = #tpu.pipeline_mode<synchronous>, transform_indices = @transform_2, window_bounds = array<i64: 1, 8>}, {transform_indices = @transform_3, window_bounds = array<i64: 128, 4>}, {pipeline_mode = #tpu.pipeline_mode<synchronous>, transform_indices = @transform_4, window_bounds = array<i64: 4, 8>}, {pipeline_mode = #tpu.pipeline_mode<synchronous>, transform_indices = @transform_5, window_bounds = array<i64: 1, 8>}, {pipeline_mode = #tpu.pipeline_mode<synchronous>, transform_indices = @transform_6, window_bounds = array<i64: 1, 8>}, {transform_indices = @transform_7, window_bounds = array<i64: 128, 8>}]} {
    %c0 = arith.constant 0 : index
    %c0_0 = arith.constant 0 : index
    %0 = vector.load %arg4[%c0, %c0_0] : memref<128x4xbf16, #tpu.memory_space<vmem>>, vector<128x4xbf16>
    %c0_1 = arith.constant 0 : index
    %c0_2 = arith.constant 0 : index
    %1 = vector.load %arg5[%c0_1, %c0_2] : memref<4x8xbf16, #tpu.memory_space<vmem>>, vector<4x8xbf16>
    %cst = arith.constant dense<0.000000e+00> : vector<128x8xf32>
    %2 = tpu.matmul %0, %1, %cst {dimension_numbers = #tpu.dot_dimension_numbers<[1], [0], [0], [1], [0, 0, 1, 1], [], []>} : vector<128x4xbf16>, vector<4x8xbf16>, vector<128x8xf32> -> vector<128x8xf32>
    %c0_3 = arith.constant 0 : index
    %c0_4 = arith.constant 0 : index
    %3 = vector.load %arg1[%c0_3, %c0_4] : memref<128x8xbf16, #tpu.memory_space<vmem>>, vector<128x8xbf16>
    %4 = arith.extf %3 : vector<128x8xbf16> to vector<128x8xf32>
    %c0_5 = arith.constant 0 : index
    %c0_6 = arith.constant 0 : index
    %5 = vector.load %arg2[%c0_5, %c0_6] : memref<1x8xf32, #tpu.memory_space<vmem>>, vector<1x8xf32>
    %6 = vector.broadcast %5 : vector<1x8xf32> to vector<128x8xf32>
    %7 = arith.mulf %4, %6 : vector<128x8xf32>
    %c0_7 = arith.constant 0 : index
    %c0_8 = arith.constant 0 : index
    %8 = vector.load %arg3[%c0_7, %c0_8] : memref<1x8xf32, #tpu.memory_space<vmem>>, vector<1x8xf32>
    %9 = vector.broadcast %8 : vector<1x8xf32> to vector<128x8xf32>
    %10 = arith.addf %7, %9 : vector<128x8xf32>
    %c0_9 = arith.constant 0 : index
    %c0_10 = arith.constant 0 : index
    %11 = vector.load %arg6[%c0_9, %c0_10] : memref<1x8xf32, #tpu.memory_space<vmem>>, vector<1x8xf32>
    %12 = vector.broadcast %11 : vector<1x8xf32> to vector<128x8xf32>
    %13 = arith.mulf %2, %12 : vector<128x8xf32>
    %14 = arith.addf %10, %13 : vector<128x8xf32>
    %c0_11 = arith.constant 0 : index
    %c0_12 = arith.constant 0 : index
    %15 = vector.load %arg7[%c0_11, %c0_12] : memref<1x8xf32, #tpu.memory_space<vmem>>, vector<1x8xf32>
    %16 = vector.broadcast %15 : vector<1x8xf32> to vector<128x8xf32>
    %17 = arith.addf %14, %16 : vector<128x8xf32>
    %cst_13 = arith.constant 0.000000e+00 : f32
    %18 = vector.broadcast %cst_13 : f32 to vector<128x8xf32>
    %19 = arith.maximumf %17, %18 : vector<128x8xf32>
    %20 = arith.truncf %19 : vector<128x8xf32> to vector<128x8xbf16>
    %c0_14 = arith.constant 0 : index
    %c0_15 = arith.constant 0 : index
    %21 = vector.load %arg8[%c0_14, %c0_15] : memref<128x8xbf16, #tpu.memory_space<vmem>>, vector<128x8xbf16>
    tpu.vector_store %arg8[%c0_14, %c0_15], %20 {strides = array<i32>} : memref<128x8xbf16, #tpu.memory_space<vmem>>, vector<128x8xbf16>,
    return
  }
  func.func @transform_0(%arg0: i32) -> (i32, i32) {
    %c0_i32 = arith.constant 0 : i32
    %c0_i32_0 = arith.constant 0 : i32
    return %arg0, %c0_i32 : i32, i32
  }
  func.func @transform_1(%arg0: i32) -> (i32, i32) {
    %c0_i32 = arith.constant 0 : i32
    %c0_i32_0 = arith.constant 0 : i32
    %c0_i32_1 = arith.constant 0 : i32
    return %c0_i32, %c0_i32_0 : i32, i32
  }
  func.func @transform_2(%arg0: i32) -> (i32, i32) {
    %c0_i32 = arith.constant 0 : i32
    %c0_i32_0 = arith.constant 0 : i32
    %c0_i32_1 = arith.constant 0 : i32
    return %c0_i32, %c0_i32_0 : i32, i32
  }
  func.func @transform_3(%arg0: i32) -> (i32, i32) {
    %c0_i32 = arith.constant 0 : i32
    %c0_i32_0 = arith.constant 0 : i32
    return %arg0, %c0_i32 : i32, i32
  }
  func.func @transform_4(%arg0: i32) -> (i32, i32) {
    %c0_i32 = arith.constant 0 : i32
    %c0_i32_0 = arith.constant 0 : i32
    %c0_i32_1 = arith.constant 0 : i32
    return %c0_i32, %c0_i32_0 : i32, i32
  }
  func.func @transform_5(%arg0: i32) -> (i32, i32) {
    %c0_i32 = arith.constant 0 : i32
    %c0_i32_0 = arith.constant 0 : i32
    %c0_i32_1 = arith.constant 0 : i32
    return %c0_i32, %c0_i32_0 : i32, i32
  }
  func.func @transform_6(%arg0: i32) -> (i32, i32) {
    %c0_i32 = arith.constant 0 : i32
    %c0_i32_0 = arith.constant 0 : i32
    %c0_i32_1 = arith.constant 0 : i32
    return %c0_i32, %c0_i32_0 : i32, i32
  }
  func.func @transform_7(%arg0: i32) -> (i32, i32) {
    %c0_i32 = arith.constant 0 : i32
    %c0_i32_0 = arith.constant 0 : i32
    return %arg0, %c0_i32 : i32, i32
  }
}

module attributes {stable_mosaic.version = 11 : i64} {
  func.func @kernel(%arg0: i32, %arg1: memref<1x10x10x8xbf16, #tpu.memory_space<vmem>>, %arg2: memref<9x8x8xbf16, #tpu.memory_space<vmem>>, %arg3: memref<1x64x8xbf16, #tpu.memory_space<vmem>>, %arg4: memref<1x1x8xf32, #tpu.memory_space<vmem>>, %arg5: memref<1x1x8xf32, #tpu.memory_space<vmem>>) attributes {dimension_semantics = [#tpu.dimension_semantics<parallel>], iteration_bounds = array<i64: 2>, scalar_prefetch = 0 : i64, scratch_operands = 0 : i64, tpu.core_type = #tpu.core_type<tc>, window_params = [{transform_indices = @transform_0, window_bounds = array<i64: 1, 10, 10, 8>}, {pipeline_mode = #tpu.pipeline_mode<synchronous>, transform_indices = @transform_1, window_bounds = array<i64: 9, 8, 8>}, {transform_indices = @transform_2, window_bounds = array<i64: 1, 64, 8>}, {transform_indices = @transform_3, window_bounds = array<i64: 1, 1, 8>}, {transform_indices = @transform_4, window_bounds = array<i64: 1, 1, 8>}]} {
    %c0 = arith.constant 0 : index
    %c0_0 = arith.constant 0 : index
    %c0_1 = arith.constant 0 : index
    %c0_2 = arith.constant 0 : index
    %0 = vector.load %arg1[%c0, %c0_0, %c0_1, %c0_2] : memref<1x10x10x8xbf16, #tpu.memory_space<vmem>>, vector<1x10x10x8xbf16>
    %1 = vector.shape_cast %0 : vector<1x10x10x8xbf16> to vector<10x10x8xbf16>
    %2 = arith.extf %1 : vector<10x10x8xbf16> to vector<10x10x8xf32>
    %cst = arith.constant 0.000000e+00 : f32
    %3 = vector.broadcast %cst : f32 to vector<64x8xf32>
    %4 = vector.extract_strided_slice %2 {offsets = [0, 0, 0], sizes = [8, 8, 8], strides = [1, 1, 1]} : vector<10x10x8xf32> to vector<8x8x8xf32>
    %5 = vector.shape_cast %4 : vector<8x8x8xf32> to vector<64x8xf32>
    %6 = arith.truncf %5 : vector<64x8xf32> to vector<64x8xbf16>
    %c0_3 = arith.constant 0 : index
    %c0_4 = arith.constant 0 : index
    %c0_5 = arith.constant 0 : index
    %7 = vector.load %arg2[%c0_3, %c0_4, %c0_5] : memref<9x8x8xbf16, #tpu.memory_space<vmem>>, vector<1x8x8xbf16>
    %8 = vector.shape_cast %7 : vector<1x8x8xbf16> to vector<8x8xbf16>
    %cst_6 = arith.constant dense<0.000000e+00> : vector<64x8xf32>
    %9 = tpu.matmul %6, %8, %cst_6 {dimension_numbers = #tpu.dot_dimension_numbers<[1], [0], [0], [1], [0, 0, 1, 1], [], []>} : vector<64x8xbf16>, vector<8x8xbf16>, vector<64x8xf32> -> vector<64x8xf32>
    %10 = arith.addf %3, %9 : vector<64x8xf32>
    %11 = vector.extract_strided_slice %2 {offsets = [0, 1, 0], sizes = [8, 8, 8], strides = [1, 1, 1]} : vector<10x10x8xf32> to vector<8x8x8xf32>
    %12 = vector.shape_cast %11 : vector<8x8x8xf32> to vector<64x8xf32>
    %13 = arith.truncf %12 : vector<64x8xf32> to vector<64x8xbf16>
    %c1 = arith.constant 1 : index
    %c0_7 = arith.constant 0 : index
    %c0_8 = arith.constant 0 : index
    %14 = vector.load %arg2[%c1, %c0_7, %c0_8] : memref<9x8x8xbf16, #tpu.memory_space<vmem>>, vector<1x8x8xbf16>
    %15 = vector.shape_cast %14 : vector<1x8x8xbf16> to vector<8x8xbf16>
    %cst_9 = arith.constant dense<0.000000e+00> : vector<64x8xf32>
    %16 = tpu.matmul %13, %15, %cst_9 {dimension_numbers = #tpu.dot_dimension_numbers<[1], [0], [0], [1], [0, 0, 1, 1], [], []>} : vector<64x8xbf16>, vector<8x8xbf16>, vector<64x8xf32> -> vector<64x8xf32>
    %17 = arith.addf %10, %16 : vector<64x8xf32>
    %18 = vector.extract_strided_slice %2 {offsets = [0, 2, 0], sizes = [8, 8, 8], strides = [1, 1, 1]} : vector<10x10x8xf32> to vector<8x8x8xf32>
    %19 = vector.shape_cast %18 : vector<8x8x8xf32> to vector<64x8xf32>
    %20 = arith.truncf %19 : vector<64x8xf32> to vector<64x8xbf16>
    %c2 = arith.constant 2 : index
    %c0_10 = arith.constant 0 : index
    %c0_11 = arith.constant 0 : index
    %21 = vector.load %arg2[%c2, %c0_10, %c0_11] : memref<9x8x8xbf16, #tpu.memory_space<vmem>>, vector<1x8x8xbf16>
    %22 = vector.shape_cast %21 : vector<1x8x8xbf16> to vector<8x8xbf16>
    %cst_12 = arith.constant dense<0.000000e+00> : vector<64x8xf32>
    %23 = tpu.matmul %20, %22, %cst_12 {dimension_numbers = #tpu.dot_dimension_numbers<[1], [0], [0], [1], [0, 0, 1, 1], [], []>} : vector<64x8xbf16>, vector<8x8xbf16>, vector<64x8xf32> -> vector<64x8xf32>
    %24 = arith.addf %17, %23 : vector<64x8xf32>
    %25 = vector.extract_strided_slice %2 {offsets = [1, 0, 0], sizes = [8, 8, 8], strides = [1, 1, 1]} : vector<10x10x8xf32> to vector<8x8x8xf32>
    %26 = vector.shape_cast %25 : vector<8x8x8xf32> to vector<64x8xf32>
    %27 = arith.truncf %26 : vector<64x8xf32> to vector<64x8xbf16>
    %c3 = arith.constant 3 : index
    %c0_13 = arith.constant 0 : index
    %c0_14 = arith.constant 0 : index
    %28 = vector.load %arg2[%c3, %c0_13, %c0_14] : memref<9x8x8xbf16, #tpu.memory_space<vmem>>, vector<1x8x8xbf16>
    %29 = vector.shape_cast %28 : vector<1x8x8xbf16> to vector<8x8xbf16>
    %cst_15 = arith.constant dense<0.000000e+00> : vector<64x8xf32>
    %30 = tpu.matmul %27, %29, %cst_15 {dimension_numbers = #tpu.dot_dimension_numbers<[1], [0], [0], [1], [0, 0, 1, 1], [], []>} : vector<64x8xbf16>, vector<8x8xbf16>, vector<64x8xf32> -> vector<64x8xf32>
    %31 = arith.addf %24, %30 : vector<64x8xf32>
    %32 = vector.extract_strided_slice %2 {offsets = [1, 1, 0], sizes = [8, 8, 8], strides = [1, 1, 1]} : vector<10x10x8xf32> to vector<8x8x8xf32>
    %33 = vector.shape_cast %32 : vector<8x8x8xf32> to vector<64x8xf32>
    %34 = arith.truncf %33 : vector<64x8xf32> to vector<64x8xbf16>
    %c4 = arith.constant 4 : index
    %c0_16 = arith.constant 0 : index
    %c0_17 = arith.constant 0 : index
    %35 = vector.load %arg2[%c4, %c0_16, %c0_17] : memref<9x8x8xbf16, #tpu.memory_space<vmem>>, vector<1x8x8xbf16>
    %36 = vector.shape_cast %35 : vector<1x8x8xbf16> to vector<8x8xbf16>
    %cst_18 = arith.constant dense<0.000000e+00> : vector<64x8xf32>
    %37 = tpu.matmul %34, %36, %cst_18 {dimension_numbers = #tpu.dot_dimension_numbers<[1], [0], [0], [1], [0, 0, 1, 1], [], []>} : vector<64x8xbf16>, vector<8x8xbf16>, vector<64x8xf32> -> vector<64x8xf32>
    %38 = arith.addf %31, %37 : vector<64x8xf32>
    %39 = vector.extract_strided_slice %2 {offsets = [1, 2, 0], sizes = [8, 8, 8], strides = [1, 1, 1]} : vector<10x10x8xf32> to vector<8x8x8xf32>
    %40 = vector.shape_cast %39 : vector<8x8x8xf32> to vector<64x8xf32>
    %41 = arith.truncf %40 : vector<64x8xf32> to vector<64x8xbf16>
    %c5 = arith.constant 5 : index
    %c0_19 = arith.constant 0 : index
    %c0_20 = arith.constant 0 : index
    %42 = vector.load %arg2[%c5, %c0_19, %c0_20] : memref<9x8x8xbf16, #tpu.memory_space<vmem>>, vector<1x8x8xbf16>
    %43 = vector.shape_cast %42 : vector<1x8x8xbf16> to vector<8x8xbf16>
    %cst_21 = arith.constant dense<0.000000e+00> : vector<64x8xf32>
    %44 = tpu.matmul %41, %43, %cst_21 {dimension_numbers = #tpu.dot_dimension_numbers<[1], [0], [0], [1], [0, 0, 1, 1], [], []>} : vector<64x8xbf16>, vector<8x8xbf16>, vector<64x8xf32> -> vector<64x8xf32>
    %45 = arith.addf %38, %44 : vector<64x8xf32>
    %46 = vector.extract_strided_slice %2 {offsets = [2, 0, 0], sizes = [8, 8, 8], strides = [1, 1, 1]} : vector<10x10x8xf32> to vector<8x8x8xf32>
    %47 = vector.shape_cast %46 : vector<8x8x8xf32> to vector<64x8xf32>
    %48 = arith.truncf %47 : vector<64x8xf32> to vector<64x8xbf16>
    %c6 = arith.constant 6 : index
    %c0_22 = arith.constant 0 : index
    %c0_23 = arith.constant 0 : index
    %49 = vector.load %arg2[%c6, %c0_22, %c0_23] : memref<9x8x8xbf16, #tpu.memory_space<vmem>>, vector<1x8x8xbf16>
    %50 = vector.shape_cast %49 : vector<1x8x8xbf16> to vector<8x8xbf16>
    %cst_24 = arith.constant dense<0.000000e+00> : vector<64x8xf32>
    %51 = tpu.matmul %48, %50, %cst_24 {dimension_numbers = #tpu.dot_dimension_numbers<[1], [0], [0], [1], [0, 0, 1, 1], [], []>} : vector<64x8xbf16>, vector<8x8xbf16>, vector<64x8xf32> -> vector<64x8xf32>
    %52 = arith.addf %45, %51 : vector<64x8xf32>
    %53 = vector.extract_strided_slice %2 {offsets = [2, 1, 0], sizes = [8, 8, 8], strides = [1, 1, 1]} : vector<10x10x8xf32> to vector<8x8x8xf32>
    %54 = vector.shape_cast %53 : vector<8x8x8xf32> to vector<64x8xf32>
    %55 = arith.truncf %54 : vector<64x8xf32> to vector<64x8xbf16>
    %c7 = arith.constant 7 : index
    %c0_25 = arith.constant 0 : index
    %c0_26 = arith.constant 0 : index
    %56 = vector.load %arg2[%c7, %c0_25, %c0_26] : memref<9x8x8xbf16, #tpu.memory_space<vmem>>, vector<1x8x8xbf16>
    %57 = vector.shape_cast %56 : vector<1x8x8xbf16> to vector<8x8xbf16>
    %cst_27 = arith.constant dense<0.000000e+00> : vector<64x8xf32>
    %58 = tpu.matmul %55, %57, %cst_27 {dimension_numbers = #tpu.dot_dimension_numbers<[1], [0], [0], [1], [0, 0, 1, 1], [], []>} : vector<64x8xbf16>, vector<8x8xbf16>, vector<64x8xf32> -> vector<64x8xf32>
    %59 = arith.addf %52, %58 : vector<64x8xf32>
    %60 = vector.extract_strided_slice %2 {offsets = [2, 2, 0], sizes = [8, 8, 8], strides = [1, 1, 1]} : vector<10x10x8xf32> to vector<8x8x8xf32>
    %61 = vector.shape_cast %60 : vector<8x8x8xf32> to vector<64x8xf32>
    %62 = arith.truncf %61 : vector<64x8xf32> to vector<64x8xbf16>
    %c8 = arith.constant 8 : index
    %c0_28 = arith.constant 0 : index
    %c0_29 = arith.constant 0 : index
    %63 = vector.load %arg2[%c8, %c0_28, %c0_29] : memref<9x8x8xbf16, #tpu.memory_space<vmem>>, vector<1x8x8xbf16>
    %64 = vector.shape_cast %63 : vector<1x8x8xbf16> to vector<8x8xbf16>
    %cst_30 = arith.constant dense<0.000000e+00> : vector<64x8xf32>
    %65 = tpu.matmul %62, %64, %cst_30 {dimension_numbers = #tpu.dot_dimension_numbers<[1], [0], [0], [1], [0, 0, 1, 1], [], []>} : vector<64x8xbf16>, vector<8x8xbf16>, vector<64x8xf32> -> vector<64x8xf32>
    %66 = arith.addf %59, %65 : vector<64x8xf32>
    %67 = arith.truncf %66 : vector<64x8xf32> to vector<64x8xbf16>
    %c0_31 = arith.constant 0 : index
    %c0_32 = arith.constant 0 : index
    %c0_33 = arith.constant 0 : index
    %68 = vector.load %arg3[%c0_31, %c0_32, %c0_33] : memref<1x64x8xbf16, #tpu.memory_space<vmem>>, vector<1x64x8xbf16>
    %69 = vector.shape_cast %68 : vector<1x64x8xbf16> to vector<64x8xbf16>
    %70 = vector.shape_cast %67 : vector<64x8xbf16> to vector<1x64x8xbf16>
    tpu.vector_store %arg3[%c0_31, %c0_32, %c0_33], %70 {strides = array<i32>} : memref<1x64x8xbf16, #tpu.memory_space<vmem>>, vector<1x64x8xbf16>,
    %cst_34 = arith.constant dense<0.000000e+00> : vector<8xf32>
    %71 = vector.multi_reduction <add>, %66, %cst_34 [0] : vector<64x8xf32> to vector<8xf32>
    %72 = vector.shape_cast %71 : vector<8xf32> to vector<1x8xf32>
    %c0_35 = arith.constant 0 : index
    %c0_36 = arith.constant 0 : index
    %c0_37 = arith.constant 0 : index
    %73 = vector.load %arg4[%c0_35, %c0_36, %c0_37] : memref<1x1x8xf32, #tpu.memory_space<vmem>>, vector<1x1x8xf32>
    %74 = vector.shape_cast %73 : vector<1x1x8xf32> to vector<1x8xf32>
    %75 = vector.shape_cast %72 : vector<1x8xf32> to vector<1x1x8xf32>
    tpu.vector_store %arg4[%c0_35, %c0_36, %c0_37], %75 {strides = array<i32>} : memref<1x1x8xf32, #tpu.memory_space<vmem>>, vector<1x1x8xf32>,
    %76 = arith.mulf %66, %66 : vector<64x8xf32>
    %cst_38 = arith.constant dense<0.000000e+00> : vector<8xf32>
    %77 = vector.multi_reduction <add>, %76, %cst_38 [0] : vector<64x8xf32> to vector<8xf32>
    %78 = vector.shape_cast %77 : vector<8xf32> to vector<1x8xf32>
    %c0_39 = arith.constant 0 : index
    %c0_40 = arith.constant 0 : index
    %c0_41 = arith.constant 0 : index
    %79 = vector.load %arg5[%c0_39, %c0_40, %c0_41] : memref<1x1x8xf32, #tpu.memory_space<vmem>>, vector<1x1x8xf32>
    %80 = vector.shape_cast %79 : vector<1x1x8xf32> to vector<1x8xf32>
    %81 = vector.shape_cast %78 : vector<1x8xf32> to vector<1x1x8xf32>
    tpu.vector_store %arg5[%c0_39, %c0_40, %c0_41], %81 {strides = array<i32>} : memref<1x1x8xf32, #tpu.memory_space<vmem>>, vector<1x1x8xf32>,
    return
  }
  func.func @transform_0(%arg0: i32) -> (i32, i32, i32, i32) {
    %c0_i32 = arith.constant 0 : i32
    %c0_i32_0 = arith.constant 0 : i32
    %c0_i32_1 = arith.constant 0 : i32
    %c0_i32_2 = arith.constant 0 : i32
    return %arg0, %c0_i32, %c0_i32_0, %c0_i32_1 : i32, i32, i32, i32
  }
  func.func @transform_1(%arg0: i32) -> (i32, i32, i32) {
    %c0_i32 = arith.constant 0 : i32
    %c0_i32_0 = arith.constant 0 : i32
    %c0_i32_1 = arith.constant 0 : i32
    %c0_i32_2 = arith.constant 0 : i32
    return %c0_i32, %c0_i32_0, %c0_i32_1 : i32, i32, i32
  }
  func.func @transform_2(%arg0: i32) -> (i32, i32, i32) {
    %c0_i32 = arith.constant 0 : i32
    %c0_i32_0 = arith.constant 0 : i32
    %c0_i32_1 = arith.constant 0 : i32
    return %arg0, %c0_i32, %c0_i32_0 : i32, i32, i32
  }
  func.func @transform_3(%arg0: i32) -> (i32, i32, i32) {
    %c0_i32 = arith.constant 0 : i32
    %c0_i32_0 = arith.constant 0 : i32
    %c0_i32_1 = arith.constant 0 : i32
    return %arg0, %c0_i32, %c0_i32_0 : i32, i32, i32
  }
  func.func @transform_4(%arg0: i32) -> (i32, i32, i32) {
    %c0_i32 = arith.constant 0 : i32
    %c0_i32_0 = arith.constant 0 : i32
    %c0_i32_1 = arith.constant 0 : i32
    return %arg0, %c0_i32, %c0_i32_0 : i32, i32, i32
  }
}

module attributes {stable_mosaic.version = 11 : i64} {
  func.func @_bn_add_relu_kernel(%arg0: i32, %arg1: memref<128x8xbf16, #tpu.memory_space<vmem>>, %arg2: memref<1x8xf32, #tpu.memory_space<vmem>>, %arg3: memref<1x8xf32, #tpu.memory_space<vmem>>, %arg4: memref<128x8xbf16, #tpu.memory_space<vmem>>, %arg5: memref<128x8xf32, #tpu.memory_space<vmem>>) attributes {dimension_semantics = [#tpu.dimension_semantics<parallel>], iteration_bounds = array<i64: 1>, scalar_prefetch = 0 : i64, scratch_operands = 0 : i64, tpu.core_type = #tpu.core_type<tc>, window_params = [{transform_indices = @transform_0, window_bounds = array<i64: 128, 8>}, {pipeline_mode = #tpu.pipeline_mode<synchronous>, transform_indices = @transform_1, window_bounds = array<i64: 1, 8>}, {pipeline_mode = #tpu.pipeline_mode<synchronous>, transform_indices = @transform_2, window_bounds = array<i64: 1, 8>}, {transform_indices = @transform_3, window_bounds = array<i64: 128, 8>}, {transform_indices = @transform_4, window_bounds = array<i64: 128, 8>}]} {
    %c0 = arith.constant 0 : index
    %c0_0 = arith.constant 0 : index
    %0 = vector.load %arg1[%c0, %c0_0] : memref<128x8xbf16, #tpu.memory_space<vmem>>, vector<128x8xbf16>
    %1 = arith.extf %0 : vector<128x8xbf16> to vector<128x8xf32>
    %c0_1 = arith.constant 0 : index
    %c0_2 = arith.constant 0 : index
    %2 = vector.load %arg2[%c0_1, %c0_2] : memref<1x8xf32, #tpu.memory_space<vmem>>, vector<1x8xf32>
    %3 = vector.broadcast %2 : vector<1x8xf32> to vector<128x8xf32>
    %4 = arith.mulf %1, %3 : vector<128x8xf32>
    %c0_3 = arith.constant 0 : index
    %c0_4 = arith.constant 0 : index
    %5 = vector.load %arg3[%c0_3, %c0_4] : memref<1x8xf32, #tpu.memory_space<vmem>>, vector<1x8xf32>
    %6 = vector.broadcast %5 : vector<1x8xf32> to vector<128x8xf32>
    %7 = arith.addf %4, %6 : vector<128x8xf32>
    %c0_5 = arith.constant 0 : index
    %c0_6 = arith.constant 0 : index
    %8 = vector.load %arg4[%c0_5, %c0_6] : memref<128x8xbf16, #tpu.memory_space<vmem>>, vector<128x8xbf16>
    %9 = arith.extf %8 : vector<128x8xbf16> to vector<128x8xf32>
    %10 = arith.addf %7, %9 : vector<128x8xf32>
    %cst = arith.constant 0.000000e+00 : f32
    %11 = vector.broadcast %cst : f32 to vector<128x8xf32>
    %12 = arith.maximumf %10, %11 : vector<128x8xf32>
    %c0_7 = arith.constant 0 : index
    %c0_8 = arith.constant 0 : index
    %13 = vector.load %arg5[%c0_7, %c0_8] : memref<128x8xf32, #tpu.memory_space<vmem>>, vector<128x8xf32>
    tpu.vector_store %arg5[%c0_7, %c0_8], %12 {strides = array<i32>} : memref<128x8xf32, #tpu.memory_space<vmem>>, vector<128x8xf32>,
    return
  }
  func.func @transform_0(%arg0: i32) -> (i32, i32) {
    %c0_i32 = arith.constant 0 : i32
    %c0_i32_0 = arith.constant 0 : i32
    return %arg0, %c0_i32 : i32, i32
  }
  func.func @transform_1(%arg0: i32) -> (i32, i32) {
    %c0_i32 = arith.constant 0 : i32
    %c0_i32_0 = arith.constant 0 : i32
    %c0_i32_1 = arith.constant 0 : i32
    return %c0_i32, %c0_i32_0 : i32, i32
  }
  func.func @transform_2(%arg0: i32) -> (i32, i32) {
    %c0_i32 = arith.constant 0 : i32
    %c0_i32_0 = arith.constant 0 : i32
    %c0_i32_1 = arith.constant 0 : i32
    return %c0_i32, %c0_i32_0 : i32, i32
  }
  func.func @transform_3(%arg0: i32) -> (i32, i32) {
    %c0_i32 = arith.constant 0 : i32
    %c0_i32_0 = arith.constant 0 : i32
    return %arg0, %c0_i32 : i32, i32
  }
  func.func @transform_4(%arg0: i32) -> (i32, i32) {
    %c0_i32 = arith.constant 0 : i32
    %c0_i32_0 = arith.constant 0 : i32
    return %arg0, %c0_i32 : i32, i32
  }
}

</mosaic_0001>

<llo_original>
// kernel: _lambda_.9
$region0: #{_lambda_.9}
  #allocation0 [shape = 'u32[]', space=smem, size = 0x4, offset = 0x4, fixed_abs, tag = 'smem constant byte address 0x4 - core index']
  #allocation1 [shape = 'u32[144,128]{1,0:T(1,128)}', space=vmem, size = 0x12000, scoped, tag = 'internal scratch']
  %s0 = inlined_call_operand.vmem [shape: bf16[128,8], index: 0, kind: input, shape index: {}]
  %s1 = inlined_call_operand.vmem [shape: f32[1,8], index: 1, kind: input, shape index: {}]
  %s2 = inlined_call_operand.vmem [shape: f32[1,8], index: 2, kind: input, shape index: {}]
  %s3 = inlined_call_operand.vmem [shape: bf16[128,8], index: 3, kind: output, shape index: {}]
  %s4 = sld [smem:[#allocation0]]
  $region22: #{_lambda_.9} parent=0
    _
  %s6 = ssub.s32 1, %s4
  %s7 = scalar_select 0, %s6, %s4
  // Predicated region
  $region2: #{_lambda_.9} parent=0 // pred_check
    _
  $region3: #{_lambda_.9} parent=0 // pred_check_branch
    %9 = sbr.rel (0) target = $region5
  $region4: #{_lambda_.9} parent=0 // pred_region
    _
  $region5: #{_lambda_.9} parent=0 // pred_fallthru
    _
  // Predicated region
  $region6: #{_lambda_.9} parent=0 // pred_check
    _
  $region7: #{_lambda_.9} parent=0 // pred_check_branch
    %11 = sbr.rel (0) target = $region9
  $region8: #{_lambda_.9} parent=0 // pred_region
    _
  $region9: #{_lambda_.9} parent=0 // pred_fallthru
    _
  // Predicated region
  $region10: #{_lambda_.9} parent=0 // pred_check
    _
  $region11: #{_lambda_.9} parent=0 // pred_check_branch
    %13 = sbr.rel (0) target = $region13
  $region12: #{_lambda_.9} parent=0 // pred_region
    _
  $region13: #{_lambda_.9} parent=0 // pred_fallthru
    _
  %v14 = vld [vmem:[%s0] sm:$0xf]
  %v15 = vld [vmem:[%s0 + $0x4] sm:$0xf]
  %v16 = vld [vmem:[%s0 + $0x8] sm:$0xf]
  %v17 = vld [vmem:[%s0 + $0xc] sm:$0xf]
  %v18 = vld [vmem:[%s0 + $0x10] sm:$0xf]
  %v19 = vld [vmem:[%s0 + $0x14] sm:$0xf]
  %v20 = vld [vmem:[%s0 + $0x18] sm:$0xf]
  %v21 = vld [vmem:[%s0 + $0x1c] sm:$0xf]
  %v22 = vld [vmem:[%s0 + $0x20] sm:$0xf]
  %v23 = vld [vmem:[%s0 + $0x24] sm:$0xf]
  %v24 = vld [vmem:[%s0 + $0x28] sm:$0xf]
  %v25 = vld [vmem:[%s0 + $0x2c] sm:$0xf]
  %v26 = vld [vmem:[%s0 + $0x30] sm:$0xf]
  %v27 = vld [vmem:[%s0 + $0x34] sm:$0xf]
  %v28 = vld [vmem:[%s0 + $0x38] sm:$0xf]
  %v29 = vld [vmem:[%s0 + $0x3c] sm:$0xf]
  %v30 = vunpack.c.l.bf16 %v14
  %v31 = vunpack.c.l.bf16 %v15
  %v32 = vunpack.c.l.bf16 %v16
  %v33 = vunpack.c.l.bf16 %v17
  %v34 = vunpack.c.l.bf16 %v18
  %v35 = vunpack.c.l.bf16 %v19
  %v36 = vunpack.c.l.bf16 %v20
  %v37 = vunpack.c.l.bf16 %v21
  %v38 = vunpack.c.l.bf16 %v22
  %v39 = vunpack.c.l.bf16 %v23
  %v40 = vunpack.c.l.bf16 %v24
  %v41 = vunpack.c.l.bf16 %v25
  %v42 = vunpack.c.l.bf16 %v26
  %v43 = vunpack.c.l.bf16 %v27
  %v44 = vunpack.c.l.bf16 %v28
  %v45 = vunpack.c.l.bf16 %v29
  %v46 = vld [vmem:[%s1] sm:$0x1]
  %v48 = vlaneseq
  %v49 = vshrl.u32 %v48, 7
  %v50 = vsub.s32 0, %v49
  %v51 = vrot.slane %v46, %v50
  %v53 = vmul.f32 %v30, %v51
  %v54 = vmul.f32 %v31, %v51
  %v55 = vmul.f32 %v32, %v51
  %v56 = vmul.f32 %v33, %v51
  %v57 = vmul.f32 %v34, %v51
  %v58 = vmul.f32 %v35, %v51
  %v59 = vmul.f32 %v36, %v51
  %v60 = vmul.f32 %v37, %v51
  %v61 = vmul.f32 %v38, %v51
  %v62 = vmul.f32 %v39, %v51
  %v63 = vmul.f32 %v40, %v51
  %v64 = vmul.f32 %v41, %v51
  %v65 = vmul.f32 %v42, %v51
  %v66 = vmul.f32 %v43, %v51
  %v67 = vmul.f32 %v44, %v51
  %v68 = vmul.f32 %v45, %v51
  %v69 = vld [vmem:[%s2] sm:$0x1]
  %v71 = vlaneseq
  %v72 = vshrl.u32 %v71, 7
  %v73 = vsub.s32 0, %v72
  %v74 = vrot.slane %v69, %v73
  %v76 = vadd.f32 %v53, %v74
  %v77 = vadd.f32 %v54, %v74
  %v78 = vadd.f32 %v55, %v74
  %v79 = vadd.f32 %v56, %v74
  %v80 = vadd.f32 %v57, %v74
  %v81 = vadd.f32 %v58, %v74
  %v82 = vadd.f32 %v59, %v74
  %v83 = vadd.f32 %v60, %v74
  %v84 = vadd.f32 %v61, %v74
  %v85 = vadd.f32 %v62, %v74
  %v86 = vadd.f32 %v63, %v74
  %v87 = vadd.f32 %v64, %v74
  %v88 = vadd.f32 %v65, %v74
  %v89 = vadd.f32 %v66, %v74
  %v90 = vadd.f32 %v67, %v74
  %v91 = vadd.f32 %v68, %v74
  %v92 = vmax.f32 %v76, 0.0
  %v93 = vmax.f32 %v77, 0.0
  %v94 = vmax.f32 %v78, 0.0
  %v95 = vmax.f32 %v79, 0.0
  %v96 = vmax.f32 %v80, 0.0
  %v97 = vmax.f32 %v81, 0.0
  %v98 = vmax.f32 %v82, 0.0
  %v99 = vmax.f32 %v83, 0.0
  %v100 = vmax.f32 %v84, 0.0
  %v101 = vmax.f32 %v85, 0.0
  %v102 = vmax.f32 %v86, 0.0
  %v103 = vmax.f32 %v87, 0.0
  %v104 = vmax.f32 %v88, 0.0
  %v105 = vmax.f32 %v89, 0.0
  %v106 = vmax.f32 %v90, 0.0
  %v107 = vmax.f32 %v91, 0.0
  %v108 = vpack.c.bf16 %v93, %v92
  %v109 = vpack.c.bf16 %v95, %v94
  %v110 = vpack.c.bf16 %v97, %v96
  %v111 = vpack.c.bf16 %v99, %v98
  %v112 = vpack.c.bf16 %v101, %v100
  %v113 = vpack.c.bf16 %v103, %v102
  %v114 = vpack.c.bf16 %v105, %v104
  %v115 = vpack.c.bf16 %v107, %v106
  %v124 = vunpack.c.l.b16 %v108
  %v125 = vunpack.c.h.b16 %v108
  %v126 = vunpack.c.l.b16 %v109
  %v127 = vunpack.c.h.b16 %v109
  %v128 = vunpack.c.l.b16 %v110
  %v129 = vunpack.c.h.b16 %v110
  %v130 = vunpack.c.l.b16 %v111
  %v131 = vunpack.c.h.b16 %v111
  %v132 = vunpack.c.l.b16 %v112
  %v133 = vunpack.c.h.b16 %v112
  %v134 = vunpack.c.l.b16 %v113
  %v135 = vunpack.c.h.b16 %v113
  %v136 = vunpack.c.l.b16 %v114
  %v137 = vunpack.c.h.b16 %v114
  %v138 = vunpack.c.l.b16 %v115
  %v139 = vunpack.c.h.b16 %v115
  %v140 = vpack.c.b16 %v124, %v124
  %v141 = vpack.c.b16 %v125, %v125
  %v142 = vpack.c.b16 %v126, %v126
  %v143 = vpack.c.b16 %v127, %v127
  %v144 = vpack.c.b16 %v128, %v128
  %v145 = vpack.c.b16 %v129, %v129
  %v146 = vpack.c.b16 %v130, %v130
  %v147 = vpack.c.b16 %v131, %v131
  %v148 = vpack.c.b16 %v132, %v132
  %v149 = vpack.c.b16 %v133, %v133
  %v150 = vpack.c.b16 %v134, %v134
  %v151 = vpack.c.b16 %v135, %v135
  %v152 = vpack.c.b16 %v136, %v136
  %v153 = vpack.c.b16 %v137, %v137
  %v154 = vpack.c.b16 %v138, %v138
  %v155 = vpack.c.b16 %v139, %v139
  %vm172 = vcmask 60416
  %173 = vst.msk [vmem:[%s3] sm:$0xf] %vm172, %v140
  %174 = vst.msk [vmem:[%s3 + $0x4] sm:$0xf] %vm172, %v141
  %175 = vst.msk [vmem:[%s3 + $0x8] sm:$0xf] %vm172, %v142
  %176 = vst.msk [vmem:[%s3 + $0xc] sm:$0xf] %vm172, %v143
  %177 = vst.msk [vmem:[%s3 + $0x10] sm:$0xf] %vm172, %v144
  %178 = vst.msk [vmem:[%s3 + $0x14] sm:$0xf] %vm172, %v145
  %179 = vst.msk [vmem:[%s3 + $0x18] sm:$0xf] %vm172, %v146
  %180 = vst.msk [vmem:[%s3 + $0x1c] sm:$0xf] %vm172, %v147
  %181 = vst.msk [vmem:[%s3 + $0x20] sm:$0xf] %vm172, %v148
  %182 = vst.msk [vmem:[%s3 + $0x24] sm:$0xf] %vm172, %v149
  %183 = vst.msk [vmem:[%s3 + $0x28] sm:$0xf] %vm172, %v150
  %184 = vst.msk [vmem:[%s3 + $0x2c] sm:$0xf] %vm172, %v151
  %185 = vst.msk [vmem:[%s3 + $0x30] sm:$0xf] %vm172, %v152
  %186 = vst.msk [vmem:[%s3 + $0x34] sm:$0xf] %vm172, %v153
  %187 = vst.msk [vmem:[%s3 + $0x38] sm:$0xf] %vm172, %v154
  %188 = vst.msk [vmem:[%s3 + $0x3c] sm:$0xf] %vm172, %v155
  // Predicated region
  $region14: #{_lambda_.9} parent=0 // pred_check
    _
  $region15: #{_lambda_.9} parent=0 // pred_check_branch
    %190 = sbr.rel (0) target = $region17
  $region16: #{_lambda_.9} parent=0 // pred_region
    _
  $region17: #{_lambda_.9} parent=0 // pred_fallthru
    _
  // Predicated region
  $region18: #{_lambda_.9} parent=0 // pred_check
    _
  $region19: #{_lambda_.9} parent=0 // pred_check_branch
    %192 = sbr.rel (0) target = $region21
  $region20: #{_lambda_.9} parent=0 // pred_region
    _
  $region21: #{_lambda_.9} parent=0 // pred_fallthru
    _

// kernel: _lambda_.8
$region0: #{_lambda_.8}
  #allocation0 [shape = 'u32[]', space=smem, size = 0x4, offset = 0x4, fixed_abs, tag = 'smem constant byte address 0x4 - core index']
  #allocation1 [shape = 'u32[144,128]{1,0:T(1,128)}', space=vmem, size = 0x12000, scoped, tag = 'internal scratch']
  %s0 = inlined_call_operand.vmem [shape: bf16[128,36], index: 0, kind: input, shape index: {}]
  %s1 = inlined_call_operand.vmem [shape: bf16[36,8], index: 1, kind: input, shape index: {}]
  %s2 = inlined_call_operand.vmem [shape: bf16[128,8], index: 2, kind: output, shape index: {0}]
  %s3 = inlined_call_operand.vmem [shape: f32[1,1,8], index: 3, kind: output, shape index: {1}]
  %s4 = inlined_call_operand.vmem [shape: f32[1,1,8], index: 4, kind: output, shape index: {2}]
  %5 = xla_tuple %s2, %s3, %s4
  %s6 = sld [smem:[#allocation0]]
  $region34: #{_lambda_.8} parent=0
    _
  %s8 = ssub.s32 1, %s6
  %s9 = scalar_select 0, %s8, %s6
  // Predicated region
  $region2: #{_lambda_.8} parent=0 // pred_check
    _
  $region3: #{_lambda_.8} parent=0 // pred_check_branch
    %11 = sbr.rel (0) target = $region5
  $region4: #{_lambda_.8} parent=0 // pred_region
    _
  $region5: #{_lambda_.8} parent=0 // pred_fallthru
    _
  // Predicated region
  $region6: #{_lambda_.8} parent=0 // pred_check
    _
  $region7: #{_lambda_.8} parent=0 // pred_check_branch
    %13 = sbr.rel (0) target = $region9
  $region8: #{_lambda_.8} parent=0 // pred_region
    _
  $region9: #{_lambda_.8} parent=0 // pred_fallthru
    _
  %v15 = vld [vmem:[%s0] sm:$0xf]
  %v16 = vld [vmem:[%s0 + $0x4] sm:$0xf]
  %v17 = vld [vmem:[%s0 + $0x8] sm:$0xf]
  %v18 = vld [vmem:[%s0 + $0xc] sm:$0xf]
  %v19 = vld [vmem:[%s0 + $0x10] sm:$0xf]
  %v20 = vld [vmem:[%s0 + $0x14] sm:$0xf]
  %v21 = vld [vmem:[%s0 + $0x18] sm:$0xf]
  %v22 = vld [vmem:[%s0 + $0x1c] sm:$0xf]
  %v23 = vld [vmem:[%s0 + $0x20] sm:$0xf]
  %v24 = vld [vmem:[%s0 + $0x24] sm:$0xf]
  %v25 = vld [vmem:[%s0 + $0x28] sm:$0xf]
  %v26 = vld [vmem:[%s0 + $0x2c] sm:$0xf]
  %v27 = vld [vmem:[%s0 + $0x30] sm:$0xf]
  %v28 = vld [vmem:[%s0 + $0x34] sm:$0xf]
  %v29 = vld [vmem:[%s0 + $0x38] sm:$0xf]
  %v30 = vld [vmem:[%s0 + $0x3c] sm:$0xf]
  %v31 = vld [vmem:[%s1] sm:$0xf]
  %v32 = vld [vmem:[%s1 + $0x4] sm:$0xf]
  %v33 = vld [vmem:[%s1 + $0x8] sm:$0xf]
  %v34 = vld [vmem:[%s1 + $0xc] sm:$0xf]
  %v35 = vld [vmem:[%s1 + $0x10] sm:$0x3]
  %v52 = vunpack.c.l.b16 %v15
  %v53 = vunpack.c.l.b16 %v16
  %v54 = vunpack.c.l.b16 %v17
  %v55 = vunpack.c.l.b16 %v18
  %v56 = vunpack.c.l.b16 %v19
  %v57 = vunpack.c.l.b16 %v20
  %v58 = vunpack.c.l.b16 %v21
  %v59 = vunpack.c.l.b16 %v22
  %v60 = vunpack.c.l.b16 %v23
  %v61 = vunpack.c.l.b16 %v24
  %v62 = vunpack.c.l.b16 %v25
  %v63 = vunpack.c.l.b16 %v26
  %v64 = vunpack.c.l.b16 %v27
  %v65 = vunpack.c.l.b16 %v28
  %v66 = vunpack.c.l.b16 %v29
  %v67 = vunpack.c.l.b16 %v30
  %v68 = vpack.c.b16 %v53, %v52
  %v69 = vpack.c.b16 %v55, %v54
  %v70 = vpack.c.b16 %v57, %v56
  %v71 = vpack.c.b16 %v59, %v58
  %v72 = vpack.c.b16 %v61, %v60
  %v73 = vpack.c.b16 %v63, %v62
  %v74 = vpack.c.b16 %v65, %v64
  %v75 = vpack.c.b16 %v67, %v66
  %v81 = vunpack.c.l.b16 %v31
  %v82 = vunpack.c.l.b16 %v32
  %v83 = vunpack.c.l.b16 %v33
  %v84 = vunpack.c.l.b16 %v34
  %v85 = vunpack.c.l.b16 %v35
  %v86 = vpack.c.b16 %v82, %v81
  %v87 = vpack.c.b16 %v84, %v83
  %v88 = vpack.c.b16 %v85, %v85
  %vm91 = vcmask 293888
  %v93 = vsel %vm91, %v68, 0
  %v96 = vsel %vm91, %v69, 0
  %v99 = vsel %vm91, %v70, 0
  %v102 = vsel %vm91, %v71, 0
  %v105 = vsel %vm91, %v72, 0
  %v108 = vsel %vm91, %v73, 0
  %v111 = vsel %vm91, %v74, 0
  %v114 = vsel %vm91, %v75, 0
  %vm116 = vcmask 1041408
  %v118 = vsel %vm116, %v88, 0
  %120 = vmatprep.subr.bf16.mxu0 0
  %121 = vmatpush1.bf16.msra.mxu0 0
  %122 = vmatprep.subr.bf16.mxu0 0
  %123 = vmatpush1.bf16.msra.mxu0 0
  %124 = vmatprep.subr.bf16.mxu0 0
  %125 = vmatpush1.bf16.msra.mxu0 0
  %126 = vmatprep.subr.bf16.mxu0 0
  %127 = vmatpush1.bf16.msra.mxu0 0
  %128 = vmatprep.subr.bf16.mxu0 0
  %129 = vmatpush1.bf16.msra.mxu0 0
  %130 = vmatprep.subr.bf16.mxu0 0
  %131 = vmatpush1.bf16.msra.mxu0 %v118
  %132 = vmatprep.subr.bf16.mxu0 0
  %133 = vmatpush1.bf16.msra.mxu0 %v87
  %134 = vmatprep.subr.bf16.mxu0 0
  %135 = vmatpush1.bf16.msra.mxu0 %v86
  %136 = vmatprep.subr.bf16.mxu0 0
  %137 = vmatpush2.bf16.msra.mxu0 0
  %138 = vmatprep.subr.bf16.mxu0 0
  %139 = vmatpush2.bf16.msra.mxu0 0
  %140 = vmatprep.subr.bf16.mxu0 0
  %141 = vmatpush2.bf16.msra.mxu0 0
  %142 = vmatprep.subr.bf16.mxu0 0
  %143 = vmatpush2.bf16.msra.mxu0 0
  %144 = vmatprep.subr.bf16.mxu0 0
  %145 = vmatpush2.bf16.msra.mxu0 0
  %146 = vmatprep.subr.bf16.mxu0 0
  %147 = vmatpush2.bf16.msra.mxu0 0
  %148 = vmatprep.subr.bf16.mxu0 0
  %149 = vmatpush2.bf16.msra.mxu0 0
  %150 = vmatprep.subr.bf16.mxu0 0
  %151 = vmatpush2.bf16.msra.mxu0 0
  %152 = vmatprep.mubr.bf16.mxu0 0
  %153 = vmatmul.mubr.bf16.gmra.mxu0 %v93
  %v154 = vpop.f32.mrf.mxu0
  %v155 = vadd.f32 0.0, %v154
  %v156 = vpop.f32.mrf.mxu0
  %v157 = vpop.f32.mrf.mxu0
  %v158 = vadd.f32 0.0, %v157
  %v159 = vpop.f32.mrf.mxu0
  %160 = vmatprep.mubr.bf16.mxu0 0
  %161 = vmatmul.mubr.bf16.gmra.mxu0 %v96
  %v162 = vpop.f32.mrf.mxu0
  %v163 = vadd.f32 0.0, %v162
  %v164 = vpop.f32.mrf.mxu0
  %v165 = vpop.f32.mrf.mxu0
  %v166 = vadd.f32 0.0, %v165
  %v167 = vpop.f32.mrf.mxu0
  %168 = vmatprep.mubr.bf16.mxu0 0
  %169 = vmatmul.mubr.bf16.gmra.mxu0 %v99
  %v170 = vpop.f32.mrf.mxu0
  %v171 = vadd.f32 0.0, %v170
  %v172 = vpop.f32.mrf.mxu0
  %v173 = vpop.f32.mrf.mxu0
  %v174 = vadd.f32 0.0, %v173
  %v175 = vpop.f32.mrf.mxu0
  %176 = vmatprep.mubr.bf16.mxu0 0
  %177 = vmatmul.mubr.bf16.gmra.mxu0 %v102
  %v178 = vpop.f32.mrf.mxu0
  %v179 = vadd.f32 0.0, %v178
  %v180 = vpop.f32.mrf.mxu0
  %v181 = vpop.f32.mrf.mxu0
  %v182 = vadd.f32 0.0, %v181
  %v183 = vpop.f32.mrf.mxu0
  %184 = vmatprep.mubr.bf16.mxu0 0
  %185 = vmatmul.mubr.bf16.gmra.mxu0 %v105
  %v186 = vpop.f32.mrf.mxu0
  %v187 = vadd.f32 0.0, %v186
  %v188 = vpop.f32.mrf.mxu0
  %v189 = vpop.f32.mrf.mxu0
  %v190 = vadd.f32 0.0, %v189
  %v191 = vpop.f32.mrf.mxu0
  %192 = vmatprep.mubr.bf16.mxu0 0
  %193 = vmatmul.mubr.bf16.gmra.mxu0 %v108
  %v194 = vpop.f32.mrf.mxu0
  %v195 = vadd.f32 0.0, %v194
  %v196 = vpop.f32.mrf.mxu0
  %v197 = vpop.f32.mrf.mxu0
  %v198 = vadd.f32 0.0, %v197
  %v199 = vpop.f32.mrf.mxu0
  %200 = vmatprep.mubr.bf16.mxu0 0
  %201 = vmatmul.mubr.bf16.gmra.mxu0 %v111
  %v202 = vpop.f32.mrf.mxu0
  %v203 = vadd.f32 0.0, %v202
  %v204 = vpop.f32.mrf.mxu0
  %v205 = vpop.f32.mrf.mxu0
  %v206 = vadd.f32 0.0, %v205
  %v207 = vpop.f32.mrf.mxu0
  %208 = vmatprep.mubr.bf16.mxu0 0
  %209 = vmatmul.mubr.bf16.gmra.mxu0 %v114
  %v210 = vpop.f32.mrf.mxu0
  %v211 = vadd.f32 0.0, %v210
  %v212 = vpop.f32.mrf.mxu0
  %v213 = vpop.f32.mrf.mxu0
  %v214 = vadd.f32 0.0, %v213
  %v215 = vpop.f32.mrf.mxu0
  %216 = vdwg.mxu0
  %v217 = vpack.c.bf16 %v158, %v155
  %v218 = vpack.c.bf16 %v166, %v163
  %v219 = vpack.c.bf16 %v174, %v171
  %v220 = vpack.c.bf16 %v182, %v179
  %v221 = vpack.c.bf16 %v190, %v187
  %v222 = vpack.c.bf16 %v198, %v195
  %v223 = vpack.c.bf16 %v206, %v203
  %v224 = vpack.c.bf16 %v214, %v211
  %v233 = vunpack.c.l.b16 %v217
  %v234 = vunpack.c.h.b16 %v217
  %v235 = vunpack.c.l.b16 %v218
  %v236 = vunpack.c.h.b16 %v218
  %v237 = vunpack.c.l.b16 %v219
  %v238 = vunpack.c.h.b16 %v219
  %v239 = vunpack.c.l.b16 %v220
  %v240 = vunpack.c.h.b16 %v220
  %v241 = vunpack.c.l.b16 %v221
  %v242 = vunpack.c.h.b16 %v221
  %v243 = vunpack.c.l.b16 %v222
  %v244 = vunpack.c.h.b16 %v222
  %v245 = vunpack.c.l.b16 %v223
  %v246 = vunpack.c.h.b16 %v223
  %v247 = vunpack.c.l.b16 %v224
  %v248 = vunpack.c.h.b16 %v224
  %v249 = vpack.c.b16 %v233, %v233
  %v250 = vpack.c.b16 %v234, %v234
  %v251 = vpack.c.b16 %v235, %v235
  %v252 = vpack.c.b16 %v236, %v236
  %v253 = vpack.c.b16 %v237, %v237
  %v254 = vpack.c.b16 %v238, %v238
  %v255 = vpack.c.b16 %v239, %v239
  %v256 = vpack.c.b16 %v240, %v240
  %v257 = vpack.c.b16 %v241, %v241
  %v258 = vpack.c.b16 %v242, %v242
  %v259 = vpack.c.b16 %v243, %v243
  %v260 = vpack.c.b16 %v244, %v244
  %v261 = vpack.c.b16 %v245, %v245
  %v262 = vpack.c.b16 %v246, %v246
  %v263 = vpack.c.b16 %v247, %v247
  %v264 = vpack.c.b16 %v248, %v248
  %vm281 = vcmask 60416
  %282 = vst.msk [vmem:[%s2] sm:$0xf] %vm281, %v249
  %283 = vst.msk [vmem:[%s2 + $0x4] sm:$0xf] %vm281, %v250
  %284 = vst.msk [vmem:[%s2 + $0x8] sm:$0xf] %vm281, %v251
  %285 = vst.msk [vmem:[%s2 + $0xc] sm:$0xf] %vm281, %v252
  %286 = vst.msk [vmem:[%s2 + $0x10] sm:$0xf] %vm281, %v253
  %287 = vst.msk [vmem:[%s2 + $0x14] sm:$0xf] %vm281, %v254
  %288 = vst.msk [vmem:[%s2 + $0x18] sm:$0xf] %vm281, %v255
  %289 = vst.msk [vmem:[%s2 + $0x1c] sm:$0xf] %vm281, %v256
  %290 = vst.msk [vmem:[%s2 + $0x20] sm:$0xf] %vm281, %v257
  %291 = vst.msk [vmem:[%s2 + $0x24] sm:$0xf] %vm281, %v258
  %292 = vst.msk [vmem:[%s2 + $0x28] sm:$0xf] %vm281, %v259
  %293 = vst.msk [vmem:[%s2 + $0x2c] sm:$0xf] %vm281, %v260
  %294 = vst.msk [vmem:[%s2 + $0x30] sm:$0xf] %vm281, %v261
  %295 = vst.msk [vmem:[%s2 + $0x34] sm:$0xf] %vm281, %v262
  %296 = vst.msk [vmem:[%s2 + $0x38] sm:$0xf] %vm281, %v263
  %297 = vst.msk [vmem:[%s2 + $0x3c] sm:$0xf] %vm281, %v264
  %vm298 = vcmask 64512
  %v299 = vsel %vm298, %v155, 0.0
  %v300 = vsel %vm298, %v158, 0.0
  %v301 = vadd.f32 %v299, %v300
  %v302 = vsel %vm298, %v163, 0.0
  %v303 = vadd.f32 %v301, %v302
  %v304 = vsel %vm298, %v166, 0.0
  %v305 = vadd.f32 %v303, %v304
  %v306 = vsel %vm298, %v171, 0.0
  %v307 = vadd.f32 %v305, %v306
  %v308 = vsel %vm298, %v174, 0.0
  %v309 = vadd.f32 %v307, %v308
  %v310 = vsel %vm298, %v179, 0.0
  %v311 = vadd.f32 %v309, %v310
  %v312 = vsel %vm298, %v182, 0.0
  %v313 = vadd.f32 %v311, %v312
  %v314 = vsel %vm298, %v187, 0.0
  %v315 = vadd.f32 %v313, %v314
  %v316 = vsel %vm298, %v190, 0.0
  %v317 = vadd.f32 %v315, %v316
  %v318 = vsel %vm298, %v195, 0.0
  %v319 = vadd.f32 %v317, %v318
  %v320 = vsel %vm298, %v198, 0.0
  %v321 = vadd.f32 %v319, %v320
  %v322 = vsel %vm298, %v203, 0.0
  %v323 = vadd.f32 %v321, %v322
  %v324 = vsel %vm298, %v206, 0.0
  %v325 = vadd.f32 %v323, %v324
  %v326 = vsel %vm298, %v211, 0.0
  %v327 = vadd.f32 %v325, %v326
  %v328 = vsel %vm298, %v214, 0.0
  %v329 = vadd.f32 %v327, %v328
  %v330 = vrot.slane %v329, 4
  %v331 = vadd.f32 %v329, %v330
  %v332 = vrot.slane %v331, 2
  %v333 = vadd.f32 %v331, %v332
  %v334 = vrot.slane %v333, 1
  %v335 = vadd.f32 %v333, %v334
  %vm336 = vcmask 57344
  %337 = vst.msk [vmem:[%s3] sm:$0x1] %vm336, %v335
  %v338 = vmul.f32 %v155, %v155
  %v339 = vmul.f32 %v158, %v158
  %v340 = vmul.f32 %v163, %v163
  %v341 = vmul.f32 %v166, %v166
  %v342 = vmul.f32 %v171, %v171
  %v343 = vmul.f32 %v174, %v174
  %v344 = vmul.f32 %v179, %v179
  %v345 = vmul.f32 %v182, %v182
  %v346 = vmul.f32 %v187, %v187
  %v347 = vmul.f32 %v190, %v190
  %v348 = vmul.f32 %v195, %v195
  %v349 = vmul.f32 %v198, %v198
  %v350 = vmul.f32 %v203, %v203
  %v351 = vmul.f32 %v206, %v206
  %v352 = vmul.f32 %v211, %v211
  %v353 = vmul.f32 %v214, %v214
  %v354 = vsel %vm298, %v338, 0.0
  %v355 = vsel %vm298, %v339, 0.0
  %v356 = vadd.f32 %v354, %v355
  %v357 = vsel %vm298, %v340, 0.0
  %v358 = vadd.f32 %v356, %v357
  %v359 = vsel %vm298, %v341, 0.0
  %v360 = vadd.f32 %v358, %v359
  %v361 = vsel %vm298, %v342, 0.0
  %v362 = vadd.f32 %v360, %v361
  %v363 = vsel %vm298, %v343, 0.0
  %v364 = vadd.f32 %v362, %v363
  %v365 = vsel %vm298, %v344, 0.0
  %v366 = vadd.f32 %v364, %v365
  %v367 = vsel %vm298, %v345, 0.0
  %v368 = vadd.f32 %v366, %v367
  %v369 = vsel %vm298, %v346, 0.0
  %v370 = vadd.f32 %v368, %v369
  %v371 = vsel %vm298, %v347, 0.0
  %v372 = vadd.f32 %v370, %v371
  %v373 = vsel %vm298, %v348, 0.0
  %v374 = vadd.f32 %v372, %v373
  %v375 = vsel %vm298, %v349, 0.0
  %v376 = vadd.f32 %v374, %v375
  %v377 = vsel %vm298, %v350, 0.0
  %v378 = vadd.f32 %v376, %v377
  %v379 = vsel %vm298, %v351, 0.0
  %v380 = vadd.f32 %v378, %v379
  %v381 = vsel %vm298, %v352, 0.0
  %v382 = vadd.f32 %v380, %v381
  %v383 = vsel %vm298, %v353, 0.0
  %v384 = vadd.f32 %v382, %v383
  %v385 = vrot.slane %v384, 4
  %v386 = vadd.f32 %v384, %v385
  %v387 = vrot.slane %v386, 2
  %v388 = vadd.f32 %v386, %v387
  %v389 = vrot.slane %v388, 1
  %v390 = vadd.f32 %v388, %v389
  %391 = vst.msk [vmem:[%s4] sm:$0x1] %vm336, %v390
  // Predicated region
  $region10: #{_lambda_.8} parent=0 // pred_check
    _
  $region11: #{_lambda_.8} parent=0 // pred_check_branch
    %393 = sbr.rel (0) target = $region13
  $region12: #{_lambda_.8} parent=0 // pred_region
    _
  $region13: #{_lambda_.8} parent=0 // pred_fallthru
    _
  // Predicated region
  $region14: #{_lambda_.8} parent=0 // pred_check
    _
  $region15: #{_lambda_.8} parent=0 // pred_check_branch
    %395 = sbr.rel (0) target = $region17
  $region16: #{_lambda_.8} parent=0 // pred_region
    _
  $region17: #{_lambda_.8} parent=0 // pred_fallthru
    _
  // Predicated region
  $region18: #{_lambda_.8} parent=0 // pred_check
    _
  $region19: #{_lambda_.8} parent=0 // pred_check_branch
    %397 = sbr.rel (0) target = $region21
  $region20: #{_lambda_.8} parent=0 // pred_region
    _
  $region21: #{_lambda_.8} parent=0 // pred_fallthru
    _
  // Predicated region
  $region22: #{_lambda_.8} parent=0 // pred_check
    _
  $region23: #{_lambda_.8} parent=0 // pred_check_branch
    %399 = sbr.rel (0) target = $region25
  $region24: #{_lambda_.8} parent=0 // pred_region
    _
  $region25: #{_lambda_.8} parent=0 // pred_fallthru
    _
  // Predicated region
  $region26: #{_lambda_.8} parent=0 // pred_check
    _
  $region27: #{_lambda_.8} parent=0 // pred_check_branch
    %401 = sbr.rel (0) target = $region29
  $region28: #{_lambda_.8} parent=0 // pred_region
    _
  $region29: #{_lambda_.8} parent=0 // pred_fallthru
    _
  // Predicated region
  $region30: #{_lambda_.8} parent=0 // pred_check
    _
  $region31: #{_lambda_.8} parent=0 // pred_check_branch
    %403 = sbr.rel (0) target = $region33
  $region32: #{_lambda_.8} parent=0 // pred_region
    _
  $region33: #{_lambda_.8} parent=0 // pred_fallthru
    _

// kernel: _lambda_.11
$region0: #{_lambda_.11}
  #allocation0 [shape = 'u32[]', space=smem, size = 0x4, offset = 0x4, fixed_abs, tag = 'smem constant byte address 0x4 - core index']
  #allocation1 [shape = 'u32[144,128]{1,0:T(1,128)}', space=vmem, size = 0x12000, scoped, tag = 'internal scratch']
  %s0 = inlined_call_operand.vmem [shape: bf16[128,8], index: 0, kind: input, shape index: {}]
  %s1 = inlined_call_operand.vmem [shape: f32[1,8], index: 1, kind: input, shape index: {}]
  %s2 = inlined_call_operand.vmem [shape: f32[1,8], index: 2, kind: input, shape index: {}]
  %s3 = inlined_call_operand.vmem [shape: bf16[128,4], index: 3, kind: input, shape index: {}]
  %s4 = inlined_call_operand.vmem [shape: bf16[4,8], index: 4, kind: input, shape index: {}]
  %s5 = inlined_call_operand.vmem [shape: f32[1,8], index: 5, kind: input, shape index: {}]
  %s6 = inlined_call_operand.vmem [shape: f32[1,8], index: 6, kind: input, shape index: {}]
  %s7 = inlined_call_operand.vmem [shape: bf16[128,8], index: 7, kind: output, shape index: {}]
  %s8 = sld [smem:[#allocation0]]
  $region38: #{_lambda_.11} parent=0
    _
  %s10 = ssub.s32 1, %s8
  %s11 = scalar_select 0, %s10, %s8
  // Predicated region
  $region2: #{_lambda_.11} parent=0 // pred_check
    _
  $region3: #{_lambda_.11} parent=0 // pred_check_branch
    %13 = sbr.rel (0) target = $region5
  $region4: #{_lambda_.11} parent=0 // pred_region
    _
  $region5: #{_lambda_.11} parent=0 // pred_fallthru
    _
  // Predicated region
  $region6: #{_lambda_.11} parent=0 // pred_check
    _
  $region7: #{_lambda_.11} parent=0 // pred_check_branch
    %15 = sbr.rel (0) target = $region9
  $region8: #{_lambda_.11} parent=0 // pred_region
    _
  $region9: #{_lambda_.11} parent=0 // pred_fallthru
    _
  // Predicated region
  $region10: #{_lambda_.11} parent=0 // pred_check
    _
  $region11: #{_lambda_.11} parent=0 // pred_check_branch
    %17 = sbr.rel (0) target = $region13
  $region12: #{_lambda_.11} parent=0 // pred_region
    _
  $region13: #{_lambda_.11} parent=0 // pred_fallthru
    _
  // Predicated region
  $region14: #{_lambda_.11} parent=0 // pred_check
    _
  $region15: #{_lambda_.11} parent=0 // pred_check_branch
    %19 = sbr.rel (0) target = $region17
  $region16: #{_lambda_.11} parent=0 // pred_region
    _
  $region17: #{_lambda_.11} parent=0 // pred_fallthru
    _
  // Predicated region
  $region18: #{_lambda_.11} parent=0 // pred_check
    _
  $region19: #{_lambda_.11} parent=0 // pred_check_branch
    %21 = sbr.rel (0) target = $region21
  $region20: #{_lambda_.11} parent=0 // pred_region
    _
  $region21: #{_lambda_.11} parent=0 // pred_fallthru
    _
  // Predicated region
  $region22: #{_lambda_.11} parent=0 // pred_check
    _
  $region23: #{_lambda_.11} parent=0 // pred_check_branch
    %23 = sbr.rel (0) target = $region25
  $region24: #{_lambda_.11} parent=0 // pred_region
    _
  $region25: #{_lambda_.11} parent=0 // pred_fallthru
    _
  // Predicated region
  $region26: #{_lambda_.11} parent=0 // pred_check
    _
  $region27: #{_lambda_.11} parent=0 // pred_check_branch
    %25 = sbr.rel (0) target = $region29
  $region28: #{_lambda_.11} parent=0 // pred_region
    _
  $region29: #{_lambda_.11} parent=0 // pred_fallthru
    _
  %v27 = vld [vmem:[%s3] sm:$0xf]
  %v28 = vld [vmem:[%s3 + $0x4] sm:$0xf]
  %v29 = vld [vmem:[%s3 + $0x8] sm:$0xf]
  %v30 = vld [vmem:[%s3 + $0xc] sm:$0xf]
  %v31 = vld [vmem:[%s3 + $0x10] sm:$0xf]
  %v32 = vld [vmem:[%s3 + $0x14] sm:$0xf]
  %v33 = vld [vmem:[%s3 + $0x18] sm:$0xf]
  %v34 = vld [vmem:[%s3 + $0x1c] sm:$0xf]
  %v35 = vld [vmem:[%s3 + $0x20] sm:$0xf]
  %v36 = vld [vmem:[%s3 + $0x24] sm:$0xf]
  %v37 = vld [vmem:[%s3 + $0x28] sm:$0xf]
  %v38 = vld [vmem:[%s3 + $0x2c] sm:$0xf]
  %v39 = vld [vmem:[%s3 + $0x30] sm:$0xf]
  %v40 = vld [vmem:[%s3 + $0x34] sm:$0xf]
  %v41 = vld [vmem:[%s3 + $0x38] sm:$0xf]
  %v42 = vld [vmem:[%s3 + $0x3c] sm:$0xf]
  %v43 = vld [vmem:[%s4] sm:$0x3]
  %v60 = vunpack.c.l.b16 %v27
  %v61 = vunpack.c.l.b16 %v28
  %v62 = vunpack.c.l.b16 %v29
  %v63 = vunpack.c.l.b16 %v30
  %v64 = vunpack.c.l.b16 %v31
  %v65 = vunpack.c.l.b16 %v32
  %v66 = vunpack.c.l.b16 %v33
  %v67 = vunpack.c.l.b16 %v34
  %v68 = vunpack.c.l.b16 %v35
  %v69 = vunpack.c.l.b16 %v36
  %v70 = vunpack.c.l.b16 %v37
  %v71 = vunpack.c.l.b16 %v38
  %v72 = vunpack.c.l.b16 %v39
  %v73 = vunpack.c.l.b16 %v40
  %v74 = vunpack.c.l.b16 %v41
  %v75 = vunpack.c.l.b16 %v42
  %v76 = vpack.c.b16 %v61, %v60
  %v77 = vpack.c.b16 %v63, %v62
  %v78 = vpack.c.b16 %v65, %v64
  %v79 = vpack.c.b16 %v67, %v66
  %v80 = vpack.c.b16 %v69, %v68
  %v81 = vpack.c.b16 %v71, %v70
  %v82 = vpack.c.b16 %v73, %v72
  %v83 = vpack.c.b16 %v75, %v74
  %vm84 = vcmask 31744
  %v86 = vsel %vm84, %v76, 0
  %v89 = vsel %vm84, %v77, 0
  %v92 = vsel %vm84, %v78, 0
  %v95 = vsel %vm84, %v79, 0
  %v98 = vsel %vm84, %v80, 0
  %v101 = vsel %vm84, %v81, 0
  %v104 = vsel %vm84, %v82, 0
  %v107 = vsel %vm84, %v83, 0
  %vm109 = vcmask 1041408
  %v111 = vsel %vm109, %v43, 0
  %113 = vmatprep.subr.bf16.mxu0 0
  %114 = vmatpush1.bf16.msra.mxu0 0
  %115 = vmatprep.subr.bf16.mxu0 0
  %116 = vmatpush1.bf16.msra.mxu0 0
  %117 = vmatprep.subr.bf16.mxu0 0
  %118 = vmatpush1.bf16.msra.mxu0 0
  %119 = vmatprep.subr.bf16.mxu0 0
  %120 = vmatpush1.bf16.msra.mxu0 0
  %121 = vmatprep.subr.bf16.mxu0 0
  %122 = vmatpush1.bf16.msra.mxu0 0
  %123 = vmatprep.subr.bf16.mxu0 0
  %124 = vmatpush1.bf16.msra.mxu0 0
  %125 = vmatprep.subr.bf16.mxu0 0
  %126 = vmatpush1.bf16.msra.mxu0 0
  %127 = vmatprep.subr.bf16.mxu0 0
  %128 = vmatpush1.bf16.msra.mxu0 %v111
  %129 = vmatprep.subr.bf16.mxu0 0
  %130 = vmatpush2.bf16.msra.mxu0 0
  %131 = vmatprep.subr.bf16.mxu0 0
  %132 = vmatpush2.bf16.msra.mxu0 0
  %133 = vmatprep.subr.bf16.mxu0 0
  %134 = vmatpush2.bf16.msra.mxu0 0
  %135 = vmatprep.subr.bf16.mxu0 0
  %136 = vmatpush2.bf16.msra.mxu0 0
  %137 = vmatprep.subr.bf16.mxu0 0
  %138 = vmatpush2.bf16.msra.mxu0 0
  %139 = vmatprep.subr.bf16.mxu0 0
  %140 = vmatpush2.bf16.msra.mxu0 0
  %141 = vmatprep.subr.bf16.mxu0 0
  %142 = vmatpush2.bf16.msra.mxu0 0
  %143 = vmatprep.subr.bf16.mxu0 0
  %144 = vmatpush2.bf16.msra.mxu0 0
  %145 = vmatprep.mubr.bf16.mxu0 0
  %146 = vmatmul.mubr.bf16.gmra.mxu0 %v86
  %v147 = vpop.f32.mrf.mxu0
  %v148 = vadd.f32 0.0, %v147
  %v149 = vpop.f32.mrf.mxu0
  %v150 = vpop.f32.mrf.mxu0
  %v151 = vadd.f32 0.0, %v150
  %v152 = vpop.f32.mrf.mxu0
  %153 = vmatprep.mubr.bf16.mxu0 0
  %154 = vmatmul.mubr.bf16.gmra.mxu0 %v89
  %v155 = vpop.f32.mrf.mxu0
  %v156 = vadd.f32 0.0, %v155
  %v157 = vpop.f32.mrf.mxu0
  %v158 = vpop.f32.mrf.mxu0
  %v159 = vadd.f32 0.0, %v158
  %v160 = vpop.f32.mrf.mxu0
  %161 = vmatprep.mubr.bf16.mxu0 0
  %162 = vmatmul.mubr.bf16.gmra.mxu0 %v92
  %v163 = vpop.f32.mrf.mxu0
  %v164 = vadd.f32 0.0, %v163
  %v165 = vpop.f32.mrf.mxu0
  %v166 = vpop.f32.mrf.mxu0
  %v167 = vadd.f32 0.0, %v166
  %v168 = vpop.f32.mrf.mxu0
  %169 = vmatprep.mubr.bf16.mxu0 0
  %170 = vmatmul.mubr.bf16.gmra.mxu0 %v95
  %v171 = vpop.f32.mrf.mxu0
  %v172 = vadd.f32 0.0, %v171
  %v173 = vpop.f32.mrf.mxu0
  %v174 = vpop.f32.mrf.mxu0
  %v175 = vadd.f32 0.0, %v174
  %v176 = vpop.f32.mrf.mxu0
  %177 = vmatprep.mubr.bf16.mxu0 0
  %178 = vmatmul.mubr.bf16.gmra.mxu0 %v98
  %v179 = vpop.f32.mrf.mxu0
  %v180 = vadd.f32 0.0, %v179
  %v181 = vpop.f32.mrf.mxu0
  %v182 = vpop.f32.mrf.mxu0
  %v183 = vadd.f32 0.0, %v182
  %v184 = vpop.f32.mrf.mxu0
  %185 = vmatprep.mubr.bf16.mxu0 0
  %186 = vmatmul.mubr.bf16.gmra.mxu0 %v101
  %v187 = vpop.f32.mrf.mxu0
  %v188 = vadd.f32 0.0, %v187
  %v189 = vpop.f32.mrf.mxu0
  %v190 = vpop.f32.mrf.mxu0
  %v191 = vadd.f32 0.0, %v190
  %v192 = vpop.f32.mrf.mxu0
  %193 = vmatprep.mubr.bf16.mxu0 0
  %194 = vmatmul.mubr.bf16.gmra.mxu0 %v104
  %v195 = vpop.f32.mrf.mxu0
  %v196 = vadd.f32 0.0, %v195
  %v197 = vpop.f32.mrf.mxu0
  %v198 = vpop.f32.mrf.mxu0
  %v199 = vadd.f32 0.0, %v198
  %v200 = vpop.f32.mrf.mxu0
  %201 = vmatprep.mubr.bf16.mxu0 0
  %202 = vmatmul.mubr.bf16.gmra.mxu0 %v107
  %v203 = vpop.f32.mrf.mxu0
  %v204 = vadd.f32 0.0, %v203
  %v205 = vpop.f32.mrf.mxu0
  %v206 = vpop.f32.mrf.mxu0
  %v207 = vadd.f32 0.0, %v206
  %v208 = vpop.f32.mrf.mxu0
  %209 = vdwg.mxu0
  %v210 = vld [vmem:[%s0] sm:$0xf]
  %v211 = vld [vmem:[%s0 + $0x4] sm:$0xf]
  %v212 = vld [vmem:[%s0 + $0x8] sm:$0xf]
  %v213 = vld [vmem:[%s0 + $0xc] sm:$0xf]
  %v214 = vld [vmem:[%s0 + $0x10] sm:$0xf]
  %v215 = vld [vmem:[%s0 + $0x14] sm:$0xf]
  %v216 = vld [vmem:[%s0 + $0x18] sm:$0xf]
  %v217 = vld [vmem:[%s0 + $0x1c] sm:$0xf]
  %v218 = vld [vmem:[%s0 + $0x20] sm:$0xf]
  %v219 = vld [vmem:[%s0 + $0x24] sm:$0xf]
  %v220 = vld [vmem:[%s0 + $0x28] sm:$0xf]
  %v221 = vld [vmem:[%s0 + $0x2c] sm:$0xf]
  %v222 = vld [vmem:[%s0 + $0x30] sm:$0xf]
  %v223 = vld [vmem:[%s0 + $0x34] sm:$0xf]
  %v224 = vld [vmem:[%s0 + $0x38] sm:$0xf]
  %v225 = vld [vmem:[%s0 + $0x3c] sm:$0xf]
  %v226 = vunpack.c.l.bf16 %v210
  %v227 = vunpack.c.l.bf16 %v211
  %v228 = vunpack.c.l.bf16 %v212
  %v229 = vunpack.c.l.bf16 %v213
  %v230 = vunpack.c.l.bf16 %v214
  %v231 = vunpack.c.l.bf16 %v215
  %v232 = vunpack.c.l.bf16 %v216
  %v233 = vunpack.c.l.bf16 %v217
  %v234 = vunpack.c.l.bf16 %v218
  %v235 = vunpack.c.l.bf16 %v219
  %v236 = vunpack.c.l.bf16 %v220
  %v237 = vunpack.c.l.bf16 %v221
  %v238 = vunpack.c.l.bf16 %v222
  %v239 = vunpack.c.l.bf16 %v223
  %v240 = vunpack.c.l.bf16 %v224
  %v241 = vunpack.c.l.bf16 %v225
  %v242 = vld [vmem:[%s1] sm:$0x1]
  %v244 = vlaneseq
  %v245 = vshrl.u32 %v244, 7
  %v246 = vsub.s32 0, %v245
  %v247 = vrot.slane %v242, %v246
  %v249 = vmul.f32 %v226, %v247
  %v250 = vmul.f32 %v227, %v247
  %v251 = vmul.f32 %v228, %v247
  %v252 = vmul.f32 %v229, %v247
  %v253 = vmul.f32 %v230, %v247
  %v254 = vmul.f32 %v231, %v247
  %v255 = vmul.f32 %v232, %v247
  %v256 = vmul.f32 %v233, %v247
  %v257 = vmul.f32 %v234, %v247
  %v258 = vmul.f32 %v235, %v247
  %v259 = vmul.f32 %v236, %v247
  %v260 = vmul.f32 %v237, %v247
  %v261 = vmul.f32 %v238, %v247
  %v262 = vmul.f32 %v239, %v247
  %v263 = vmul.f32 %v240, %v247
  %v264 = vmul.f32 %v241, %v247
  %v265 = vld [vmem:[%s2] sm:$0x1]
  %v267 = vlaneseq
  %v268 = vshrl.u32 %v267, 7
  %v269 = vsub.s32 0, %v268
  %v270 = vrot.slane %v265, %v269
  %v272 = vadd.f32 %v249, %v270
  %v273 = vadd.f32 %v250, %v270
  %v274 = vadd.f32 %v251, %v270
  %v275 = vadd.f32 %v252, %v270
  %v276 = vadd.f32 %v253, %v270
  %v277 = vadd.f32 %v254, %v270
  %v278 = vadd.f32 %v255, %v270
  %v279 = vadd.f32 %v256, %v270
  %v280 = vadd.f32 %v257, %v270
  %v281 = vadd.f32 %v258, %v270
  %v282 = vadd.f32 %v259, %v270
  %v283 = vadd.f32 %v260, %v270
  %v284 = vadd.f32 %v261, %v270
  %v285 = vadd.f32 %v262, %v270
  %v286 = vadd.f32 %v263, %v270
  %v287 = vadd.f32 %v264, %v270
  %v288 = vld [vmem:[%s5] sm:$0x1]
  %v290 = vlaneseq
  %v291 = vshrl.u32 %v290, 7
  %v292 = vsub.s32 0, %v291
  %v293 = vrot.slane %v288, %v292
  %v295 = vmul.f32 %v148, %v293
  %v296 = vmul.f32 %v151, %v293
  %v297 = vmul.f32 %v156, %v293
  %v298 = vmul.f32 %v159, %v293
  %v299 = vmul.f32 %v164, %v293
  %v300 = vmul.f32 %v167, %v293
  %v301 = vmul.f32 %v172, %v293
  %v302 = vmul.f32 %v175, %v293
  %v303 = vmul.f32 %v180, %v293
  %v304 = vmul.f32 %v183, %v293
  %v305 = vmul.f32 %v188, %v293
  %v306 = vmul.f32 %v191, %v293
  %v307 = vmul.f32 %v196, %v293
  %v308 = vmul.f32 %v199, %v293
  %v309 = vmul.f32 %v204, %v293
  %v310 = vmul.f32 %v207, %v293
  %v311 = vadd.f32 %v272, %v295
  %v312 = vadd.f32 %v273, %v296
  %v313 = vadd.f32 %v274, %v297
  %v314 = vadd.f32 %v275, %v298
  %v315 = vadd.f32 %v276, %v299
  %v316 = vadd.f32 %v277, %v300
  %v317 = vadd.f32 %v278, %v301
  %v318 = vadd.f32 %v279, %v302
  %v319 = vadd.f32 %v280, %v303
  %v320 = vadd.f32 %v281, %v304
  %v321 = vadd.f32 %v282, %v305
  %v322 = vadd.f32 %v283, %v306
  %v323 = vadd.f32 %v284, %v307
  %v324 = vadd.f32 %v285, %v308
  %v325 = vadd.f32 %v286, %v309
  %v326 = vadd.f32 %v287, %v310
  %v327 = vld [vmem:[%s6] sm:$0x1]
  %v329 = vlaneseq
  %v330 = vshrl.u32 %v329, 7
  %v331 = vsub.s32 0, %v330
  %v332 = vrot.slane %v327, %v331
  %v334 = vadd.f32 %v311, %v332
  %v335 = vadd.f32 %v312, %v332
  %v336 = vadd.f32 %v313, %v332
  %v337 = vadd.f32 %v314, %v332
  %v338 = vadd.f32 %v315, %v332
  %v339 = vadd.f32 %v316, %v332
  %v340 = vadd.f32 %v317, %v332
  %v341 = vadd.f32 %v318, %v332
  %v342 = vadd.f32 %v319, %v332
  %v343 = vadd.f32 %v320, %v332
  %v344 = vadd.f32 %v321, %v332
  %v345 = vadd.f32 %v322, %v332
  %v346 = vadd.f32 %v323, %v332
  %v347 = vadd.f32 %v324, %v332
  %v348 = vadd.f32 %v325, %v332
  %v349 = vadd.f32 %v326, %v332
  %v350 = vmax.f32 %v334, 0.0
  %v351 = vmax.f32 %v335, 0.0
  %v352 = vmax.f32 %v336, 0.0
  %v353 = vmax.f32 %v337, 0.0
  %v354 = vmax.f32 %v338, 0.0
  %v355 = vmax.f32 %v339, 0.0
  %v356 = vmax.f32 %v340, 0.0
  %v357 = vmax.f32 %v341, 0.0
  %v358 = vmax.f32 %v342, 0.0
  %v359 = vmax.f32 %v343, 0.0
  %v360 = vmax.f32 %v344, 0.0
  %v361 = vmax.f32 %v345, 0.0
  %v362 = vmax.f32 %v346, 0.0
  %v363 = vmax.f32 %v347, 0.0
  %v364 = vmax.f32 %v348, 0.0
  %v365 = vmax.f32 %v349, 0.0
  %v366 = vpack.c.bf16 %v351, %v350
  %v367 = vpack.c.bf16 %v353, %v352
  %v368 = vpack.c.bf16 %v355, %v354
  %v369 = vpack.c.bf16 %v357, %v356
  %v370 = vpack.c.bf16 %v359, %v358
  %v371 = vpack.c.bf16 %v361, %v360
  %v372 = vpack.c.bf16 %v363, %v362
  %v373 = vpack.c.bf16 %v365, %v364
  %v382 = vunpack.c.l.b16 %v366
  %v383 = vunpack.c.h.b16 %v366
  %v384 = vunpack.c.l.b16 %v367
  %v385 = vunpack.c.h.b16 %v367
  %v386 = vunpack.c.l.b16 %v368
  %v387 = vunpack.c.h.b16 %v368
  %v388 = vunpack.c.l.b16 %v369
  %v389 = vunpack.c.h.b16 %v369
  %v390 = vunpack.c.l.b16 %v370
  %v391 = vunpack.c.h.b16 %v370
  %v392 = vunpack.c.l.b16 %v371
  %v393 = vunpack.c.h.b16 %v371
  %v394 = vunpack.c.l.b16 %v372
  %v395 = vunpack.c.h.b16 %v372
  %v396 = vunpack.c.l.b16 %v373
  %v397 = vunpack.c.h.b16 %v373
  %v398 = vpack.c.b16 %v382, %v382
  %v399 = vpack.c.b16 %v383, %v383
  %v400 = vpack.c.b16 %v384, %v384
  %v401 = vpack.c.b16 %v385, %v385
  %v402 = vpack.c.b16 %v386, %v386
  %v403 = vpack.c.b16 %v387, %v387
  %v404 = vpack.c.b16 %v388, %v388
  %v405 = vpack.c.b16 %v389, %v389
  %v406 = vpack.c.b16 %v390, %v390
  %v407 = vpack.c.b16 %v391, %v391
  %v408 = vpack.c.b16 %v392, %v392
  %v409 = vpack.c.b16 %v393, %v393
  %v410 = vpack.c.b16 %v394, %v394
  %v411 = vpack.c.b16 %v395, %v395
  %v412 = vpack.c.b16 %v396, %v396
  %v413 = vpack.c.b16 %v397, %v397
  %vm430 = vcmask 60416
  %431 = vst.msk [vmem:[%s7] sm:$0xf] %vm430, %v398
  %432 = vst.msk [vmem:[%s7 + $0x4] sm:$0xf] %vm430, %v399
  %433 = vst.msk [vmem:[%s7 + $0x8] sm:$0xf] %vm430, %v400
  %434 = vst.msk [vmem:[%s7 + $0xc] sm:$0xf] %vm430, %v401
  %435 = vst.msk [vmem:[%s7 + $0x10] sm:$0xf] %vm430, %v402
  %436 = vst.msk [vmem:[%s7 + $0x14] sm:$0xf] %vm430, %v403
  %437 = vst.msk [vmem:[%s7 + $0x18] sm:$0xf] %vm430, %v404
  %438 = vst.msk [vmem:[%s7 + $0x1c] sm:$0xf] %vm430, %v405
  %439 = vst.msk [vmem:[%s7 + $0x20] sm:$0xf] %vm430, %v406
  %440 = vst.msk [vmem:[%s7 + $0x24] sm:$0xf] %vm430, %v407
  %441 = vst.msk [vmem:[%s7 + $0x28] sm:$0xf] %vm430, %v408
  %442 = vst.msk [vmem:[%s7 + $0x2c] sm:$0xf] %vm430, %v409
  %443 = vst.msk [vmem:[%s7 + $0x30] sm:$0xf] %vm430, %v410
  %444 = vst.msk [vmem:[%s7 + $0x34] sm:$0xf] %vm430, %v411
  %445 = vst.msk [vmem:[%s7 + $0x38] sm:$0xf] %vm430, %v412
  %446 = vst.msk [vmem:[%s7 + $0x3c] sm:$0xf] %vm430, %v413
  // Predicated region
  $region30: #{_lambda_.11} parent=0 // pred_check
    _
  $region31: #{_lambda_.11} parent=0 // pred_check_branch
    %448 = sbr.rel (0) target = $region33
  $region32: #{_lambda_.11} parent=0 // pred_region
    _
  $region33: #{_lambda_.11} parent=0 // pred_fallthru
    _
  // Predicated region
  $region34: #{_lambda_.11} parent=0 // pred_check
    _
  $region35: #{_lambda_.11} parent=0 // pred_check_branch
    %450 = sbr.rel (0) target = $region37
  $region36: #{_lambda_.11} parent=0 // pred_region
    _
  $region37: #{_lambda_.11} parent=0 // pred_fallthru
    _

// kernel: _lambda_.10
$region0: #{_lambda_.10}
  #allocation0 [shape = 'u32[]', space=smem, size = 0x4, offset = 0x4, fixed_abs, tag = 'smem constant byte address 0x4 - core index']
  #allocation1 [shape = 'u32[144,128]{1,0:T(1,128)}', space=vmem, size = 0x12000, scoped, tag = 'internal scratch']
  %s0 = inlined_call_operand.vmem [shape: bf16[128,72], index: 0, kind: input, shape index: {}]
  %s1 = inlined_call_operand.vmem [shape: bf16[72,8], index: 1, kind: input, shape index: {}]
  %s2 = inlined_call_operand.vmem [shape: bf16[128,4], index: 2, kind: input, shape index: {}]
  %s3 = inlined_call_operand.vmem [shape: bf16[4,8], index: 3, kind: input, shape index: {}]
  %s4 = inlined_call_operand.vmem [shape: bf16[128,8], index: 4, kind: output, shape index: {0}]
  %s5 = inlined_call_operand.vmem [shape: f32[1,1,8], index: 5, kind: output, shape index: {1}]
  %s6 = inlined_call_operand.vmem [shape: f32[1,1,8], index: 6, kind: output, shape index: {2}]
  %s7 = inlined_call_operand.vmem [shape: f32[1,1,8], index: 7, kind: output, shape index: {3}]
  %s8 = inlined_call_operand.vmem [shape: f32[1,1,8], index: 8, kind: output, shape index: {4}]
  %9 = xla_tuple %s4, %s5, %s6, %s7, %s8
  %s10 = sld [smem:[#allocation0]]
  $region58: #{_lambda_.10} parent=0
    _
  %s12 = ssub.s32 1, %s10
  %s13 = scalar_select 0, %s12, %s10
  // Predicated region
  $region2: #{_lambda_.10} parent=0 // pred_check
    _
  $region3: #{_lambda_.10} parent=0 // pred_check_branch
    %15 = sbr.rel (0) target = $region5
  $region4: #{_lambda_.10} parent=0 // pred_region
    _
  $region5: #{_lambda_.10} parent=0 // pred_fallthru
    _
  // Predicated region
  $region6: #{_lambda_.10} parent=0 // pred_check
    _
  $region7: #{_lambda_.10} parent=0 // pred_check_branch
    %17 = sbr.rel (0) target = $region9
  $region8: #{_lambda_.10} parent=0 // pred_region
    _
  $region9: #{_lambda_.10} parent=0 // pred_fallthru
    _
  // Predicated region
  $region10: #{_lambda_.10} parent=0 // pred_check
    _
  $region11: #{_lambda_.10} parent=0 // pred_check_branch
    %19 = sbr.rel (0) target = $region13
  $region12: #{_lambda_.10} parent=0 // pred_region
    _
  $region13: #{_lambda_.10} parent=0 // pred_fallthru
    _
  // Predicated region
  $region14: #{_lambda_.10} parent=0 // pred_check
    _
  $region15: #{_lambda_.10} parent=0 // pred_check_branch
    %21 = sbr.rel (0) target = $region17
  $region16: #{_lambda_.10} parent=0 // pred_region
    _
  $region17: #{_lambda_.10} parent=0 // pred_fallthru
    _
  %v23 = vld [vmem:[%s0] sm:$0xf]
  %v24 = vld [vmem:[%s0 + $0x4] sm:$0xf]
  %v25 = vld [vmem:[%s0 + $0x8] sm:$0xf]
  %v26 = vld [vmem:[%s0 + $0xc] sm:$0xf]
  %v27 = vld [vmem:[%s0 + $0x10] sm:$0xf]
  %v28 = vld [vmem:[%s0 + $0x14] sm:$0xf]
  %v29 = vld [vmem:[%s0 + $0x18] sm:$0xf]
  %v30 = vld [vmem:[%s0 + $0x1c] sm:$0xf]
  %v31 = vld [vmem:[%s0 + $0x20] sm:$0xf]
  %v32 = vld [vmem:[%s0 + $0x24] sm:$0xf]
  %v33 = vld [vmem:[%s0 + $0x28] sm:$0xf]
  %v34 = vld [vmem:[%s0 + $0x2c] sm:$0xf]
  %v35 = vld [vmem:[%s0 + $0x30] sm:$0xf]
  %v36 = vld [vmem:[%s0 + $0x34] sm:$0xf]
  %v37 = vld [vmem:[%s0 + $0x38] sm:$0xf]
  %v38 = vld [vmem:[%s0 + $0x3c] sm:$0xf]
  %v39 = vld [vmem:[%s1] sm:$0xf]
  %v40 = vld [vmem:[%s1 + $0x4] sm:$0xf]
  %v41 = vld [vmem:[%s1 + $0x8] sm:$0xf]
  %v42 = vld [vmem:[%s1 + $0xc] sm:$0xf]
  %v43 = vld [vmem:[%s1 + $0x10] sm:$0xf]
  %v44 = vld [vmem:[%s1 + $0x14] sm:$0xf]
  %v45 = vld [vmem:[%s1 + $0x18] sm:$0xf]
  %v46 = vld [vmem:[%s1 + $0x1c] sm:$0xf]
  %v47 = vld [vmem:[%s1 + $0x20] sm:$0xf]
  %v64 = vunpack.c.l.b16 %v23
  %v65 = vunpack.c.l.b16 %v24
  %v66 = vunpack.c.l.b16 %v25
  %v67 = vunpack.c.l.b16 %v26
  %v68 = vunpack.c.l.b16 %v27
  %v69 = vunpack.c.l.b16 %v28
  %v70 = vunpack.c.l.b16 %v29
  %v71 = vunpack.c.l.b16 %v30
  %v72 = vunpack.c.l.b16 %v31
  %v73 = vunpack.c.l.b16 %v32
  %v74 = vunpack.c.l.b16 %v33
  %v75 = vunpack.c.l.b16 %v34
  %v76 = vunpack.c.l.b16 %v35
  %v77 = vunpack.c.l.b16 %v36
  %v78 = vunpack.c.l.b16 %v37
  %v79 = vunpack.c.l.b16 %v38
  %v80 = vpack.c.b16 %v65, %v64
  %v81 = vpack.c.b16 %v67, %v66
  %v82 = vpack.c.b16 %v69, %v68
  %v83 = vpack.c.b16 %v71, %v70
  %v84 = vpack.c.b16 %v73, %v72
  %v85 = vpack.c.b16 %v75, %v74
  %v86 = vpack.c.b16 %v77, %v76
  %v87 = vpack.c.b16 %v79, %v78
  %v97 = vunpack.c.l.b16 %v39
  %v98 = vunpack.c.l.b16 %v40
  %v99 = vunpack.c.l.b16 %v41
  %v100 = vunpack.c.l.b16 %v42
  %v101 = vunpack.c.l.b16 %v43
  %v102 = vunpack.c.l.b16 %v44
  %v103 = vunpack.c.l.b16 %v45
  %v104 = vunpack.c.l.b16 %v46
  %v105 = vunpack.c.l.b16 %v47
  %v106 = vpack.c.b16 %v98, %v97
  %v107 = vpack.c.b16 %v100, %v99
  %v108 = vpack.c.b16 %v102, %v101
  %v109 = vpack.c.b16 %v104, %v103
  %v110 = vpack.c.b16 %v105, %v105
  %vm115 = vcmask 588800
  %v117 = vsel %vm115, %v80, 0
  %v120 = vsel %vm115, %v81, 0
  %v123 = vsel %vm115, %v82, 0
  %v126 = vsel %vm115, %v83, 0
  %v129 = vsel %vm115, %v84, 0
  %v132 = vsel %vm115, %v85, 0
  %v135 = vsel %vm115, %v86, 0
  %v138 = vsel %vm115, %v87, 0
  %vm140 = vcmask 1043456
  %v142 = vsel %vm140, %v110, 0
  %144 = vmatprep.subr.bf16.mxu0 0
  %145 = vmatpush1.bf16.msra.mxu0 0
  %146 = vmatprep.subr.bf16.mxu0 0
  %147 = vmatpush1.bf16.msra.mxu0 0
  %148 = vmatprep.subr.bf16.mxu0 0
  %149 = vmatpush1.bf16.msra.mxu0 0
  %150 = vmatprep.subr.bf16.mxu0 0
  %151 = vmatpush1.bf16.msra.mxu0 %v142
  %152 = vmatprep.subr.bf16.mxu0 0
  %153 = vmatpush1.bf16.msra.mxu0 %v109
  %154 = vmatprep.subr.bf16.mxu0 0
  %155 = vmatpush1.bf16.msra.mxu0 %v108
  %156 = vmatprep.subr.bf16.mxu0 0
  %157 = vmatpush1.bf16.msra.mxu0 %v107
  %158 = vmatprep.subr.bf16.mxu0 0
  %159 = vmatpush1.bf16.msra.mxu0 %v106
  %160 = vmatprep.subr.bf16.mxu0 0
  %161 = vmatpush2.bf16.msra.mxu0 0
  %162 = vmatprep.subr.bf16.mxu0 0
  %163 = vmatpush2.bf16.msra.mxu0 0
  %164 = vmatprep.subr.bf16.mxu0 0
  %165 = vmatpush2.bf16.msra.mxu0 0
  %166 = vmatprep.subr.bf16.mxu0 0
  %167 = vmatpush2.bf16.msra.mxu0 0
  %168 = vmatprep.subr.bf16.mxu0 0
  %169 = vmatpush2.bf16.msra.mxu0 0
  %170 = vmatprep.subr.bf16.mxu0 0
  %171 = vmatpush2.bf16.msra.mxu0 0
  %172 = vmatprep.subr.bf16.mxu0 0
  %173 = vmatpush2.bf16.msra.mxu0 0
  %174 = vmatprep.subr.bf16.mxu0 0
  %175 = vmatpush2.bf16.msra.mxu0 0
  %176 = vmatprep.mubr.bf16.mxu0 0
  %177 = vmatmul.mubr.bf16.gmra.mxu0 %v117
  %v178 = vpop.f32.mrf.mxu0
  %v179 = vadd.f32 0.0, %v178
  %v180 = vpop.f32.mrf.mxu0
  %v181 = vpop.f32.mrf.mxu0
  %v182 = vadd.f32 0.0, %v181
  %v183 = vpop.f32.mrf.mxu0
  %184 = vmatprep.mubr.bf16.mxu0 0
  %185 = vmatmul.mubr.bf16.gmra.mxu0 %v120
  %v186 = vpop.f32.mrf.mxu0
  %v187 = vadd.f32 0.0, %v186
  %v188 = vpop.f32.mrf.mxu0
  %v189 = vpop.f32.mrf.mxu0
  %v190 = vadd.f32 0.0, %v189
  %v191 = vpop.f32.mrf.mxu0
  %192 = vmatprep.mubr.bf16.mxu0 0
  %193 = vmatmul.mubr.bf16.gmra.mxu0 %v123
  %v194 = vpop.f32.mrf.mxu0
  %v195 = vadd.f32 0.0, %v194
  %v196 = vpop.f32.mrf.mxu0
  %v197 = vpop.f32.mrf.mxu0
  %v198 = vadd.f32 0.0, %v197
  %v199 = vpop.f32.mrf.mxu0
  %200 = vmatprep.mubr.bf16.mxu0 0
  %201 = vmatmul.mubr.bf16.gmra.mxu0 %v126
  %v202 = vpop.f32.mrf.mxu0
  %v203 = vadd.f32 0.0, %v202
  %v204 = vpop.f32.mrf.mxu0
  %v205 = vpop.f32.mrf.mxu0
  %v206 = vadd.f32 0.0, %v205
  %v207 = vpop.f32.mrf.mxu0
  %208 = vmatprep.mubr.bf16.mxu0 0
  %209 = vmatmul.mubr.bf16.gmra.mxu0 %v129
  %v210 = vpop.f32.mrf.mxu0
  %v211 = vadd.f32 0.0, %v210
  %v212 = vpop.f32.mrf.mxu0
  %v213 = vpop.f32.mrf.mxu0
  %v214 = vadd.f32 0.0, %v213
  %v215 = vpop.f32.mrf.mxu0
  %216 = vmatprep.mubr.bf16.mxu0 0
  %217 = vmatmul.mubr.bf16.gmra.mxu0 %v132
  %v218 = vpop.f32.mrf.mxu0
  %v219 = vadd.f32 0.0, %v218
  %v220 = vpop.f32.mrf.mxu0
  %v221 = vpop.f32.mrf.mxu0
  %v222 = vadd.f32 0.0, %v221
  %v223 = vpop.f32.mrf.mxu0
  %224 = vmatprep.mubr.bf16.mxu0 0
  %225 = vmatmul.mubr.bf16.gmra.mxu0 %v135
  %v226 = vpop.f32.mrf.mxu0
  %v227 = vadd.f32 0.0, %v226
  %v228 = vpop.f32.mrf.mxu0
  %v229 = vpop.f32.mrf.mxu0
  %v230 = vadd.f32 0.0, %v229
  %v231 = vpop.f32.mrf.mxu0
  %232 = vmatprep.mubr.bf16.mxu0 0
  %233 = vmatmul.mubr.bf16.gmra.mxu0 %v138
  %v234 = vpop.f32.mrf.mxu0
  %v235 = vadd.f32 0.0, %v234
  %v236 = vpop.f32.mrf.mxu0
  %v237 = vpop.f32.mrf.mxu0
  %v238 = vadd.f32 0.0, %v237
  %v239 = vpop.f32.mrf.mxu0
  %240 = vdwg.mxu0
  %v241 = vld [vmem:[%s2] sm:$0xf]
  %v242 = vld [vmem:[%s2 + $0x4] sm:$0xf]
  %v243 = vld [vmem:[%s2 + $0x8] sm:$0xf]
  %v244 = vld [vmem:[%s2 + $0xc] sm:$0xf]
  %v245 = vld [vmem:[%s2 + $0x10] sm:$0xf]
  %v246 = vld [vmem:[%s2 + $0x14] sm:$0xf]
  %v247 = vld [vmem:[%s2 + $0x18] sm:$0xf]
  %v248 = vld [vmem:[%s2 + $0x1c] sm:$0xf]
  %v249 = vld [vmem:[%s2 + $0x20] sm:$0xf]
  %v250 = vld [vmem:[%s2 + $0x24] sm:$0xf]
  %v251 = vld [vmem:[%s2 + $0x28] sm:$0xf]
  %v252 = vld [vmem:[%s2 + $0x2c] sm:$0xf]
  %v253 = vld [vmem:[%s2 + $0x30] sm:$0xf]
  %v254 = vld [vmem:[%s2 + $0x34] sm:$0xf]
  %v255 = vld [vmem:[%s2 + $0x38] sm:$0xf]
  %v256 = vld [vmem:[%s2 + $0x3c] sm:$0xf]
  %v257 = vld [vmem:[%s3] sm:$0x3]
  %v274 = vunpack.c.l.b16 %v241
  %v275 = vunpack.c.l.b16 %v242
  %v276 = vunpack.c.l.b16 %v243
  %v277 = vunpack.c.l.b16 %v244
  %v278 = vunpack.c.l.b16 %v245
  %v279 = vunpack.c.l.b16 %v246
  %v280 = vunpack.c.l.b16 %v247
  %v281 = vunpack.c.l.b16 %v248
  %v282 = vunpack.c.l.b16 %v249
  %v283 = vunpack.c.l.b16 %v250
  %v284 = vunpack.c.l.b16 %v251
  %v285 = vunpack.c.l.b16 %v252
  %v286 = vunpack.c.l.b16 %v253
  %v287 = vunpack.c.l.b16 %v254
  %v288 = vunpack.c.l.b16 %v255
  %v289 = vunpack.c.l.b16 %v256
  %v290 = vpack.c.b16 %v275, %v274
  %v291 = vpack.c.b16 %v277, %v276
  %v292 = vpack.c.b16 %v279, %v278
  %v293 = vpack.c.b16 %v281, %v280
  %v294 = vpack.c.b16 %v283, %v282
  %v295 = vpack.c.b16 %v285, %v284
  %v296 = vpack.c.b16 %v287, %v286
  %v297 = vpack.c.b16 %v289, %v288
  %vm298 = vcmask 31744
  %v300 = vsel %vm298, %v290, 0
  %v303 = vsel %vm298, %v291, 0
  %v306 = vsel %vm298, %v292, 0
  %v309 = vsel %vm298, %v293, 0
  %v312 = vsel %vm298, %v294, 0
  %v315 = vsel %vm298, %v295, 0
  %v318 = vsel %vm298, %v296, 0
  %v321 = vsel %vm298, %v297, 0
  %vm323 = vcmask 1041408
  %v325 = vsel %vm323, %v257, 0
  %327 = vmatprep.subr.bf16.mxu0 0
  %328 = vmatpush1.bf16.msra.mxu0 0
  %329 = vmatprep.subr.bf16.mxu0 0
  %330 = vmatpush1.bf16.msra.mxu0 0
  %331 = vmatprep.subr.bf16.mxu0 0
  %332 = vmatpush1.bf16.msra.mxu0 0
  %333 = vmatprep.subr.bf16.mxu0 0
  %334 = vmatpush1.bf16.msra.mxu0 0
  %335 = vmatprep.subr.bf16.mxu0 0
  %336 = vmatpush1.bf16.msra.mxu0 0
  %337 = vmatprep.subr.bf16.mxu0 0
  %338 = vmatpush1.bf16.msra.mxu0 0
  %339 = vmatprep.subr.bf16.mxu0 0
  %340 = vmatpush1.bf16.msra.mxu0 0
  %341 = vmatprep.subr.bf16.mxu0 0
  %342 = vmatpush1.bf16.msra.mxu0 %v325
  %343 = vmatprep.subr.bf16.mxu0 0
  %344 = vmatpush2.bf16.msra.mxu0 0
  %345 = vmatprep.subr.bf16.mxu0 0
  %346 = vmatpush2.bf16.msra.mxu0 0
  %347 = vmatprep.subr.bf16.mxu0 0
  %348 = vmatpush2.bf16.msra.mxu0 0
  %349 = vmatprep.subr.bf16.mxu0 0
  %350 = vmatpush2.bf16.msra.mxu0 0
  %351 = vmatprep.subr.bf16.mxu0 0
  %352 = vmatpush2.bf16.msra.mxu0 0
  %353 = vmatprep.subr.bf16.mxu0 0
  %354 = vmatpush2.bf16.msra.mxu0 0
  %355 = vmatprep.subr.bf16.mxu0 0
  %356 = vmatpush2.bf16.msra.mxu0 0
  %357 = vmatprep.subr.bf16.mxu0 0
  %358 = vmatpush2.bf16.msra.mxu0 0
  %359 = vmatprep.mubr.bf16.mxu0 0
  %360 = vmatmul.mubr.bf16.gmra.mxu0 %v300
  %v361 = vpop.f32.mrf.mxu0
  %v362 = vadd.f32 0.0, %v361
  %v363 = vpop.f32.mrf.mxu0
  %v364 = vpop.f32.mrf.mxu0
  %v365 = vadd.f32 0.0, %v364
  %v366 = vpop.f32.mrf.mxu0
  %367 = vmatprep.mubr.bf16.mxu0 0
  %368 = vmatmul.mubr.bf16.gmra.mxu0 %v303
  %v369 = vpop.f32.mrf.mxu0
  %v370 = vadd.f32 0.0, %v369
  %v371 = vpop.f32.mrf.mxu0
  %v372 = vpop.f32.mrf.mxu0
  %v373 = vadd.f32 0.0, %v372
  %v374 = vpop.f32.mrf.mxu0
  %375 = vmatprep.mubr.bf16.mxu0 0
  %376 = vmatmul.mubr.bf16.gmra.mxu0 %v306
  %v377 = vpop.f32.mrf.mxu0
  %v378 = vadd.f32 0.0, %v377
  %v379 = vpop.f32.mrf.mxu0
  %v380 = vpop.f32.mrf.mxu0
  %v381 = vadd.f32 0.0, %v380
  %v382 = vpop.f32.mrf.mxu0
  %383 = vmatprep.mubr.bf16.mxu0 0
  %384 = vmatmul.mubr.bf16.gmra.mxu0 %v309
  %v385 = vpop.f32.mrf.mxu0
  %v386 = vadd.f32 0.0, %v385
  %v387 = vpop.f32.mrf.mxu0
  %v388 = vpop.f32.mrf.mxu0
  %v389 = vadd.f32 0.0, %v388
  %v390 = vpop.f32.mrf.mxu0
  %391 = vmatprep.mubr.bf16.mxu0 0
  %392 = vmatmul.mubr.bf16.gmra.mxu0 %v312
  %v393 = vpop.f32.mrf.mxu0
  %v394 = vadd.f32 0.0, %v393
  %v395 = vpop.f32.mrf.mxu0
  %v396 = vpop.f32.mrf.mxu0
  %v397 = vadd.f32 0.0, %v396
  %v398 = vpop.f32.mrf.mxu0
  %399 = vmatprep.mubr.bf16.mxu0 0
  %400 = vmatmul.mubr.bf16.gmra.mxu0 %v315
  %v401 = vpop.f32.mrf.mxu0
  %v402 = vadd.f32 0.0, %v401
  %v403 = vpop.f32.mrf.mxu0
  %v404 = vpop.f32.mrf.mxu0
  %v405 = vadd.f32 0.0, %v404
  %v406 = vpop.f32.mrf.mxu0
  %407 = vmatprep.mubr.bf16.mxu0 0
  %408 = vmatmul.mubr.bf16.gmra.mxu0 %v318
  %v409 = vpop.f32.mrf.mxu0
  %v410 = vadd.f32 0.0, %v409
  %v411 = vpop.f32.mrf.mxu0
  %v412 = vpop.f32.mrf.mxu0
  %v413 = vadd.f32 0.0, %v412
  %v414 = vpop.f32.mrf.mxu0
  %415 = vmatprep.mubr.bf16.mxu0 0
  %416 = vmatmul.mubr.bf16.gmra.mxu0 %v321
  %v417 = vpop.f32.mrf.mxu0
  %v418 = vadd.f32 0.0, %v417
  %v419 = vpop.f32.mrf.mxu0
  %v420 = vpop.f32.mrf.mxu0
  %v421 = vadd.f32 0.0, %v420
  %v422 = vpop.f32.mrf.mxu0
  %423 = vdwg.mxu0
  %v424 = vpack.c.bf16 %v182, %v179
  %v425 = vpack.c.bf16 %v190, %v187
  %v426 = vpack.c.bf16 %v198, %v195
  %v427 = vpack.c.bf16 %v206, %v203
  %v428 = vpack.c.bf16 %v214, %v211
  %v429 = vpack.c.bf16 %v222, %v219
  %v430 = vpack.c.bf16 %v230, %v227
  %v431 = vpack.c.bf16 %v238, %v235
  %v440 = vunpack.c.l.b16 %v424
  %v441 = vunpack.c.h.b16 %v424
  %v442 = vunpack.c.l.b16 %v425
  %v443 = vunpack.c.h.b16 %v425
  %v444 = vunpack.c.l.b16 %v426
  %v445 = vunpack.c.h.b16 %v426
  %v446 = vunpack.c.l.b16 %v427
  %v447 = vunpack.c.h.b16 %v427
  %v448 = vunpack.c.l.b16 %v428
  %v449 = vunpack.c.h.b16 %v428
  %v450 = vunpack.c.l.b16 %v429
  %v451 = vunpack.c.h.b16 %v429
  %v452 = vunpack.c.l.b16 %v430
  %v453 = vunpack.c.h.b16 %v430
  %v454 = vunpack.c.l.b16 %v431
  %v455 = vunpack.c.h.b16 %v431
  %v456 = vpack.c.b16 %v440, %v440
  %v457 = vpack.c.b16 %v441, %v441
  %v458 = vpack.c.b16 %v442, %v442
  %v459 = vpack.c.b16 %v443, %v443
  %v460 = vpack.c.b16 %v444, %v444
  %v461 = vpack.c.b16 %v445, %v445
  %v462 = vpack.c.b16 %v446, %v446
  %v463 = vpack.c.b16 %v447, %v447
  %v464 = vpack.c.b16 %v448, %v448
  %v465 = vpack.c.b16 %v449, %v449
  %v466 = vpack.c.b16 %v450, %v450
  %v467 = vpack.c.b16 %v451, %v451
  %v468 = vpack.c.b16 %v452, %v452
  %v469 = vpack.c.b16 %v453, %v453
  %v470 = vpack.c.b16 %v454, %v454
  %v471 = vpack.c.b16 %v455, %v455
  %vm488 = vcmask 60416
  %489 = vst.msk [vmem:[%s4] sm:$0xf] %vm488, %v456
  %490 = vst.msk [vmem:[%s4 + $0x4] sm:$0xf] %vm488, %v457
  %491 = vst.msk [vmem:[%s4 + $0x8] sm:$0xf] %vm488, %v458
  %492 = vst.msk [vmem:[%s4 + $0xc] sm:$0xf] %vm488, %v459
  %493 = vst.msk [vmem:[%s4 + $0x10] sm:$0xf] %vm488, %v460
  %494 = vst.msk [vmem:[%s4 + $0x14] sm:$0xf] %vm488, %v461
  %495 = vst.msk [vmem:[%s4 + $0x18] sm:$0xf] %vm488, %v462
  %496 = vst.msk [vmem:[%s4 + $0x1c] sm:$0xf] %vm488, %v463
  %497 = vst.msk [vmem:[%s4 + $0x20] sm:$0xf] %vm488, %v464
  %498 = vst.msk [vmem:[%s4 + $0x24] sm:$0xf] %vm488, %v465
  %499 = vst.msk [vmem:[%s4 + $0x28] sm:$0xf] %vm488, %v466
  %500 = vst.msk [vmem:[%s4 + $0x2c] sm:$0xf] %vm488, %v467
  %501 = vst.msk [vmem:[%s4 + $0x30] sm:$0xf] %vm488, %v468
  %502 = vst.msk [vmem:[%s4 + $0x34] sm:$0xf] %vm488, %v469
  %503 = vst.msk [vmem:[%s4 + $0x38] sm:$0xf] %vm488, %v470
  %504 = vst.msk [vmem:[%s4 + $0x3c] sm:$0xf] %vm488, %v471
  %vm505 = vcmask 64512
  %v506 = vsel %vm505, %v179, 0.0
  %v507 = vsel %vm505, %v182, 0.0
  %v508 = vadd.f32 %v506, %v507
  %v509 = vsel %vm505, %v187, 0.0
  %v510 = vadd.f32 %v508, %v509
  %v511 = vsel %vm505, %v190, 0.0
  %v512 = vadd.f32 %v510, %v511
  %v513 = vsel %vm505, %v195, 0.0
  %v514 = vadd.f32 %v512, %v513
  %v515 = vsel %vm505, %v198, 0.0
  %v516 = vadd.f32 %v514, %v515
  %v517 = vsel %vm505, %v203, 0.0
  %v518 = vadd.f32 %v516, %v517
  %v519 = vsel %vm505, %v206, 0.0
  %v520 = vadd.f32 %v518, %v519
  %v521 = vsel %vm505, %v211, 0.0
  %v522 = vadd.f32 %v520, %v521
  %v523 = vsel %vm505, %v214, 0.0
  %v524 = vadd.f32 %v522, %v523
  %v525 = vsel %vm505, %v219, 0.0
  %v526 = vadd.f32 %v524, %v525
  %v527 = vsel %vm505, %v222, 0.0
  %v528 = vadd.f32 %v526, %v527
  %v529 = vsel %vm505, %v227, 0.0
  %v530 = vadd.f32 %v528, %v529
  %v531 = vsel %vm505, %v230, 0.0
  %v532 = vadd.f32 %v530, %v531
  %v533 = vsel %vm505, %v235, 0.0
  %v534 = vadd.f32 %v532, %v533
  %v535 = vsel %vm505, %v238, 0.0
  %v536 = vadd.f32 %v534, %v535
  %v537 = vrot.slane %v536, 4
  %v538 = vadd.f32 %v536, %v537
  %v539 = vrot.slane %v538, 2
  %v540 = vadd.f32 %v538, %v539
  %v541 = vrot.slane %v540, 1
  %v542 = vadd.f32 %v540, %v541
  %vm543 = vcmask 57344
  %544 = vst.msk [vmem:[%s5] sm:$0x1] %vm543, %v542
  %v545 = vmul.f32 %v179, %v179
  %v546 = vmul.f32 %v182, %v182
  %v547 = vmul.f32 %v187, %v187
  %v548 = vmul.f32 %v190, %v190
  %v549 = vmul.f32 %v195, %v195
  %v550 = vmul.f32 %v198, %v198
  %v551 = vmul.f32 %v203, %v203
  %v552 = vmul.f32 %v206, %v206
  %v553 = vmul.f32 %v211, %v211
  %v554 = vmul.f32 %v214, %v214
  %v555 = vmul.f32 %v219, %v219
  %v556 = vmul.f32 %v222, %v222
  %v557 = vmul.f32 %v227, %v227
  %v558 = vmul.f32 %v230, %v230
  %v559 = vmul.f32 %v235, %v235
  %v560 = vmul.f32 %v238, %v238
  %v561 = vsel %vm505, %v545, 0.0
  %v562 = vsel %vm505, %v546, 0.0
  %v563 = vadd.f32 %v561, %v562
  %v564 = vsel %vm505, %v547, 0.0
  %v565 = vadd.f32 %v563, %v564
  %v566 = vsel %vm505, %v548, 0.0
  %v567 = vadd.f32 %v565, %v566
  %v568 = vsel %vm505, %v549, 0.0
  %v569 = vadd.f32 %v567, %v568
  %v570 = vsel %vm505, %v550, 0.0
  %v571 = vadd.f32 %v569, %v570
  %v572 = vsel %vm505, %v551, 0.0
  %v573 = vadd.f32 %v571, %v572
  %v574 = vsel %vm505, %v552, 0.0
  %v575 = vadd.f32 %v573, %v574
  %v576 = vsel %vm505, %v553, 0.0
  %v577 = vadd.f32 %v575, %v576
  %v578 = vsel %vm505, %v554, 0.0
  %v579 = vadd.f32 %v577, %v578
  %v580 = vsel %vm505, %v555, 0.0
  %v581 = vadd.f32 %v579, %v580
  %v582 = vsel %vm505, %v556, 0.0
  %v583 = vadd.f32 %v581, %v582
  %v584 = vsel %vm505, %v557, 0.0
  %v585 = vadd.f32 %v583, %v584
  %v586 = vsel %vm505, %v558, 0.0
  %v587 = vadd.f32 %v585, %v586
  %v588 = vsel %vm505, %v559, 0.0
  %v589 = vadd.f32 %v587, %v588
  %v590 = vsel %vm505, %v560, 0.0
  %v591 = vadd.f32 %v589, %v590
  %v592 = vrot.slane %v591, 4
  %v593 = vadd.f32 %v591, %v592
  %v594 = vrot.slane %v593, 2
  %v595 = vadd.f32 %v593, %v594
  %v596 = vrot.slane %v595, 1
  %v597 = vadd.f32 %v595, %v596
  %598 = vst.msk [vmem:[%s6] sm:$0x1] %vm543, %v597
  %v599 = vsel %vm505, %v362, 0.0
  %v600 = vsel %vm505, %v365, 0.0
  %v601 = vadd.f32 %v599, %v600
  %v602 = vsel %vm505, %v370, 0.0
  %v603 = vadd.f32 %v601, %v602
  %v604 = vsel %vm505, %v373, 0.0
  %v605 = vadd.f32 %v603, %v604
  %v606 = vsel %vm505, %v378, 0.0
  %v607 = vadd.f32 %v605, %v606
  %v608 = vsel %vm505, %v381, 0.0
  %v609 = vadd.f32 %v607, %v608
  %v610 = vsel %vm505, %v386, 0.0
  %v611 = vadd.f32 %v609, %v610
  %v612 = vsel %vm505, %v389, 0.0
  %v613 = vadd.f32 %v611, %v612
  %v614 = vsel %vm505, %v394, 0.0
  %v615 = vadd.f32 %v613, %v614
  %v616 = vsel %vm505, %v397, 0.0
  %v617 = vadd.f32 %v615, %v616
  %v618 = vsel %vm505, %v402, 0.0
  %v619 = vadd.f32 %v617, %v618
  %v620 = vsel %vm505, %v405, 0.0
  %v621 = vadd.f32 %v619, %v620
  %v622 = vsel %vm505, %v410, 0.0
  %v623 = vadd.f32 %v621, %v622
  %v624 = vsel %vm505, %v413, 0.0
  %v625 = vadd.f32 %v623, %v624
  %v626 = vsel %vm505, %v418, 0.0
  %v627 = vadd.f32 %v625, %v626
  %v628 = vsel %vm505, %v421, 0.0
  %v629 = vadd.f32 %v627, %v628
  %v630 = vrot.slane %v629, 4
  %v631 = vadd.f32 %v629, %v630
  %v632 = vrot.slane %v631, 2
  %v633 = vadd.f32 %v631, %v632
  %v634 = vrot.slane %v633, 1
  %v635 = vadd.f32 %v633, %v634
  %636 = vst.msk [vmem:[%s7] sm:$0x1] %vm543, %v635
  %v637 = vmul.f32 %v362, %v362
  %v638 = vmul.f32 %v365, %v365
  %v639 = vmul.f32 %v370, %v370
  %v640 = vmul.f32 %v373, %v373
  %v641 = vmul.f32 %v378, %v378
  %v642 = vmul.f32 %v381, %v381
  %v643 = vmul.f32 %v386, %v386
  %v644 = vmul.f32 %v389, %v389
  %v645 = vmul.f32 %v394, %v394
  %v646 = vmul.f32 %v397, %v397
  %v647 = vmul.f32 %v402, %v402
  %v648 = vmul.f32 %v405, %v405
  %v649 = vmul.f32 %v410, %v410
  %v650 = vmul.f32 %v413, %v413
  %v651 = vmul.f32 %v418, %v418
  %v652 = vmul.f32 %v421, %v421
  %v653 = vsel %vm505, %v637, 0.0
  %v654 = vsel %vm505, %v638, 0.0
  %v655 = vadd.f32 %v653, %v654
  %v656 = vsel %vm505, %v639, 0.0
  %v657 = vadd.f32 %v655, %v656
  %v658 = vsel %vm505, %v640, 0.0
  %v659 = vadd.f32 %v657, %v658
  %v660 = vsel %vm505, %v641, 0.0
  %v661 = vadd.f32 %v659, %v660
  %v662 = vsel %vm505, %v642, 0.0
  %v663 = vadd.f32 %v661, %v662
  %v664 = vsel %vm505, %v643, 0.0
  %v665 = vadd.f32 %v663, %v664
  %v666 = vsel %vm505, %v644, 0.0
  %v667 = vadd.f32 %v665, %v666
  %v668 = vsel %vm505, %v645, 0.0
  %v669 = vadd.f32 %v667, %v668
  %v670 = vsel %vm505, %v646, 0.0
  %v671 = vadd.f32 %v669, %v670
  %v672 = vsel %vm505, %v647, 0.0
  %v673 = vadd.f32 %v671, %v672
  %v674 = vsel %vm505, %v648, 0.0
  %v675 = vadd.f32 %v673, %v674
  %v676 = vsel %vm505, %v649, 0.0
  %v677 = vadd.f32 %v675, %v676
  %v678 = vsel %vm505, %v650, 0.0
  %v679 = vadd.f32 %v677, %v678
  %v680 = vsel %vm505, %v651, 0.0
  %v681 = vadd.f32 %v679, %v680
  %v682 = vsel %vm505, %v652, 0.0
  %v683 = vadd.f32 %v681, %v682
  %v684 = vrot.slane %v683, 4
  %v685 = vadd.f32 %v683, %v684
  %v686 = vrot.slane %v685, 2
  %v687 = vadd.f32 %v685, %v686
  %v688 = vrot.slane %v687, 1
  %v689 = vadd.f32 %v687, %v688
  %690 = vst.msk [vmem:[%s8] sm:$0x1] %vm543, %v689
  // Predicated region
  $region18: #{_lambda_.10} parent=0 // pred_check
    _
  $region19: #{_lambda_.10} parent=0 // pred_check_branch
    %692 = sbr.rel (0) target = $region21
  $region20: #{_lambda_.10} parent=0 // pred_region
    _
  $region21: #{_lambda_.10} parent=0 // pred_fallthru
    _
  // Predicated region
  $region22: #{_lambda_.10} parent=0 // pred_check
    _
  $region23: #{_lambda_.10} parent=0 // pred_check_branch
    %694 = sbr.rel (0) target = $region25
  $region24: #{_lambda_.10} parent=0 // pred_region
    _
  $region25: #{_lambda_.10} parent=0 // pred_fallthru
    _
  // Predicated region
  $region26: #{_lambda_.10} parent=0 // pred_check
    _
  $region27: #{_lambda_.10} parent=0 // pred_check_branch
    %696 = sbr.rel (0) target = $region29
  $region28: #{_lambda_.10} parent=0 // pred_region
    _
  $region29: #{_lambda_.10} parent=0 // pred_fallthru
    _
  // Predicated region
  $region30: #{_lambda_.10} parent=0 // pred_check
    _
  $region31: #{_lambda_.10} parent=0 // pred_check_branch
    %698 = sbr.rel (0) target = $region33
  $region32: #{_lambda_.10} parent=0 // pred_region
    _
  $region33: #{_lambda_.10} parent=0 // pred_fallthru
    _
  // Predicated region
  $region34: #{_lambda_.10} parent=0 // pred_check
    _
  $region35: #{_lambda_.10} parent=0 // pred_check_branch
    %700 = sbr.rel (0) target = $region37
  $region36: #{_lambda_.10} parent=0 // pred_region
    _
  $region37: #{_lambda_.10} parent=0 // pred_fallthru
    _
  // Predicated region
  $region38: #{_lambda_.10} parent=0 // pred_check
    _
  $region39: #{_lambda_.10} parent=0 // pred_check_branch
    %702 = sbr.rel (0) target = $region41
  $region40: #{_lambda_.10} parent=0 // pred_region
    _
  $region41: #{_lambda_.10} parent=0 // pred_fallthru
    _
  // Predicated region
  $region42: #{_lambda_.10} parent=0 // pred_check
    _
  $region43: #{_lambda_.10} parent=0 // pred_check_branch
    %704 = sbr.rel (0) target = $region45
  $region44: #{_lambda_.10} parent=0 // pred_region
    _
  $region45: #{_lambda_.10} parent=0 // pred_fallthru
    _
  // Predicated region
  $region46: #{_lambda_.10} parent=0 // pred_check
    _
  $region47: #{_lambda_.10} parent=0 // pred_check_branch
    %706 = sbr.rel (0) target = $region49
  $region48: #{_lambda_.10} parent=0 // pred_region
    _
  $region49: #{_lambda_.10} parent=0 // pred_fallthru
    _
  // Predicated region
  $region50: #{_lambda_.10} parent=0 // pred_check
    _
  $region51: #{_lambda_.10} parent=0 // pred_check_branch
    %708 = sbr.rel (0) target = $region53
  $region52: #{_lambda_.10} parent=0 // pred_region
    _
  $region53: #{_lambda_.10} parent=0 // pred_fallthru
    _
  // Predicated region
  $region54: #{_lambda_.10} parent=0 // pred_check
    _
  $region55: #{_lambda_.10} parent=0 // pred_check_branch
    %710 = sbr.rel (0) target = $region57
  $region56: #{_lambda_.10} parent=0 // pred_region
    _
  $region57: #{_lambda_.10} parent=0 // pred_fallthru
    _

// kernel: _lambda_.15
$region0: #{_lambda_.15}
  #allocation0 [shape = 'u32[]', space=smem, size = 0x4, offset = 0x4, fixed_abs, tag = 'smem constant byte address 0x4 - core index']
  #allocation1 [shape = 'u32[144,128]{1,0:T(1,128)}', space=vmem, size = 0x12000, scoped, tag = 'internal scratch']
  %s0 = inlined_call_operand.vmem [shape: bf16[128,8], index: 0, kind: input, shape index: {}]
  %s1 = inlined_call_operand.vmem [shape: f32[1,8], index: 1, kind: input, shape index: {}]
  %s2 = inlined_call_operand.vmem [shape: f32[1,8], index: 2, kind: input, shape index: {}]
  %s3 = inlined_call_operand.vmem [shape: bf16[128,8], index: 3, kind: input, shape index: {}]
  %s4 = inlined_call_operand.vmem [shape: f32[128,8], index: 4, kind: output, shape index: {}]
  %s5 = sld [smem:[#allocation0]]
  $region26: #{_lambda_.15} parent=0
    _
  %s7 = ssub.s32 1, %s5
  %s8 = scalar_select 0, %s7, %s5
  // Predicated region
  $region2: #{_lambda_.15} parent=0 // pred_check
    _
  $region3: #{_lambda_.15} parent=0 // pred_check_branch
    %10 = sbr.rel (0) target = $region5
  $region4: #{_lambda_.15} parent=0 // pred_region
    _
  $region5: #{_lambda_.15} parent=0 // pred_fallthru
    _
  // Predicated region
  $region6: #{_lambda_.15} parent=0 // pred_check
    _
  $region7: #{_lambda_.15} parent=0 // pred_check_branch
    %12 = sbr.rel (0) target = $region9
  $region8: #{_lambda_.15} parent=0 // pred_region
    _
  $region9: #{_lambda_.15} parent=0 // pred_fallthru
    _
  // Predicated region
  $region10: #{_lambda_.15} parent=0 // pred_check
    _
  $region11: #{_lambda_.15} parent=0 // pred_check_branch
    %14 = sbr.rel (0) target = $region13
  $region12: #{_lambda_.15} parent=0 // pred_region
    _
  $region13: #{_lambda_.15} parent=0 // pred_fallthru
    _
  // Predicated region
  $region14: #{_lambda_.15} parent=0 // pred_check
    _
  $region15: #{_lambda_.15} parent=0 // pred_check_branch
    %16 = sbr.rel (0) target = $region17
  $region16: #{_lambda_.15} parent=0 // pred_region
    _
  $region17: #{_lambda_.15} parent=0 // pred_fallthru
    _
  %v17 = vld [vmem:[%s0] sm:$0xf]
  %v18 = vld [vmem:[%s0 + $0x4] sm:$0xf]
  %v19 = vld [vmem:[%s0 + $0x8] sm:$0xf]
  %v20 = vld [vmem:[%s0 + $0xc] sm:$0xf]
  %v21 = vld [vmem:[%s0 + $0x10] sm:$0xf]
  %v22 = vld [vmem:[%s0 + $0x14] sm:$0xf]
  %v23 = vld [vmem:[%s0 + $0x18] sm:$0xf]
  %v24 = vld [vmem:[%s0 + $0x1c] sm:$0xf]
  %v25 = vld [vmem:[%s0 + $0x20] sm:$0xf]
  %v26 = vld [vmem:[%s0 + $0x24] sm:$0xf]
  %v27 = vld [vmem:[%s0 + $0x28] sm:$0xf]
  %v28 = vld [vmem:[%s0 + $0x2c] sm:$0xf]
  %v29 = vld [vmem:[%s0 + $0x30] sm:$0xf]
  %v30 = vld [vmem:[%s0 + $0x34] sm:$0xf]
  %v31 = vld [vmem:[%s0 + $0x38] sm:$0xf]
  %v32 = vld [vmem:[%s0 + $0x3c] sm:$0xf]
  %v33 = vunpack.c.l.bf16 %v17
  %v34 = vunpack.c.l.bf16 %v18
  %v35 = vunpack.c.l.bf16 %v19
  %v36 = vunpack.c.l.bf16 %v20
  %v37 = vunpack.c.l.bf16 %v21
  %v38 = vunpack.c.l.bf16 %v22
  %v39 = vunpack.c.l.bf16 %v23
  %v40 = vunpack.c.l.bf16 %v24
  %v41 = vunpack.c.l.bf16 %v25
  %v42 = vunpack.c.l.bf16 %v26
  %v43 = vunpack.c.l.bf16 %v27
  %v44 = vunpack.c.l.bf16 %v28
  %v45 = vunpack.c.l.bf16 %v29
  %v46 = vunpack.c.l.bf16 %v30
  %v47 = vunpack.c.l.bf16 %v31
  %v48 = vunpack.c.l.bf16 %v32
  %v49 = vld [vmem:[%s1] sm:$0x1]
  %v51 = vlaneseq
  %v52 = vshrl.u32 %v51, 7
  %v53 = vsub.s32 0, %v52
  %v54 = vrot.slane %v49, %v53
  %v56 = vmul.f32 %v33, %v54
  %v57 = vmul.f32 %v34, %v54
  %v58 = vmul.f32 %v35, %v54
  %v59 = vmul.f32 %v36, %v54
  %v60 = vmul.f32 %v37, %v54
  %v61 = vmul.f32 %v38, %v54
  %v62 = vmul.f32 %v39, %v54
  %v63 = vmul.f32 %v40, %v54
  %v64 = vmul.f32 %v41, %v54
  %v65 = vmul.f32 %v42, %v54
  %v66 = vmul.f32 %v43, %v54
  %v67 = vmul.f32 %v44, %v54
  %v68 = vmul.f32 %v45, %v54
  %v69 = vmul.f32 %v46, %v54
  %v70 = vmul.f32 %v47, %v54
  %v71 = vmul.f32 %v48, %v54
  %v72 = vld [vmem:[%s2] sm:$0x1]
  %v74 = vlaneseq
  %v75 = vshrl.u32 %v74, 7
  %v76 = vsub.s32 0, %v75
  %v77 = vrot.slane %v72, %v76
  %v79 = vadd.f32 %v56, %v77
  %v80 = vadd.f32 %v57, %v77
  %v81 = vadd.f32 %v58, %v77
  %v82 = vadd.f32 %v59, %v77
  %v83 = vadd.f32 %v60, %v77
  %v84 = vadd.f32 %v61, %v77
  %v85 = vadd.f32 %v62, %v77
  %v86 = vadd.f32 %v63, %v77
  %v87 = vadd.f32 %v64, %v77
  %v88 = vadd.f32 %v65, %v77
  %v89 = vadd.f32 %v66, %v77
  %v90 = vadd.f32 %v67, %v77
  %v91 = vadd.f32 %v68, %v77
  %v92 = vadd.f32 %v69, %v77
  %v93 = vadd.f32 %v70, %v77
  %v94 = vadd.f32 %v71, %v77
  %v95 = vld [vmem:[%s3] sm:$0xf]
  %v96 = vld [vmem:[%s3 + $0x4] sm:$0xf]
  %v97 = vld [vmem:[%s3 + $0x8] sm:$0xf]
  %v98 = vld [vmem:[%s3 + $0xc] sm:$0xf]
  %v99 = vld [vmem:[%s3 + $0x10] sm:$0xf]
  %v100 = vld [vmem:[%s3 + $0x14] sm:$0xf]
  %v101 = vld [vmem:[%s3 + $0x18] sm:$0xf]
  %v102 = vld [vmem:[%s3 + $0x1c] sm:$0xf]
  %v103 = vld [vmem:[%s3 + $0x20] sm:$0xf]
  %v104 = vld [vmem:[%s3 + $0x24] sm:$0xf]
  %v105 = vld [vmem:[%s3 + $0x28] sm:$0xf]
  %v106 = vld [vmem:[%s3 + $0x2c] sm:$0xf]
  %v107 = vld [vmem:[%s3 + $0x30] sm:$0xf]
  %v108 = vld [vmem:[%s3 + $0x34] sm:$0xf]
  %v109 = vld [vmem:[%s3 + $0x38] sm:$0xf]
  %v110 = vld [vmem:[%s3 + $0x3c] sm:$0xf]
  %v111 = vunpack.c.l.bf16 %v95
  %v112 = vunpack.c.l.bf16 %v96
  %v113 = vunpack.c.l.bf16 %v97
  %v114 = vunpack.c.l.bf16 %v98
  %v115 = vunpack.c.l.bf16 %v99
  %v116 = vunpack.c.l.bf16 %v100
  %v117 = vunpack.c.l.bf16 %v101
  %v118 = vunpack.c.l.bf16 %v102
  %v119 = vunpack.c.l.bf16 %v103
  %v120 = vunpack.c.l.bf16 %v104
  %v121 = vunpack.c.l.bf16 %v105
  %v122 = vunpack.c.l.bf16 %v106
  %v123 = vunpack.c.l.bf16 %v107
  %v124 = vunpack.c.l.bf16 %v108
  %v125 = vunpack.c.l.bf16 %v109
  %v126 = vunpack.c.l.bf16 %v110
  %v127 = vadd.f32 %v79, %v111
  %v128 = vadd.f32 %v80, %v112
  %v129 = vadd.f32 %v81, %v113
  %v130 = vadd.f32 %v82, %v114
  %v131 = vadd.f32 %v83, %v115
  %v132 = vadd.f32 %v84, %v116
  %v133 = vadd.f32 %v85, %v117
  %v134 = vadd.f32 %v86, %v118
  %v135 = vadd.f32 %v87, %v119
  %v136 = vadd.f32 %v88, %v120
  %v137 = vadd.f32 %v89, %v121
  %v138 = vadd.f32 %v90, %v122
  %v139 = vadd.f32 %v91, %v123
  %v140 = vadd.f32 %v92, %v124
  %v141 = vadd.f32 %v93, %v125
  %v142 = vadd.f32 %v94, %v126
  %v143 = vmax.f32 %v127, 0.0
  %v144 = vmax.f32 %v128, 0.0
  %v145 = vmax.f32 %v129, 0.0
  %v146 = vmax.f32 %v130, 0.0
  %v147 = vmax.f32 %v131, 0.0
  %v148 = vmax.f32 %v132, 0.0
  %v149 = vmax.f32 %v133, 0.0
  %v150 = vmax.f32 %v134, 0.0
  %v151 = vmax.f32 %v135, 0.0
  %v152 = vmax.f32 %v136, 0.0
  %v153 = vmax.f32 %v137, 0.0
  %v154 = vmax.f32 %v138, 0.0
  %v155 = vmax.f32 %v139, 0.0
  %v156 = vmax.f32 %v140, 0.0
  %v157 = vmax.f32 %v141, 0.0
  %v158 = vmax.f32 %v142, 0.0
  %vm159 = vcmask 64512
  %160 = vst.msk [vmem:[%s4] sm:$0xff] %vm159, %v143
  %161 = vst.msk [vmem:[%s4 + $0x8] sm:$0xff] %vm159, %v144
  %162 = vst.msk [vmem:[%s4 + $0x10] sm:$0xff] %vm159, %v145
  %163 = vst.msk [vmem:[%s4 + $0x18] sm:$0xff] %vm159, %v146
  %164 = vst.msk [vmem:[%s4 + $0x20] sm:$0xff] %vm159, %v147
  %165 = vst.msk [vmem:[%s4 + $0x28] sm:$0xff] %vm159, %v148
  %166 = vst.msk [vmem:[%s4 + $0x30] sm:$0xff] %vm159, %v149
  %167 = vst.msk [vmem:[%s4 + $0x38] sm:$0xff] %vm159, %v150
  %168 = vst.msk [vmem:[%s4 + $0x40] sm:$0xff] %vm159, %v151
  %169 = vst.msk [vmem:[%s4 + $0x48] sm:$0xff] %vm159, %v152
  %170 = vst.msk [vmem:[%s4 + $0x50] sm:$0xff] %vm159, %v153
  %171 = vst.msk [vmem:[%s4 + $0x58] sm:$0xff] %vm159, %v154
  %172 = vst.msk [vmem:[%s4 + $0x60] sm:$0xff] %vm159, %v155
  %173 = vst.msk [vmem:[%s4 + $0x68] sm:$0xff] %vm159, %v156
  %174 = vst.msk [vmem:[%s4 + $0x70] sm:$0xff] %vm159, %v157
  %175 = vst.msk [vmem:[%s4 + $0x78] sm:$0xff] %vm159, %v158
  // Predicated region
  $region18: #{_lambda_.15} parent=0 // pred_check
    _
  $region19: #{_lambda_.15} parent=0 // pred_check_branch
    %177 = sbr.rel (0) target = $region21
  $region20: #{_lambda_.15} parent=0 // pred_region
    _
  $region21: #{_lambda_.15} parent=0 // pred_fallthru
    _
  // Predicated region
  $region22: #{_lambda_.15} parent=0 // pred_check
    _
  $region23: #{_lambda_.15} parent=0 // pred_check_branch
    %179 = sbr.rel (0) target = $region25
  $region24: #{_lambda_.15} parent=0 // pred_region
    _
  $region25: #{_lambda_.15} parent=0 // pred_fallthru
    _

// kernel: _lambda_.12
$region0: #{_lambda_.12}
  #allocation0 [shape = 'u32[]', space=smem, size = 0x4, offset = 0x4, fixed_abs, tag = 'smem constant byte address 0x4 - core index']
  #allocation1 [shape = 'u32[144,128]{1,0:T(1,128)}', space=vmem, size = 0x12000, scoped, tag = 'internal scratch']
  %s0 = inlined_call_operand.vmem [shape: bf16[2,10,10,8], index: 0, kind: input, shape index: {}]
  %s1 = inlined_call_operand.vmem [shape: bf16[9,8,8], index: 1, kind: input, shape index: {}]
  %s2 = inlined_call_operand.vmem [shape: bf16[2,64,8], index: 2, kind: output, shape index: {0}]
  %s3 = inlined_call_operand.vmem [shape: f32[2,1,8], index: 3, kind: output, shape index: {1}]
  %s4 = inlined_call_operand.vmem [shape: f32[2,1,8], index: 4, kind: output, shape index: {2}]
  %5 = xla_tuple %s2, %s3, %s4
  %s6 = sld [smem:[#allocation0]]
  $region57: #{_lambda_.12} parent=0
    _
  %s8 = ssub.s32 1, %s6
  %s9 = scalar_select 0, %s8, %s6
  loop: start=0, step=1, limit=4
  $region2: #{_lambda_.12} parent=0 // loop_pre_header
    _
  $region3: #{_lambda_.12} parent=0 // loop_header
    %s11 = sphi 0, %s15
    %p12 = scmp.ge.s32.totalorder %s11, 4
    %s21 = sphi 0, %s23
    %s24 = sphi 0, %s21
    %s25 = sphi 0, %s24
    %s41 = sphi 0, %s25
    %s45 = sphi 0, %s45
    %s47 = sphi 0, %s45
    %s48 = sphi 0, %s47
    %s62 = sphi 0, %s48
    %s68 = sphi 0, %s70
    %s71 = sphi 0, %s68
    %s72 = sphi 0, %s71
    %s88 = sphi 0, %s72
    %s94 = sphi 0, %s96
    %s97 = sphi 0, %s94
    %s98 = sphi 0, %s97
    %s114 = sphi 0, %s98
    %s120 = sphi 0, %s122
    %s123 = sphi 0, %s120
    %s124 = sphi 0, %s123
    %s140 = sphi 0, %s124
  $region4: #{_lambda_.12} parent=0 // loop_header_branch
    %14 = sbr.rel (%p12) target = $region8
  $region5: #{_lambda_.12} parent=0 // loop_body
    %s16 = ssub.s32 %s11, 1
    %s17 = ssub.s32 %s11, 2
    %s18 = sadd.s32 %s11, 1
    %s19 = ssub.s32 %s11, %s18
    %p20 = scmp.eq.s32.totalorder %s19, 0
    %s22 = sadd.s32 %s21, 1
    %s23 = scalar_select %p20, %s21, %s22
    %p26 = pneg %p20
    %p27 = scmp.eq.s32.totalorder %s11, 1
    %p28 = por %p26, %p27
    %p29 = scmp.ne.s32.totalorder %s21, %s24
    %p30 = scmp.eq.s32.totalorder %s11, 0
    %p31 = por %p29, %p30
    %p32 = scmp.ne.s32.totalorder %s21, %s24
    %p33 = scmp.eq.s32.totalorder %s16, 1
    %p34 = por %p32, %p33
    %p35 = scmp.ne.s32.totalorder %s24, %s25
    %p36 = scmp.eq.s32.totalorder %s16, 0
    %p37 = por %p35, %p36
    %p38 = scmp.ne.s32.totalorder %s24, %s25
    %p39 = scmp.eq.s32.totalorder %s17, 1
    %p40 = por %p38, %p39
    %p42 = scmp.ne.s32.totalorder %s25, %s41
    %p43 = scmp.eq.s32.totalorder %s17, 0
    %p44 = por %p42, %p43
    %s46 = sadd.s32 %s45, 1
    %p49 = scmp.eq.s32.totalorder %s11, 1
    %p50 = scmp.ne.s32.totalorder %s45, %s47
    %p51 = scmp.eq.s32.totalorder %s11, 0
    %p52 = por %p50, %p51
    %p53 = scmp.ne.s32.totalorder %s45, %s47
    %p54 = scmp.eq.s32.totalorder %s16, 1
    %p55 = por %p53, %p54
    %p56 = scmp.ne.s32.totalorder %s47, %s48
    %p57 = scmp.eq.s32.totalorder %s16, 0
    %p58 = por %p56, %p57
    %p59 = scmp.ne.s32.totalorder %s47, %s48
    %p60 = scmp.eq.s32.totalorder %s17, 1
    %p61 = por %p59, %p60
    %p63 = scmp.ne.s32.totalorder %s48, %s62
    %p64 = scmp.eq.s32.totalorder %s17, 0
    %p65 = por %p63, %p64
    %s66 = ssub.s32 %s11, %s18
    %p67 = scmp.eq.s32.totalorder %s66, 0
    %s69 = sadd.s32 %s68, 1
    %s70 = scalar_select %p67, %s68, %s69
    %p73 = pneg %p67
    %p74 = scmp.eq.s32.totalorder %s11, 1
    %p75 = por %p73, %p74
    %p76 = scmp.ne.s32.totalorder %s68, %s71
    %p77 = scmp.eq.s32.totalorder %s11, 0
    %p78 = por %p76, %p77
    %p79 = scmp.ne.s32.totalorder %s68, %s71
    %p80 = scmp.eq.s32.totalorder %s16, 1
    %p81 = por %p79, %p80
    %p82 = scmp.ne.s32.totalorder %s71, %s72
    %p83 = scmp.eq.s32.totalorder %s16, 0
    %p84 = por %p82, %p83
    %p85 = scmp.ne.s32.totalorder %s71, %s72
    %p86 = scmp.eq.s32.totalorder %s17, 1
    %p87 = por %p85, %p86
    %p89 = scmp.ne.s32.totalorder %s72, %s88
    %p90 = scmp.eq.s32.totalorder %s17, 0
    %p91 = por %p89, %p90
    %s92 = ssub.s32 %s11, %s18
    %p93 = scmp.eq.s32.totalorder %s92, 0
    %s95 = sadd.s32 %s94, 1
    %s96 = scalar_select %p93, %s94, %s95
    %p99 = pneg %p93
    %p100 = scmp.eq.s32.totalorder %s11, 1
    %p101 = por %p99, %p100
    %p102 = scmp.ne.s32.totalorder %s94, %s97
    %p103 = scmp.eq.s32.totalorder %s11, 0
    %p104 = por %p102, %p103
    %p105 = scmp.ne.s32.totalorder %s94, %s97
    %p106 = scmp.eq.s32.totalorder %s16, 1
    %p107 = por %p105, %p106
    %p108 = scmp.ne.s32.totalorder %s97, %s98
    %p109 = scmp.eq.s32.totalorder %s16, 0
    %p110 = por %p108, %p109
    %p111 = scmp.ne.s32.totalorder %s97, %s98
    %p112 = scmp.eq.s32.totalorder %s17, 1
    %p113 = por %p111, %p112
    %p115 = scmp.ne.s32.totalorder %s98, %s114
    %p116 = scmp.eq.s32.totalorder %s17, 0
    %p117 = por %p115, %p116
    %s118 = ssub.s32 %s11, %s18
    %p119 = scmp.eq.s32.totalorder %s118, 0
    %s121 = sadd.s32 %s120, 1
    %s122 = scalar_select %p119, %s120, %s121
    %p125 = pneg %p119
    %p126 = scmp.eq.s32.totalorder %s11, 1
    %p127 = por %p125, %p126
    %p128 = scmp.ne.s32.totalorder %s120, %s123
    %p129 = scmp.eq.s32.totalorder %s11, 0
    %p130 = por %p128, %p129
    %p131 = scmp.ne.s32.totalorder %s120, %s123
    %p132 = scmp.eq.s32.totalorder %s16, 1
    %p133 = por %p131, %p132
    %p134 = scmp.ne.s32.totalorder %s123, %s124
    %p135 = scmp.eq.s32.totalorder %s16, 0
    %p136 = por %p134, %p135
    %p137 = scmp.ne.s32.totalorder %s123, %s124
    %p138 = scmp.eq.s32.totalorder %s17, 1
    %p139 = por %p137, %p138
    %p141 = scmp.ne.s32.totalorder %s124, %s140
    %p142 = scmp.eq.s32.totalorder %s17, 0
    %p143 = por %p141, %p142
    %p144 = scmp.le.s32.totalorder 1, %s11
    %p145 = scmp.lt.s32.totalorder %s11, 3
    %p146 = pnand %p144, %p145
    %p147 = pneg %p146
    // Predicated region
    $region9: #{_lambda_.12} parent=5 // pred_check
      _
    $region10: #{_lambda_.12} parent=5 // pred_check_branch
      %149 = sbr.rel (%p146) target = $region12
    $region11: #{_lambda_.12} parent=5 // pred_region
      %s150 = ssub.s32 %s11, 1
      // Predicated region
      $region13: #{_lambda_.12} parent=11 // pred_check
        %p151 = pneg %p58
      $region14: #{_lambda_.12} parent=11 // pred_check_branch
        %153 = sbr.rel (%p151) target = $region16
      $region15: #{_lambda_.12} parent=11 // pred_region
        _
      $region16: #{_lambda_.12} parent=11 // pred_fallthru
        _
    $region12: #{_lambda_.12} parent=5 // pred_fallthru
      _
    %p154 = scmp.lt.s32.totalorder %s11, 2
    // Predicated region
    $region17: #{_lambda_.12} parent=5 // pred_check
      %p155 = pneg %p154
    $region18: #{_lambda_.12} parent=5 // pred_check_branch
      %157 = sbr.rel (%p155) target = $region20
    $region19: #{_lambda_.12} parent=5 // pred_region
      // Predicated region
      $region21: #{_lambda_.12} parent=19 // pred_check
        %p158 = pneg %p31
      $region22: #{_lambda_.12} parent=19 // pred_check_branch
        %160 = sbr.rel (%p158) target = $region24
      $region23: #{_lambda_.12} parent=19 // pred_region
        %p161 = scmp.lt.s32.totalorder %s11, 1
        %s162 = scalar_select %p161, %s11, 1
        %s163 = smul.addr %s162, 20
        %s164 = smul.addr %s163, 4
        %s165 = scalar_lea.vmem %s0, %s164
      $region24: #{_lambda_.12} parent=19 // pred_fallthru
        _
    $region20: #{_lambda_.12} parent=5 // pred_fallthru
      _
    %p166 = scmp.le.s32.totalorder 1, %s11
    %p167 = scmp.lt.s32.totalorder %s11, 3
    %p168 = pnand %p166, %p167
    %p169 = pneg %p168
    // Predicated region
    $region25: #{_lambda_.12} parent=5 // pred_check
      _
    $region26: #{_lambda_.12} parent=5 // pred_check_branch
      %171 = sbr.rel (%p168) target = $region28
    $region27: #{_lambda_.12} parent=5 // pred_region
      %s172 = ssub.s32 %s11, 1
      %p173 = scmp.lt.s32.totalorder %s16, 1
      %s174 = scalar_select %p173, %s16, 1
      %s175 = smul.addr %s174, 20
      %s176 = smul.addr %s175, 4
      %s177 = scalar_lea.vmem %s0, %s176
      %p178 = pneg %p37
      %p179 = pneg %p34
      %p180 = pneg %p58
      %p181 = pneg %p55
      %p182 = pneg %p84
      %p183 = pneg %p81
      %p184 = scmp.lt.s32.totalorder %s16, 1
      %s185 = scalar_select %p184, %s16, 1
      %s186 = smul.addr %s185, 8
      %s187 = smul.addr %s186, 4
      %s188 = scalar_lea.vmem %s2, %s187
      %p189 = pneg %p110
      %p190 = pneg %p107
      %p191 = scmp.lt.s32.totalorder %s16, 1
      %s192 = scalar_select %p191, %s16, 1
      %s193 = scalar_lea.vmem %s3, %s192
      %p194 = pneg %p136
      %p195 = pneg %p133
      %p196 = scmp.lt.s32.totalorder %s16, 1
      %s197 = scalar_select %p196, %s16, 1
      %s198 = scalar_lea.vmem %s4, %s197
      %p199 = scmp.lt.s32.totalorder %s16, 1
      %s200 = scalar_select %p199, %s16, 1
      %s201 = smul.addr %s200, 20
      %s202 = smul.addr %s201, 4
      %s203 = scalar_lea.vmem %s0, %s202
      %p204 = scmp.lt.s32.totalorder %s16, 1
      %s205 = scalar_select %p204, %s16, 1
      %s206 = smul.addr %s205, 8
      %s207 = smul.addr %s206, 4
      %s208 = scalar_lea.vmem %s2, %s207
      %p209 = scmp.lt.s32.totalorder %s16, 1
      %s210 = scalar_select %p209, %s16, 1
      %s211 = scalar_lea.vmem %s3, %s210
      %p212 = scmp.lt.s32.totalorder %s16, 1
      %s213 = scalar_select %p212, %s16, 1
      %s214 = scalar_lea.vmem %s4, %s213
      %v216 = vld [vmem:[%s203] sm:$0xf]
      %v217 = vld [vmem:[%s203 + $0x4] sm:$0x1]
      %v218 = vld [vmem:[%s203 + $0x8] sm:$0xf]
      %v219 = vld [vmem:[%s203 + $0xc] sm:$0x1]
      %v220 = vld [vmem:[%s203 + $0x10] sm:$0xf]
      %v221 = vld [vmem:[%s203 + $0x14] sm:$0x1]
      %v222 = vld [vmem:[%s203 + $0x18] sm:$0xf]
      %v223 = vld [vmem:[%s203 + $0x1c] sm:$0x1]
      %v224 = vld [vmem:[%s203 + $0x20] sm:$0xf]
      %v225 = vld [vmem:[%s203 + $0x24] sm:$0x1]
      %v226 = vld [vmem:[%s203 + $0x28] sm:$0xf]
      %v227 = vld [vmem:[%s203 + $0x2c] sm:$0x1]
      %v228 = vld [vmem:[%s203 + $0x30] sm:$0xf]
      %v229 = vld [vmem:[%s203 + $0x34] sm:$0x1]
      %v230 = vld [vmem:[%s203 + $0x38] sm:$0xf]
      %v231 = vld [vmem:[%s203 + $0x3c] sm:$0x1]
      %v232 = vld [vmem:[%s203 + $0x40] sm:$0xf]
      %v233 = vld [vmem:[%s203 + $0x44] sm:$0x1]
      %v234 = vld [vmem:[%s203 + $0x48] sm:$0xf]
      %v235 = vld [vmem:[%s203 + $0x4c] sm:$0x1]
      %v236 = vunpack.c.l.bf16 %v216
      %v237 = vunpack.c.l.bf16 %v217
      %v238 = vunpack.c.l.bf16 %v218
      %v239 = vunpack.c.l.bf16 %v219
      %v240 = vunpack.c.l.bf16 %v220
      %v241 = vunpack.c.l.bf16 %v221
      %v242 = vunpack.c.l.bf16 %v222
      %v243 = vunpack.c.l.bf16 %v223
      %v244 = vunpack.c.l.bf16 %v224
      %v245 = vunpack.c.l.bf16 %v225
      %v246 = vunpack.c.l.bf16 %v226
      %v247 = vunpack.c.l.bf16 %v227
      %v248 = vunpack.c.l.bf16 %v228
      %v249 = vunpack.c.l.bf16 %v229
      %v250 = vunpack.c.l.bf16 %v230
      %v251 = vunpack.c.l.bf16 %v231
      %v252 = vunpack.c.l.bf16 %v232
      %v253 = vunpack.c.l.bf16 %v233
      %v254 = vunpack.c.l.bf16 %v234
      %v255 = vunpack.c.l.bf16 %v235
      %v256 = vpack.c.bf16 %v238, %v236
      %v257 = vpack.c.bf16 %v242, %v240
      %v258 = vpack.c.bf16 %v246, %v244
      %v259 = vpack.c.bf16 %v250, %v248
      %v260 = vld [vmem:[%s1] sm:$0xf]
      %vm277 = vcmask 1046528
      %v278 = vrot.slane %v236, 1
      %v279 = vrot.slane %v237, 1
      %v280 = vsel %vm277, %v278, %v279
      %v281 = vrot.slane %v238, 1
      %v282 = vrot.slane %v239, 1
      %v283 = vsel %vm277, %v281, %v282
      %v284 = vrot.slane %v240, 1
      %v285 = vrot.slane %v241, 1
      %v286 = vsel %vm277, %v284, %v285
      %v287 = vrot.slane %v242, 1
      %v288 = vrot.slane %v243, 1
      %v289 = vsel %vm277, %v287, %v288
      %v290 = vrot.slane %v244, 1
      %v291 = vrot.slane %v245, 1
      %v292 = vsel %vm277, %v290, %v291
      %v293 = vrot.slane %v246, 1
      %v294 = vrot.slane %v247, 1
      %v295 = vsel %vm277, %v293, %v294
      %v296 = vrot.slane %v248, 1
      %v297 = vrot.slane %v249, 1
      %v298 = vsel %vm277, %v296, %v297
      %v299 = vrot.slane %v250, 1
      %v300 = vrot.slane %v251, 1
      %v301 = vsel %vm277, %v299, %v300
      %v310 = vpack.c.bf16 %v283, %v280
      %v311 = vpack.c.bf16 %v289, %v286
      %v312 = vpack.c.bf16 %v295, %v292
      %v313 = vpack.c.bf16 %v301, %v298
      %s314 = scalar_lea.vmem %s1, 4
      %v315 = vld [vmem:[%s314] sm:$0xf]
      %vm316 = vcmask 64512
      %v318 = vsel %vm316, %v310, 0
      %v321 = vsel %vm316, %v311, 0
      %v324 = vsel %vm316, %v312, 0
      %v327 = vsel %vm316, %v313, 0
      %vm329 = vcmask 1043456
      %v331 = vsel %vm329, %v315, 0
      %333 = vmatprep.subr.bf16.mxu0 0
      %334 = vmatpush1.bf16.msra.mxu0 0
      %335 = vmatprep.subr.bf16.mxu0 0
      %336 = vmatpush1.bf16.msra.mxu0 0
      %337 = vmatprep.subr.bf16.mxu0 0
      %338 = vmatpush1.bf16.msra.mxu0 0
      %339 = vmatprep.subr.bf16.mxu0 0
      %340 = vmatpush1.bf16.msra.mxu0 0
      %341 = vmatprep.subr.bf16.mxu0 0
      %342 = vmatpush1.bf16.msra.mxu0 0
      %343 = vmatprep.subr.bf16.mxu0 0
      %344 = vmatpush1.bf16.msra.mxu0 0
      %345 = vmatprep.subr.bf16.mxu0 0
      %346 = vmatpush1.bf16.msra.mxu0 0
      %347 = vmatprep.subr.bf16.mxu0 0
      %348 = vmatpush1.bf16.msra.mxu0 %v331
      %349 = vmatprep.subr.bf16.mxu0 0
      %350 = vmatpush2.bf16.msra.mxu0 0
      %351 = vmatprep.subr.bf16.mxu0 0
      %352 = vmatpush2.bf16.msra.mxu0 0
      %353 = vmatprep.subr.bf16.mxu0 0
      %354 = vmatpush2.bf16.msra.mxu0 0
      %355 = vmatprep.subr.bf16.mxu0 0
      %356 = vmatpush2.bf16.msra.mxu0 0
      %357 = vmatprep.subr.bf16.mxu0 0
      %358 = vmatpush2.bf16.msra.mxu0 0
      %359 = vmatprep.subr.bf16.mxu0 0
      %360 = vmatpush2.bf16.msra.mxu0 0
      %361 = vmatprep.subr.bf16.mxu0 0
      %362 = vmatpush2.bf16.msra.mxu0 0
      %363 = vmatprep.subr.bf16.mxu0 0
      %364 = vmatpush2.bf16.msra.mxu0 0
      %365 = vmatprep.mubr.bf16.mxu0 0
      %366 = vmatmul.mubr.bf16.gmra.mxu0 %v318
      %v367 = vpop.f32.mrf.mxu0
      %v368 = vadd.f32 0.0, %v367
      %v369 = vpop.f32.mrf.mxu0
      %v370 = vpop.f32.mrf.mxu0
      %v371 = vadd.f32 0.0, %v370
      %v372 = vpop.f32.mrf.mxu0
      %373 = vmatprep.mubr.bf16.mxu0 0
      %374 = vmatmul.mubr.bf16.gmra.mxu0 %v321
      %v375 = vpop.f32.mrf.mxu0
      %v376 = vadd.f32 0.0, %v375
      %v377 = vpop.f32.mrf.mxu0
      %v378 = vpop.f32.mrf.mxu0
      %v379 = vadd.f32 0.0, %v378
      %v380 = vpop.f32.mrf.mxu0
      %381 = vmatprep.mubr.bf16.mxu0 0
      %382 = vmatmul.mubr.bf16.gmra.mxu0 %v324
      %v383 = vpop.f32.mrf.mxu0
      %v384 = vadd.f32 0.0, %v383
      %v385 = vpop.f32.mrf.mxu0
      %v386 = vpop.f32.mrf.mxu0
      %v387 = vadd.f32 0.0, %v386
      %v388 = vpop.f32.mrf.mxu0
      %389 = vmatprep.mubr.bf16.mxu0 0
      %390 = vmatmul.mubr.bf16.gmra.mxu0 %v327
      %v391 = vpop.f32.mrf.mxu0
      %v392 = vadd.f32 0.0, %v391
      %v393 = vpop.f32.mrf.mxu0
      %v394 = vpop.f32.mrf.mxu0
      %v395 = vadd.f32 0.0, %v394
      %v396 = vpop.f32.mrf.mxu0
      %397 = vdwg.mxu0
      %v399 = vsel %vm316, %v256, 0
      %v402 = vsel %vm316, %v257, 0
      %v405 = vsel %vm316, %v258, 0
      %v408 = vsel %vm316, %v259, 0
      %v411 = vsel %vm329, %v260, 0
      %413 = vmatprep.subr.bf16.mxu0 0
      %414 = vmatpush1.bf16.msra.mxu0 0
      %415 = vmatprep.subr.bf16.mxu0 0
      %416 = vmatpush1.bf16.msra.mxu0 0
      %417 = vmatprep.subr.bf16.mxu0 0
      %418 = vmatpush1.bf16.msra.mxu0 0
      %419 = vmatprep.subr.bf16.mxu0 0
      %420 = vmatpush1.bf16.msra.mxu0 0
      %421 = vmatprep.subr.bf16.mxu0 0
      %422 = vmatpush1.bf16.msra.mxu0 0
      %423 = vmatprep.subr.bf16.mxu0 0
      %424 = vmatpush1.bf16.msra.mxu0 0
      %425 = vmatprep.subr.bf16.mxu0 0
      %426 = vmatpush1.bf16.msra.mxu0 0
      %427 = vmatprep.subr.bf16.mxu0 0
      %428 = vmatpush1.bf16.msra.mxu0 %v411
      %429 = vmatprep.subr.bf16.mxu0 0
      %430 = vmatpush2.bf16.msra.mxu0 0
      %431 = vmatprep.subr.bf16.mxu0 0
      %432 = vmatpush2.bf16.msra.mxu0 0
      %433 = vmatprep.subr.bf16.mxu0 0
      %434 = vmatpush2.bf16.msra.mxu0 0
      %435 = vmatprep.subr.bf16.mxu0 0
      %436 = vmatpush2.bf16.msra.mxu0 0
      %437 = vmatprep.subr.bf16.mxu0 0
      %438 = vmatpush2.bf16.msra.mxu0 0
      %439 = vmatprep.subr.bf16.mxu0 0
      %440 = vmatpush2.bf16.msra.mxu0 0
      %441 = vmatprep.subr.bf16.mxu0 0
      %442 = vmatpush2.bf16.msra.mxu0 0
      %443 = vmatprep.subr.bf16.mxu0 0
      %444 = vmatpush2.bf16.msra.mxu0 0
      %445 = vmatprep.mubr.bf16.mxu0 0
      %446 = vmatmul.mubr.bf16.gmra.mxu0 %v399
      %v447 = vpop.f32.mrf.mxu0
      %v448 = vadd.f32 %v368, %v447
      %v449 = vpop.f32.mrf.mxu0
      %v450 = vpop.f32.mrf.mxu0
      %v451 = vadd.f32 %v371, %v450
      %v452 = vpop.f32.mrf.mxu0
      %453 = vmatprep.mubr.bf16.mxu0 0
      %454 = vmatmul.mubr.bf16.gmra.mxu0 %v402
      %v455 = vpop.f32.mrf.mxu0
      %v456 = vadd.f32 %v376, %v455
      %v457 = vpop.f32.mrf.mxu0
      %v458 = vpop.f32.mrf.mxu0
      %v459 = vadd.f32 %v379, %v458
      %v460 = vpop.f32.mrf.mxu0
      %461 = vmatprep.mubr.bf16.mxu0 0
      %462 = vmatmul.mubr.bf16.gmra.mxu0 %v405
      %v463 = vpop.f32.mrf.mxu0
      %v464 = vadd.f32 %v384, %v463
      %v465 = vpop.f32.mrf.mxu0
      %v466 = vpop.f32.mrf.mxu0
      %v467 = vadd.f32 %v387, %v466
      %v468 = vpop.f32.mrf.mxu0
      %469 = vmatprep.mubr.bf16.mxu0 0
      %470 = vmatmul.mubr.bf16.gmra.mxu0 %v408
      %v471 = vpop.f32.mrf.mxu0
      %v472 = vadd.f32 %v392, %v471
      %v473 = vpop.f32.mrf.mxu0
      %v474 = vpop.f32.mrf.mxu0
      %v475 = vadd.f32 %v395, %v474
      %v476 = vpop.f32.mrf.mxu0
      %477 = vdwg.mxu0
      %vm478 = vcmask 1045504
      %v479 = vrot.slane %v236, 2
      %v480 = vrot.slane %v237, 2
      %v481 = vsel %vm478, %v479, %v480
      %v482 = vrot.slane %v238, 2
      %v483 = vrot.slane %v239, 2
      %v484 = vsel %vm478, %v482, %v483
      %v485 = vrot.slane %v240, 2
      %v486 = vrot.slane %v241, 2
      %v487 = vsel %vm478, %v485, %v486
      %v488 = vrot.slane %v242, 2
      %v489 = vrot.slane %v243, 2
      %v490 = vsel %vm478, %v488, %v489
      %v491 = vrot.slane %v244, 2
      %v492 = vrot.slane %v245, 2
      %v493 = vsel %vm478, %v491, %v492
      %v494 = vrot.slane %v246, 2
      %v495 = vrot.slane %v247, 2
      %v496 = vsel %vm478, %v494, %v495
      %v497 = vrot.slane %v248, 2
      %v498 = vrot.slane %v249, 2
      %v499 = vsel %vm478, %v497, %v498
      %v500 = vrot.slane %v250, 2
      %v501 = vrot.slane %v251, 2
      %v502 = vsel %vm478, %v500, %v501
      %v511 = vpack.c.bf16 %v484, %v481
      %v512 = vpack.c.bf16 %v490, %v487
      %v513 = vpack.c.bf16 %v496, %v493
      %v514 = vpack.c.bf16 %v502, %v499
      %s515 = scalar_lea.vmem %s1, 8
      %v516 = vld [vmem:[%s515] sm:$0xf]
      %v518 = vsel %vm316, %v511, 0
      %v521 = vsel %vm316, %v512, 0
      %v524 = vsel %vm316, %v513, 0
      %v527 = vsel %vm316, %v514, 0
      %v530 = vsel %vm329, %v516, 0
      %532 = vmatprep.subr.bf16.mxu0 0
      %533 = vmatpush1.bf16.msra.mxu0 0
      %534 = vmatprep.subr.bf16.mxu0 0
      %535 = vmatpush1.bf16.msra.mxu0 0
      %536 = vmatprep.subr.bf16.mxu0 0
      %537 = vmatpush1.bf16.msra.mxu0 0
      %538 = vmatprep.subr.bf16.mxu0 0
      %539 = vmatpush1.bf16.msra.mxu0 0
      %540 = vmatprep.subr.bf16.mxu0 0
      %541 = vmatpush1.bf16.msra.mxu0 0
      %542 = vmatprep.subr.bf16.mxu0 0
      %543 = vmatpush1.bf16.msra.mxu0 0
      %544 = vmatprep.subr.bf16.mxu0 0
      %545 = vmatpush1.bf16.msra.mxu0 0
      %546 = vmatprep.subr.bf16.mxu0 0
      %547 = vmatpush1.bf16.msra.mxu0 %v530
      %548 = vmatprep.subr.bf16.mxu0 0
      %549 = vmatpush2.bf16.msra.mxu0 0
      %550 = vmatprep.subr.bf16.mxu0 0
      %551 = vmatpush2.bf16.msra.mxu0 0
      %552 = vmatprep.subr.bf16.mxu0 0
      %553 = vmatpush2.bf16.msra.mxu0 0
      %554 = vmatprep.subr.bf16.mxu0 0
      %555 = vmatpush2.bf16.msra.mxu0 0
      %556 = vmatprep.subr.bf16.mxu0 0
      %557 = vmatpush2.bf16.msra.mxu0 0
      %558 = vmatprep.subr.bf16.mxu0 0
      %559 = vmatpush2.bf16.msra.mxu0 0
      %560 = vmatprep.subr.bf16.mxu0 0
      %561 = vmatpush2.bf16.msra.mxu0 0
      %562 = vmatprep.subr.bf16.mxu0 0
      %563 = vmatpush2.bf16.msra.mxu0 0
      %564 = vmatprep.mubr.bf16.mxu0 0
      %565 = vmatmul.mubr.bf16.gmra.mxu0 %v518
      %v566 = vpop.f32.mrf.mxu0
      %v567 = vadd.f32 0.0, %v566
      %v568 = vpop.f32.mrf.mxu0
      %v569 = vpop.f32.mrf.mxu0
      %v570 = vadd.f32 0.0, %v569
      %v571 = vpop.f32.mrf.mxu0
      %572 = vmatprep.mubr.bf16.mxu0 0
      %573 = vmatmul.mubr.bf16.gmra.mxu0 %v521
      %v574 = vpop.f32.mrf.mxu0
      %v575 = vadd.f32 0.0, %v574
      %v576 = vpop.f32.mrf.mxu0
      %v577 = vpop.f32.mrf.mxu0
      %v578 = vadd.f32 0.0, %v577
      %v579 = vpop.f32.mrf.mxu0
      %580 = vmatprep.mubr.bf16.mxu0 0
      %581 = vmatmul.mubr.bf16.gmra.mxu0 %v524
      %v582 = vpop.f32.mrf.mxu0
      %v583 = vadd.f32 0.0, %v582
      %v584 = vpop.f32.mrf.mxu0
      %v585 = vpop.f32.mrf.mxu0
      %v586 = vadd.f32 0.0, %v585
      %v587 = vpop.f32.mrf.mxu0
      %588 = vmatprep.mubr.bf16.mxu0 0
      %589 = vmatmul.mubr.bf16.gmra.mxu0 %v527
      %v590 = vpop.f32.mrf.mxu0
      %v591 = vadd.f32 0.0, %v590
      %v592 = vpop.f32.mrf.mxu0
      %v593 = vpop.f32.mrf.mxu0
      %v594 = vadd.f32 0.0, %v593
      %v595 = vpop.f32.mrf.mxu0
      %596 = vdwg.mxu0
      %v597 = vadd.f32 %v448, %v567
      %v598 = vadd.f32 %v451, %v570
      %v599 = vadd.f32 %v456, %v575
      %v600 = vadd.f32 %v459, %v578
      %v601 = vadd.f32 %v464, %v583
      %v602 = vadd.f32 %v467, %v586
      %v603 = vadd.f32 %v472, %v591
      %v604 = vadd.f32 %v475, %v594
      %v605 = vpack.c.bf16 %v240, %v238
      %v606 = vpack.c.bf16 %v244, %v242
      %v607 = vpack.c.bf16 %v248, %v246
      %v608 = vpack.c.bf16 %v252, %v250
      %s609 = scalar_lea.vmem %s1, 12
      %v610 = vld [vmem:[%s609] sm:$0xf]
      %v612 = vsel %vm316, %v605, 0
      %v615 = vsel %vm316, %v606, 0
      %v618 = vsel %vm316, %v607, 0
      %v621 = vsel %vm316, %v608, 0
      %v624 = vsel %vm329, %v610, 0
      %626 = vmatprep.subr.bf16.mxu0 0
      %627 = vmatpush1.bf16.msra.mxu0 0
      %628 = vmatprep.subr.bf16.mxu0 0
      %629 = vmatpush1.bf16.msra.mxu0 0
      %630 = vmatprep.subr.bf16.mxu0 0
      %631 = vmatpush1.bf16.msra.mxu0 0
      %632 = vmatprep.subr.bf16.mxu0 0
      %633 = vmatpush1.bf16.msra.mxu0 0
      %634 = vmatprep.subr.bf16.mxu0 0
      %635 = vmatpush1.bf16.msra.mxu0 0
      %636 = vmatprep.subr.bf16.mxu0 0
      %637 = vmatpush1.bf16.msra.mxu0 0
      %638 = vmatprep.subr.bf16.mxu0 0
      %639 = vmatpush1.bf16.msra.mxu0 0
      %640 = vmatprep.subr.bf16.mxu0 0
      %641 = vmatpush1.bf16.msra.mxu0 %v624
      %642 = vmatprep.subr.bf16.mxu0 0
      %643 = vmatpush2.bf16.msra.mxu0 0
      %644 = vmatprep.subr.bf16.mxu0 0
      %645 = vmatpush2.bf16.msra.mxu0 0
      %646 = vmatprep.subr.bf16.mxu0 0
      %647 = vmatpush2.bf16.msra.mxu0 0
      %648 = vmatprep.subr.bf16.mxu0 0
      %649 = vmatpush2.bf16.msra.mxu0 0
      %650 = vmatprep.subr.bf16.mxu0 0
      %651 = vmatpush2.bf16.msra.mxu0 0
      %652 = vmatprep.subr.bf16.mxu0 0
      %653 = vmatpush2.bf16.msra.mxu0 0
      %654 = vmatprep.subr.bf16.mxu0 0
      %655 = vmatpush2.bf16.msra.mxu0 0
      %656 = vmatprep.subr.bf16.mxu0 0
      %657 = vmatpush2.bf16.msra.mxu0 0
      %658 = vmatprep.mubr.bf16.mxu0 0
      %659 = vmatmul.mubr.bf16.gmra.mxu0 %v612
      %v660 = vpop.f32.mrf.mxu0
      %v661 = vadd.f32 0.0, %v660
      %v662 = vpop.f32.mrf.mxu0
      %v663 = vpop.f32.mrf.mxu0
      %v664 = vadd.f32 0.0, %v663
      %v665 = vpop.f32.mrf.mxu0
      %666 = vmatprep.mubr.bf16.mxu0 0
      %667 = vmatmul.mubr.bf16.gmra.mxu0 %v615
      %v668 = vpop.f32.mrf.mxu0
      %v669 = vadd.f32 0.0, %v668
      %v670 = vpop.f32.mrf.mxu0
      %v671 = vpop.f32.mrf.mxu0
      %v672 = vadd.f32 0.0, %v671
      %v673 = vpop.f32.mrf.mxu0
      %674 = vmatprep.mubr.bf16.mxu0 0
      %675 = vmatmul.mubr.bf16.gmra.mxu0 %v618
      %v676 = vpop.f32.mrf.mxu0
      %v677 = vadd.f32 0.0, %v676
      %v678 = vpop.f32.mrf.mxu0
      %v679 = vpop.f32.mrf.mxu0
      %v680 = vadd.f32 0.0, %v679
      %v681 = vpop.f32.mrf.mxu0
      %682 = vmatprep.mubr.bf16.mxu0 0
      %683 = vmatmul.mubr.bf16.gmra.mxu0 %v621
      %v684 = vpop.f32.mrf.mxu0
      %v685 = vadd.f32 0.0, %v684
      %v686 = vpop.f32.mrf.mxu0
      %v687 = vpop.f32.mrf.mxu0
      %v688 = vadd.f32 0.0, %v687
      %v689 = vpop.f32.mrf.mxu0
      %690 = vdwg.mxu0
      %v691 = vadd.f32 %v597, %v661
      %v692 = vadd.f32 %v598, %v664
      %v693 = vadd.f32 %v599, %v669
      %v694 = vadd.f32 %v600, %v672
      %v695 = vadd.f32 %v601, %v677
      %v696 = vadd.f32 %v602, %v680
      %v697 = vadd.f32 %v603, %v685
      %v698 = vadd.f32 %v604, %v688
      %v701 = vrot.slane %v252, 1
      %v702 = vrot.slane %v253, 1
      %v703 = vsel %vm277, %v701, %v702
      %v705 = vpack.c.bf16 %v286, %v283
      %v706 = vpack.c.bf16 %v292, %v289
      %v707 = vpack.c.bf16 %v298, %v295
      %v708 = vpack.c.bf16 %v703, %v301
      %s709 = scalar_lea.vmem %s1, 16
      %v710 = vld [vmem:[%s709] sm:$0xf]
      %v712 = vsel %vm316, %v705, 0
      %v715 = vsel %vm316, %v706, 0
      %v718 = vsel %vm316, %v707, 0
      %v721 = vsel %vm316, %v708, 0
      %v724 = vsel %vm329, %v710, 0
      %726 = vmatprep.subr.bf16.mxu0 0
      %727 = vmatpush1.bf16.msra.mxu0 0
      %728 = vmatprep.subr.bf16.mxu0 0
      %729 = vmatpush1.bf16.msra.mxu0 0
      %730 = vmatprep.subr.bf16.mxu0 0
      %731 = vmatpush1.bf16.msra.mxu0 0
      %732 = vmatprep.subr.bf16.mxu0 0
      %733 = vmatpush1.bf16.msra.mxu0 0
      %734 = vmatprep.subr.bf16.mxu0 0
      %735 = vmatpush1.bf16.msra.mxu0 0
      %736 = vmatprep.subr.bf16.mxu0 0
      %737 = vmatpush1.bf16.msra.mxu0 0
      %738 = vmatprep.subr.bf16.mxu0 0
      %739 = vmatpush1.bf16.msra.mxu0 0
      %740 = vmatprep.subr.bf16.mxu0 0
      %741 = vmatpush1.bf16.msra.mxu0 %v724
      %742 = vmatprep.subr.bf16.mxu0 0
      %743 = vmatpush2.bf16.msra.mxu0 0
      %744 = vmatprep.subr.bf16.mxu0 0
      %745 = vmatpush2.bf16.msra.mxu0 0
      %746 = vmatprep.subr.bf16.mxu0 0
      %747 = vmatpush2.bf16.msra.mxu0 0
      %748 = vmatprep.subr.bf16.mxu0 0
      %749 = vmatpush2.bf16.msra.mxu0 0
      %750 = vmatprep.subr.bf16.mxu0 0
      %751 = vmatpush2.bf16.msra.mxu0 0
      %752 = vmatprep.subr.bf16.mxu0 0
      %753 = vmatpush2.bf16.msra.mxu0 0
      %754 = vmatprep.subr.bf16.mxu0 0
      %755 = vmatpush2.bf16.msra.mxu0 0
      %756 = vmatprep.subr.bf16.mxu0 0
      %757 = vmatpush2.bf16.msra.mxu0 0
      %758 = vmatprep.mubr.bf16.mxu0 0
      %759 = vmatmul.mubr.bf16.gmra.mxu0 %v712
      %v760 = vpop.f32.mrf.mxu0
      %v761 = vadd.f32 0.0, %v760
      %v762 = vpop.f32.mrf.mxu0
      %v763 = vpop.f32.mrf.mxu0
      %v764 = vadd.f32 0.0, %v763
      %v765 = vpop.f32.mrf.mxu0
      %766 = vmatprep.mubr.bf16.mxu0 0
      %767 = vmatmul.mubr.bf16.gmra.mxu0 %v715
      %v768 = vpop.f32.mrf.mxu0
      %v769 = vadd.f32 0.0, %v768
      %v770 = vpop.f32.mrf.mxu0
      %v771 = vpop.f32.mrf.mxu0
      %v772 = vadd.f32 0.0, %v771
      %v773 = vpop.f32.mrf.mxu0
      %774 = vmatprep.mubr.bf16.mxu0 0
      %775 = vmatmul.mubr.bf16.gmra.mxu0 %v718
      %v776 = vpop.f32.mrf.mxu0
      %v777 = vadd.f32 0.0, %v776
      %v778 = vpop.f32.mrf.mxu0
      %v779 = vpop.f32.mrf.mxu0
      %v780 = vadd.f32 0.0, %v779
      %v781 = vpop.f32.mrf.mxu0
      %782 = vmatprep.mubr.bf16.mxu0 0
      %783 = vmatmul.mubr.bf16.gmra.mxu0 %v721
      %v784 = vpop.f32.mrf.mxu0
      %v785 = vadd.f32 0.0, %v784
      %v786 = vpop.f32.mrf.mxu0
      %v787 = vpop.f32.mrf.mxu0
      %v788 = vadd.f32 0.0, %v787
      %v789 = vpop.f32.mrf.mxu0
      %790 = vdwg.mxu0
      %v791 = vadd.f32 %v691, %v761
      %v792 = vadd.f32 %v692, %v764
      %v793 = vadd.f32 %v693, %v769
      %v794 = vadd.f32 %v694, %v772
      %v795 = vadd.f32 %v695, %v777
      %v796 = vadd.f32 %v696, %v780
      %v797 = vadd.f32 %v697, %v785
      %v798 = vadd.f32 %v698, %v788
      %v799 = vrot.slane %v252, 2
      %v800 = vrot.slane %v253, 2
      %v801 = vsel %vm478, %v799, %v800
      %v803 = vpack.c.bf16 %v487, %v484
      %v804 = vpack.c.bf16 %v493, %v490
      %v805 = vpack.c.bf16 %v499, %v496
      %v806 = vpack.c.bf16 %v801, %v502
      %s807 = scalar_lea.vmem %s1, 20
      %v808 = vld [vmem:[%s807] sm:$0xf]
      %v810 = vsel %vm316, %v803, 0
      %v813 = vsel %vm316, %v804, 0
      %v816 = vsel %vm316, %v805, 0
      %v819 = vsel %vm316, %v806, 0
      %v822 = vsel %vm329, %v808, 0
      %824 = vmatprep.subr.bf16.mxu0 0
      %825 = vmatpush1.bf16.msra.mxu0 0
      %826 = vmatprep.subr.bf16.mxu0 0
      %827 = vmatpush1.bf16.msra.mxu0 0
      %828 = vmatprep.subr.bf16.mxu0 0
      %829 = vmatpush1.bf16.msra.mxu0 0
      %830 = vmatprep.subr.bf16.mxu0 0
      %831 = vmatpush1.bf16.msra.mxu0 0
      %832 = vmatprep.subr.bf16.mxu0 0
      %833 = vmatpush1.bf16.msra.mxu0 0
      %834 = vmatprep.subr.bf16.mxu0 0
      %835 = vmatpush1.bf16.msra.mxu0 0
      %836 = vmatprep.subr.bf16.mxu0 0
      %837 = vmatpush1.bf16.msra.mxu0 0
      %838 = vmatprep.subr.bf16.mxu0 0
      %839 = vmatpush1.bf16.msra.mxu0 %v822
      %840 = vmatprep.subr.bf16.mxu0 0
      %841 = vmatpush2.bf16.msra.mxu0 0
      %842 = vmatprep.subr.bf16.mxu0 0
      %843 = vmatpush2.bf16.msra.mxu0 0
      %844 = vmatprep.subr.bf16.mxu0 0
      %845 = vmatpush2.bf16.msra.mxu0 0
      %846 = vmatprep.subr.bf16.mxu0 0
      %847 = vmatpush2.bf16.msra.mxu0 0
      %848 = vmatprep.subr.bf16.mxu0 0
      %849 = vmatpush2.bf16.msra.mxu0 0
      %850 = vmatprep.subr.bf16.mxu0 0
      %851 = vmatpush2.bf16.msra.mxu0 0
      %852 = vmatprep.subr.bf16.mxu0 0
      %853 = vmatpush2.bf16.msra.mxu0 0
      %854 = vmatprep.subr.bf16.mxu0 0
      %855 = vmatpush2.bf16.msra.mxu0 0
      %856 = vmatprep.mubr.bf16.mxu0 0
      %857 = vmatmul.mubr.bf16.gmra.mxu0 %v810
      %v858 = vpop.f32.mrf.mxu0
      %v859 = vadd.f32 0.0, %v858
      %v860 = vpop.f32.mrf.mxu0
      %v861 = vpop.f32.mrf.mxu0
      %v862 = vadd.f32 0.0, %v861
      %v863 = vpop.f32.mrf.mxu0
      %864 = vmatprep.mubr.bf16.mxu0 0
      %865 = vmatmul.mubr.bf16.gmra.mxu0 %v813
      %v866 = vpop.f32.mrf.mxu0
      %v867 = vadd.f32 0.0, %v866
      %v868 = vpop.f32.mrf.mxu0
      %v869 = vpop.f32.mrf.mxu0
      %v870 = vadd.f32 0.0, %v869
      %v871 = vpop.f32.mrf.mxu0
      %872 = vmatprep.mubr.bf16.mxu0 0
      %873 = vmatmul.mubr.bf16.gmra.mxu0 %v816
      %v874 = vpop.f32.mrf.mxu0
      %v875 = vadd.f32 0.0, %v874
      %v876 = vpop.f32.mrf.mxu0
      %v877 = vpop.f32.mrf.mxu0
      %v878 = vadd.f32 0.0, %v877
      %v879 = vpop.f32.mrf.mxu0
      %880 = vmatprep.mubr.bf16.mxu0 0
      %881 = vmatmul.mubr.bf16.gmra.mxu0 %v819
      %v882 = vpop.f32.mrf.mxu0
      %v883 = vadd.f32 0.0, %v882
      %v884 = vpop.f32.mrf.mxu0
      %v885 = vpop.f32.mrf.mxu0
      %v886 = vadd.f32 0.0, %v885
      %v887 = vpop.f32.mrf.mxu0
      %888 = vdwg.mxu0
      %v889 = vadd.f32 %v791, %v859
      %v890 = vadd.f32 %v792, %v862
      %v891 = vadd.f32 %v793, %v867
      %v892 = vadd.f32 %v794, %v870
      %v893 = vadd.f32 %v795, %v875
      %v894 = vadd.f32 %v796, %v878
      %v895 = vadd.f32 %v797, %v883
      %v896 = vadd.f32 %v798, %v886
      %v897 = vpack.c.bf16 %v254, %v252
      %s898 = scalar_lea.vmem %s1, 24
      %v899 = vld [vmem:[%s898] sm:$0xf]
      %v901 = vsel %vm316, %v897, 0
      %v904 = vsel %vm329, %v899, 0
      %906 = vmatprep.subr.bf16.mxu0 0
      %907 = vmatpush1.bf16.msra.mxu0 0
      %908 = vmatprep.subr.bf16.mxu0 0
      %909 = vmatpush1.bf16.msra.mxu0 0
      %910 = vmatprep.subr.bf16.mxu0 0
      %911 = vmatpush1.bf16.msra.mxu0 0
      %912 = vmatprep.subr.bf16.mxu0 0
      %913 = vmatpush1.bf16.msra.mxu0 0
      %914 = vmatprep.subr.bf16.mxu0 0
      %915 = vmatpush1.bf16.msra.mxu0 0
      %916 = vmatprep.subr.bf16.mxu0 0
      %917 = vmatpush1.bf16.msra.mxu0 0
      %918 = vmatprep.subr.bf16.mxu0 0
      %919 = vmatpush1.bf16.msra.mxu0 0
      %920 = vmatprep.subr.bf16.mxu0 0
      %921 = vmatpush1.bf16.msra.mxu0 %v904
      %922 = vmatprep.subr.bf16.mxu0 0
      %923 = vmatpush2.bf16.msra.mxu0 0
      %924 = vmatprep.subr.bf16.mxu0 0
      %925 = vmatpush2.bf16.msra.mxu0 0
      %926 = vmatprep.subr.bf16.mxu0 0
      %927 = vmatpush2.bf16.msra.mxu0 0
      %928 = vmatprep.subr.bf16.mxu0 0
      %929 = vmatpush2.bf16.msra.mxu0 0
      %930 = vmatprep.subr.bf16.mxu0 0
      %931 = vmatpush2.bf16.msra.mxu0 0
      %932 = vmatprep.subr.bf16.mxu0 0
      %933 = vmatpush2.bf16.msra.mxu0 0
      %934 = vmatprep.subr.bf16.mxu0 0
      %935 = vmatpush2.bf16.msra.mxu0 0
      %936 = vmatprep.subr.bf16.mxu0 0
      %937 = vmatpush2.bf16.msra.mxu0 0
      %938 = vmatprep.mubr.bf16.mxu0 0
      %939 = vmatmul.mubr.bf16.gmra.mxu0 %v402
      %v940 = vpop.f32.mrf.mxu0
      %v941 = vadd.f32 0.0, %v940
      %v942 = vpop.f32.mrf.mxu0
      %v943 = vpop.f32.mrf.mxu0
      %v944 = vadd.f32 0.0, %v943
      %v945 = vpop.f32.mrf.mxu0
      %946 = vmatprep.mubr.bf16.mxu0 0
      %947 = vmatmul.mubr.bf16.gmra.mxu0 %v405
      %v948 = vpop.f32.mrf.mxu0
      %v949 = vadd.f32 0.0, %v948
      %v950 = vpop.f32.mrf.mxu0
      %v951 = vpop.f32.mrf.mxu0
      %v952 = vadd.f32 0.0, %v951
      %v953 = vpop.f32.mrf.mxu0
      %954 = vmatprep.mubr.bf16.mxu0 0
      %955 = vmatmul.mubr.bf16.gmra.mxu0 %v408
      %v956 = vpop.f32.mrf.mxu0
      %v957 = vadd.f32 0.0, %v956
      %v958 = vpop.f32.mrf.mxu0
      %v959 = vpop.f32.mrf.mxu0
      %v960 = vadd.f32 0.0, %v959
      %v961 = vpop.f32.mrf.mxu0
      %962 = vmatprep.mubr.bf16.mxu0 0
      %963 = vmatmul.mubr.bf16.gmra.mxu0 %v901
      %v964 = vpop.f32.mrf.mxu0
      %v965 = vadd.f32 0.0, %v964
      %v966 = vpop.f32.mrf.mxu0
      %v967 = vpop.f32.mrf.mxu0
      %v968 = vadd.f32 0.0, %v967
      %v969 = vpop.f32.mrf.mxu0
      %970 = vdwg.mxu0
      %v971 = vadd.f32 %v889, %v941
      %v972 = vadd.f32 %v890, %v944
      %v973 = vadd.f32 %v891, %v949
      %v974 = vadd.f32 %v892, %v952
      %v975 = vadd.f32 %v893, %v957
      %v976 = vadd.f32 %v894, %v960
      %v977 = vadd.f32 %v895, %v965
      %v978 = vadd.f32 %v896, %v968
      %v981 = vrot.slane %v254, 1
      %v982 = vrot.slane %v255, 1
      %v983 = vsel %vm277, %v981, %v982
      %v985 = vpack.c.bf16 %v983, %v703
      %s986 = scalar_lea.vmem %s1, 28
      %v987 = vld [vmem:[%s986] sm:$0xf]
      %v989 = vsel %vm316, %v985, 0
      %v992 = vsel %vm329, %v987, 0
      %994 = vmatprep.subr.bf16.mxu0 0
      %995 = vmatpush1.bf16.msra.mxu0 0
      %996 = vmatprep.subr.bf16.mxu0 0
      %997 = vmatpush1.bf16.msra.mxu0 0
      %998 = vmatprep.subr.bf16.mxu0 0
      %999 = vmatpush1.bf16.msra.mxu0 0
      %1000 = vmatprep.subr.bf16.mxu0 0
      %1001 = vmatpush1.bf16.msra.mxu0 0
      %1002 = vmatprep.subr.bf16.mxu0 0
      %1003 = vmatpush1.bf16.msra.mxu0 0
      %1004 = vmatprep.subr.bf16.mxu0 0
      %1005 = vmatpush1.bf16.msra.mxu0 0
      %1006 = vmatprep.subr.bf16.mxu0 0
      %1007 = vmatpush1.bf16.msra.mxu0 0
      %1008 = vmatprep.subr.bf16.mxu0 0
      %1009 = vmatpush1.bf16.msra.mxu0 %v992
      %1010 = vmatprep.subr.bf16.mxu0 0
      %1011 = vmatpush2.bf16.msra.mxu0 0
      %1012 = vmatprep.subr.bf16.mxu0 0
      %1013 = vmatpush2.bf16.msra.mxu0 0
      %1014 = vmatprep.subr.bf16.mxu0 0
      %1015 = vmatpush2.bf16.msra.mxu0 0
      %1016 = vmatprep.subr.bf16.mxu0 0
      %1017 = vmatpush2.bf16.msra.mxu0 0
      %1018 = vmatprep.subr.bf16.mxu0 0
      %1019 = vmatpush2.bf16.msra.mxu0 0
      %1020 = vmatprep.subr.bf16.mxu0 0
      %1021 = vmatpush2.bf16.msra.mxu0 0
      %1022 = vmatprep.subr.bf16.mxu0 0
      %1023 = vmatpush2.bf16.msra.mxu0 0
      %1024 = vmatprep.subr.bf16.mxu0 0
      %1025 = vmatpush2.bf16.msra.mxu0 0
      %1026 = vmatprep.mubr.bf16.mxu0 0
      %1027 = vmatmul.mubr.bf16.gmra.mxu0 %v321
      %v1028 = vpop.f32.mrf.mxu0
      %v1029 = vadd.f32 0.0, %v1028
      %v1030 = vpop.f32.mrf.mxu0
      %v1031 = vpop.f32.mrf.mxu0
      %v1032 = vadd.f32 0.0, %v1031
      %v1033 = vpop.f32.mrf.mxu0
      %1034 = vmatprep.mubr.bf16.mxu0 0
      %1035 = vmatmul.mubr.bf16.gmra.mxu0 %v324
      %v1036 = vpop.f32.mrf.mxu0
      %v1037 = vadd.f32 0.0, %v1036
      %v1038 = vpop.f32.mrf.mxu0
      %v1039 = vpop.f32.mrf.mxu0
      %v1040 = vadd.f32 0.0, %v1039
      %v1041 = vpop.f32.mrf.mxu0
      %1042 = vmatprep.mubr.bf16.mxu0 0
      %1043 = vmatmul.mubr.bf16.gmra.mxu0 %v327
      %v1044 = vpop.f32.mrf.mxu0
      %v1045 = vadd.f32 0.0, %v1044
      %v1046 = vpop.f32.mrf.mxu0
      %v1047 = vpop.f32.mrf.mxu0
      %v1048 = vadd.f32 0.0, %v1047
      %v1049 = vpop.f32.mrf.mxu0
      %1050 = vmatprep.mubr.bf16.mxu0 0
      %1051 = vmatmul.mubr.bf16.gmra.mxu0 %v989
      %v1052 = vpop.f32.mrf.mxu0
      %v1053 = vadd.f32 0.0, %v1052
      %v1054 = vpop.f32.mrf.mxu0
      %v1055 = vpop.f32.mrf.mxu0
      %v1056 = vadd.f32 0.0, %v1055
      %v1057 = vpop.f32.mrf.mxu0
      %1058 = vdwg.mxu0
      %v1059 = vadd.f32 %v971, %v1029
      %v1060 = vadd.f32 %v972, %v1032
      %v1061 = vadd.f32 %v973, %v1037
      %v1062 = vadd.f32 %v974, %v1040
      %v1063 = vadd.f32 %v975, %v1045
      %v1064 = vadd.f32 %v976, %v1048
      %v1065 = vadd.f32 %v977, %v1053
      %v1066 = vadd.f32 %v978, %v1056
      %v1067 = vrot.slane %v254, 2
      %v1068 = vrot.slane %v255, 2
      %v1069 = vsel %vm478, %v1067, %v1068
      %v1071 = vpack.c.bf16 %v1069, %v801
      %s1072 = scalar_lea.vmem %s1, 32
      %v1073 = vld [vmem:[%s1072] sm:$0xf]
      %v1075 = vsel %vm316, %v1071, 0
      %v1078 = vsel %vm329, %v1073, 0
      %1080 = vmatprep.subr.bf16.mxu0 0
      %1081 = vmatpush1.bf16.msra.mxu0 0
      %1082 = vmatprep.subr.bf16.mxu0 0
      %1083 = vmatpush1.bf16.msra.mxu0 0
      %1084 = vmatprep.subr.bf16.mxu0 0
      %1085 = vmatpush1.bf16.msra.mxu0 0
      %1086 = vmatprep.subr.bf16.mxu0 0
      %1087 = vmatpush1.bf16.msra.mxu0 0
      %1088 = vmatprep.subr.bf16.mxu0 0
      %1089 = vmatpush1.bf16.msra.mxu0 0
      %1090 = vmatprep.subr.bf16.mxu0 0
      %1091 = vmatpush1.bf16.msra.mxu0 0
      %1092 = vmatprep.subr.bf16.mxu0 0
      %1093 = vmatpush1.bf16.msra.mxu0 0
      %1094 = vmatprep.subr.bf16.mxu0 0
      %1095 = vmatpush1.bf16.msra.mxu0 %v1078
      %1096 = vmatprep.subr.bf16.mxu0 0
      %1097 = vmatpush2.bf16.msra.mxu0 0
      %1098 = vmatprep.subr.bf16.mxu0 0
      %1099 = vmatpush2.bf16.msra.mxu0 0
      %1100 = vmatprep.subr.bf16.mxu0 0
      %1101 = vmatpush2.bf16.msra.mxu0 0
      %1102 = vmatprep.subr.bf16.mxu0 0
      %1103 = vmatpush2.bf16.msra.mxu0 0
      %1104 = vmatprep.subr.bf16.mxu0 0
      %1105 = vmatpush2.bf16.msra.mxu0 0
      %1106 = vmatprep.subr.bf16.mxu0 0
      %1107 = vmatpush2.bf16.msra.mxu0 0
      %1108 = vmatprep.subr.bf16.mxu0 0
      %1109 = vmatpush2.bf16.msra.mxu0 0
      %1110 = vmatprep.subr.bf16.mxu0 0
      %1111 = vmatpush2.bf16.msra.mxu0 0
      %1112 = vmatprep.mubr.bf16.mxu0 0
      %1113 = vmatmul.mubr.bf16.gmra.mxu0 %v521
      %v1114 = vpop.f32.mrf.mxu0
      %v1115 = vadd.f32 0.0, %v1114
      %v1116 = vpop.f32.mrf.mxu0
      %v1117 = vpop.f32.mrf.mxu0
      %v1118 = vadd.f32 0.0, %v1117
      %v1119 = vpop.f32.mrf.mxu0
      %1120 = vmatprep.mubr.bf16.mxu0 0
      %1121 = vmatmul.mubr.bf16.gmra.mxu0 %v524
      %v1122 = vpop.f32.mrf.mxu0
      %v1123 = vadd.f32 0.0, %v1122
      %v1124 = vpop.f32.mrf.mxu0
      %v1125 = vpop.f32.mrf.mxu0
      %v1126 = vadd.f32 0.0, %v1125
      %v1127 = vpop.f32.mrf.mxu0
      %1128 = vmatprep.mubr.bf16.mxu0 0
      %1129 = vmatmul.mubr.bf16.gmra.mxu0 %v527
      %v1130 = vpop.f32.mrf.mxu0
      %v1131 = vadd.f32 0.0, %v1130
      %v1132 = vpop.f32.mrf.mxu0
      %v1133 = vpop.f32.mrf.mxu0
      %v1134 = vadd.f32 0.0, %v1133
      %v1135 = vpop.f32.mrf.mxu0
      %1136 = vmatprep.mubr.bf16.mxu0 0
      %1137 = vmatmul.mubr.bf16.gmra.mxu0 %v1075
      %v1138 = vpop.f32.mrf.mxu0
      %v1139 = vadd.f32 0.0, %v1138
      %v1140 = vpop.f32.mrf.mxu0
      %v1141 = vpop.f32.mrf.mxu0
      %v1142 = vadd.f32 0.0, %v1141
      %v1143 = vpop.f32.mrf.mxu0
      %1144 = vdwg.mxu0
      %v1145 = vadd.f32 %v1059, %v1115
      %v1146 = vadd.f32 %v1060, %v1118
      %v1147 = vadd.f32 %v1061, %v1123
      %v1148 = vadd.f32 %v1062, %v1126
      %v1149 = vadd.f32 %v1063, %v1131
      %v1150 = vadd.f32 %v1064, %v1134
      %v1151 = vadd.f32 %v1065, %v1139
      %v1152 = vadd.f32 %v1066, %v1142
      %v1153 = vpack.c.bf16 %v1146, %v1145
      %v1154 = vpack.c.bf16 %v1148, %v1147
      %v1155 = vpack.c.bf16 %v1150, %v1149
      %v1156 = vpack.c.bf16 %v1152, %v1151
      %v1161 = vunpack.c.l.b16 %v1153
      %v1162 = vunpack.c.h.b16 %v1153
      %v1163 = vunpack.c.l.b16 %v1154
      %v1164 = vunpack.c.h.b16 %v1154
      %v1165 = vunpack.c.l.b16 %v1155
      %v1166 = vunpack.c.h.b16 %v1155
      %v1167 = vunpack.c.l.b16 %v1156
      %v1168 = vunpack.c.h.b16 %v1156
      %v1169 = vpack.c.b16 %v1161, %v1161
      %v1170 = vpack.c.b16 %v1162, %v1162
      %v1171 = vpack.c.b16 %v1163, %v1163
      %v1172 = vpack.c.b16 %v1164, %v1164
      %v1173 = vpack.c.b16 %v1165, %v1165
      %v1174 = vpack.c.b16 %v1166, %v1166
      %v1175 = vpack.c.b16 %v1167, %v1167
      %v1176 = vpack.c.b16 %v1168, %v1168
      %vm1185 = vcmask 60416
      %1186 = vst.msk [vmem:[%s208] sm:$0xf] %vm1185, %v1169
      %1187 = vst.msk [vmem:[%s208 + $0x4] sm:$0xf] %vm1185, %v1170
      %1188 = vst.msk [vmem:[%s208 + $0x8] sm:$0xf] %vm1185, %v1171
      %1189 = vst.msk [vmem:[%s208 + $0xc] sm:$0xf] %vm1185, %v1172
      %1190 = vst.msk [vmem:[%s208 + $0x10] sm:$0xf] %vm1185, %v1173
      %1191 = vst.msk [vmem:[%s208 + $0x14] sm:$0xf] %vm1185, %v1174
      %1192 = vst.msk [vmem:[%s208 + $0x18] sm:$0xf] %vm1185, %v1175
      %1193 = vst.msk [vmem:[%s208 + $0x1c] sm:$0xf] %vm1185, %v1176
      %v1194 = vsel %vm316, %v1145, 0.0
      %v1195 = vsel %vm316, %v1146, 0.0
      %v1196 = vadd.f32 %v1194, %v1195
      %v1197 = vsel %vm316, %v1147, 0.0
      %v1198 = vadd.f32 %v1196, %v1197
      %v1199 = vsel %vm316, %v1148, 0.0
      %v1200 = vadd.f32 %v1198, %v1199
      %v1201 = vsel %vm316, %v1149, 0.0
      %v1202 = vadd.f32 %v1200, %v1201
      %v1203 = vsel %vm316, %v1150, 0.0
      %v1204 = vadd.f32 %v1202, %v1203
      %v1205 = vsel %vm316, %v1151, 0.0
      %v1206 = vadd.f32 %v1204, %v1205
      %v1207 = vsel %vm316, %v1152, 0.0
      %v1208 = vadd.f32 %v1206, %v1207
      %v1209 = vrot.slane %v1208, 4
      %v1210 = vadd.f32 %v1208, %v1209
      %v1211 = vrot.slane %v1210, 2
      %v1212 = vadd.f32 %v1210, %v1211
      %v1213 = vrot.slane %v1212, 1
      %v1214 = vadd.f32 %v1212, %v1213
      %vm1215 = vcmask 57344
      %1216 = vst.msk [vmem:[%s211] sm:$0x1] %vm1215, %v1214
      %v1217 = vmul.f32 %v1145, %v1145
      %v1218 = vmul.f32 %v1146, %v1146
      %v1219 = vmul.f32 %v1147, %v1147
      %v1220 = vmul.f32 %v1148, %v1148
      %v1221 = vmul.f32 %v1149, %v1149
      %v1222 = vmul.f32 %v1150, %v1150
      %v1223 = vmul.f32 %v1151, %v1151
      %v1224 = vmul.f32 %v1152, %v1152
      %v1225 = vsel %vm316, %v1217, 0.0
      %v1226 = vsel %vm316, %v1218, 0.0
      %v1227 = vadd.f32 %v1225, %v1226
      %v1228 = vsel %vm316, %v1219, 0.0
      %v1229 = vadd.f32 %v1227, %v1228
      %v1230 = vsel %vm316, %v1220, 0.0
      %v1231 = vadd.f32 %v1229, %v1230
      %v1232 = vsel %vm316, %v1221, 0.0
      %v1233 = vadd.f32 %v1231, %v1232
      %v1234 = vsel %vm316, %v1222, 0.0
      %v1235 = vadd.f32 %v1233, %v1234
      %v1236 = vsel %vm316, %v1223, 0.0
      %v1237 = vadd.f32 %v1235, %v1236
      %v1238 = vsel %vm316, %v1224, 0.0
      %v1239 = vadd.f32 %v1237, %v1238
      %v1240 = vrot.slane %v1239, 4
      %v1241 = vadd.f32 %v1239, %v1240
      %v1242 = vrot.slane %v1241, 2
      %v1243 = vadd.f32 %v1241, %v1242
      %v1244 = vrot.slane %v1243, 1
      %v1245 = vadd.f32 %v1243, %v1244
      %1246 = vst.msk [vmem:[%s214] sm:$0x1] %vm1215, %v1245
      %p1247 = scmp.lt.s32.totalorder %s16, 1
      %s1248 = scalar_select %p1247, %s16, 1
      %s1249 = smul.addr %s1248, 8
      %s1250 = smul.addr %s1249, 4
      %s1251 = scalar_lea.vmem %s2, %s1250
      %p1252 = scmp.lt.s32.totalorder %s16, 1
      %s1253 = scalar_select %p1252, %s16, 1
      %s1254 = scalar_lea.vmem %s3, %s1253
      %p1255 = scmp.lt.s32.totalorder %s16, 1
      %s1256 = scalar_select %p1255, %s16, 1
      %s1257 = scalar_lea.vmem %s4, %s1256
      // Predicated region
      $region29: #{_lambda_.12} parent=27 // pred_check
        %p1258 = pneg %p81
      $region30: #{_lambda_.12} parent=27 // pred_check_branch
        %1260 = sbr.rel (%p1258) target = $region32
      $region31: #{_lambda_.12} parent=27 // pred_region
        _
      $region32: #{_lambda_.12} parent=27 // pred_fallthru
        _
      // Predicated region
      $region33: #{_lambda_.12} parent=27 // pred_check
        %p1261 = pneg %p107
      $region34: #{_lambda_.12} parent=27 // pred_check_branch
        %1263 = sbr.rel (%p1261) target = $region36
      $region35: #{_lambda_.12} parent=27 // pred_region
        _
      $region36: #{_lambda_.12} parent=27 // pred_fallthru
        _
      // Predicated region
      $region37: #{_lambda_.12} parent=27 // pred_check
        %p1264 = pneg %p133
      $region38: #{_lambda_.12} parent=27 // pred_check_branch
        %1266 = sbr.rel (%p1264) target = $region40
      $region39: #{_lambda_.12} parent=27 // pred_region
        _
      $region40: #{_lambda_.12} parent=27 // pred_fallthru
        _
    $region28: #{_lambda_.12} parent=5 // pred_fallthru
      _
    %p1267 = scmp.le.s32.totalorder 2, %s11
    // Predicated region
    $region41: #{_lambda_.12} parent=5 // pred_check
      %p1268 = pneg %p1267
    $region42: #{_lambda_.12} parent=5 // pred_check_branch
      %1270 = sbr.rel (%p1268) target = $region44
    $region43: #{_lambda_.12} parent=5 // pred_region
      %s1271 = ssub.s32 %s11, 2
      // Predicated region
      $region45: #{_lambda_.12} parent=43 // pred_check
        %p1272 = pneg %p87
      $region46: #{_lambda_.12} parent=43 // pred_check_branch
        %1274 = sbr.rel (%p1272) target = $region48
      $region47: #{_lambda_.12} parent=43 // pred_region
        %p1275 = scmp.lt.s32.totalorder %s17, 1
        %s1276 = scalar_select %p1275, %s17, 1
        %s1277 = smul.addr %s1276, 8
        %s1278 = smul.addr %s1277, 4
        %s1279 = scalar_lea.vmem %s2, %s1278
      $region48: #{_lambda_.12} parent=43 // pred_fallthru
        _
      // Predicated region
      $region49: #{_lambda_.12} parent=43 // pred_check
        %p1280 = pneg %p113
      $region50: #{_lambda_.12} parent=43 // pred_check_branch
        %1282 = sbr.rel (%p1280) target = $region52
      $region51: #{_lambda_.12} parent=43 // pred_region
        %p1283 = scmp.lt.s32.totalorder %s17, 1
        %s1284 = scalar_select %p1283, %s17, 1
        %s1285 = scalar_lea.vmem %s3, %s1284
      $region52: #{_lambda_.12} parent=43 // pred_fallthru
        _
      // Predicated region
      $region53: #{_lambda_.12} parent=43 // pred_check
        %p1286 = pneg %p139
      $region54: #{_lambda_.12} parent=43 // pred_check_branch
        %1288 = sbr.rel (%p1286) target = $region56
      $region55: #{_lambda_.12} parent=43 // pred_region
        %p1289 = scmp.lt.s32.totalorder %s17, 1
        %s1290 = scalar_select %p1289, %s17, 1
        %s1291 = scalar_lea.vmem %s4, %s1290
      $region56: #{_lambda_.12} parent=43 // pred_fallthru
        _
    $region44: #{_lambda_.12} parent=5 // pred_fallthru
      _
  $region6: #{_lambda_.12} parent=0 // loop_footer
    %s15 = sadd.s32 1, %s11
  $region7: #{_lambda_.12} parent=0 // loop_footer_branch
    %10 = sbr.rel target = $region3
  $region8: #{_lambda_.12} parent=0 // loop_exit
    _

</llo_original>
